<compile_context>
chip_gen: v7x
topology: tpu7x:2x2x1
jax: 0.10.0
libtpu: 0.0.40
codegen_flags: <defaults>
</compile_context>

<pallas_src>
import functools

import jax
import jax.numpy as jnp
from jax import lax
from jax.experimental import pallas as pl
from jax.experimental.pallas import tpu as pltpu


_VMEM_LIMIT = 64 * 1024 * 1024   # explicit scoped-VMEM allowance (<= physical on all gens)


def _row_tile(n_rows, row_bytes, budget=8 << 20, cap=512):
    """Largest row tile (multiple of 8, <= cap) whose f32 output block fits budget."""
    if n_rows <= cap and n_rows * row_bytes <= budget:
        return n_rows
    t = max(8, min(cap, (budget // max(1, row_bytes)) // 8 * 8))
    return min(t, n_rows)


# ----------------------- fused multi-in / multi-out linear -----------------------

def _fused_linear_kernel(*refs, n_in, n_out, leaky):
    # refs = x_0..x_{n_in-1}, w_{j,i} (j-major), b_0..b_{n_out-1}, o_0..o_{n_out-1}
    x = [refs[i][...] for i in range(n_in)]                 # each loaded once, reused
    w_off = n_in
    b_off = n_in + n_in * n_out
    o_off = b_off + n_out
    for j in range(n_out):
        acc = refs[b_off + j][...]                          # [1, Dout_j] f32 (broadcast)
        for i in range(n_in):
            acc = acc + jnp.dot(x[i], refs[w_off + j * n_in + i][...],
                                preferred_element_type=jnp.float32)
        if leaky:
            acc = jnp.maximum(acc, 0.1 * acc)               # LeakyReLU(0.1), f32 VPU max
        refs[o_off + j][...] = acc.astype(refs[o_off + j].dtype)


def fused_linear(xs, ws, bs, *, leaky, out_dtypes, tile_m=512):
    """y_j = act(sum_i xs[i] @ ws[j][i] + bs[j]), one row-tiled Pallas launch.

    xs : list of [N, Din_i] arrays (cast to bf16 for the MXU).
    ws : ws[j][i] is the [Din_i, Dout_j] weight block (resident per grid).
    bs : list of [Dout_j] biases (f32).
    Returns a tuple of [N, Dout_j] arrays, each stored lane-dense.
    """
    n_in, n_out = len(xs), len(ws)
    n = xs[0].shape[0]
    tm = n if n <= tile_m else tile_m

    xb = [x.astype(jnp.bfloat16) for x in xs]
    wb = [ws[j][i].astype(jnp.bfloat16) for j in range(n_out) for i in range(n_in)]
    bb = [bs[j].reshape(1, -1).astype(jnp.float32) for j in range(n_out)]
    d_in = [x.shape[1] for x in xs]
    d_out = [b.shape[1] for b in bb]

    in_specs = (
        [pl.BlockSpec((tm, d_in[i]), lambda r: (r, 0)) for i in range(n_in)]
        + [pl.BlockSpec(w.shape, lambda r: (0, 0)) for w in wb]
        + [pl.BlockSpec((1, d_out[j]), lambda r: (0, 0)) for j in range(n_out)]
    )
    out_specs = tuple(pl.BlockSpec((tm, d_out[j]), lambda r: (r, 0))
                      for j in range(n_out))
    out_shape = tuple(jax.ShapeDtypeStruct((n, d_out[j]), out_dtypes[j])
                      for j in range(n_out))

    return pl.pallas_call(
        functools.partial(_fused_linear_kernel, n_in=n_in, n_out=n_out, leaky=leaky),
        out_shape=out_shape,
        grid=(pl.cdiv(n, tm),),
        in_specs=in_specs,
        out_specs=out_specs,
        compiler_params=pltpu.CompilerParams(
            dimension_semantics=("parallel",),
            vmem_limit_bytes=_VMEM_LIMIT),
    )(*xb, *wb, *bb)


# ------------------------------ BiLSTM recurrence --------------------------------

def _bilstm_cell_kernel(pre_f_ref, pre_b_ref, whh_f_ref, whh_b_ref,
                        out_f_ref, out_b_ref, h_sc, c_sc, *, hidden):
    # One grid step == one timestep for BOTH directions (backward streams reversed
    # blocks via its index_map).  h/c persist in VMEM scratch across grid steps.
    @pl.when(pl.program_id(0) == 0)
    def _():
        h_sc[...] = jnp.zeros_like(h_sc)
        c_sc[...] = jnp.zeros_like(c_sc)

    def cell(pre, h_prev, c_prev, whh):
        gates = pre + jnp.dot(h_prev.astype(jnp.bfloat16), whh,
                              preferred_element_type=jnp.float32)      # [B, 4H] f32
        i = jax.nn.sigmoid(gates[:, :hidden])                          # PyTorch order i,f,g,o
        f = jax.nn.sigmoid(gates[:, hidden:2 * hidden])
        g = jnp.tanh(gates[:, 2 * hidden:3 * hidden])
        o = jax.nn.sigmoid(gates[:, 3 * hidden:])
        c = f * c_prev + i * g
        h = o * jnp.tanh(c)
        return h, c

    h_f, c_f = cell(pre_f_ref[0], h_sc[0], c_sc[0], whh_f_ref[...])
    h_b, c_b = cell(pre_b_ref[0], h_sc[1], c_sc[1], whh_b_ref[...])
    h_sc[0] = h_f
    c_sc[0] = c_f
    h_sc[1] = h_b
    c_sc[1] = c_b
    out_f_ref[0] = h_f
    out_b_ref[0] = h_b


def _bilstm_layer(xs_tmajor, pf, pb):
    """One BiLSTM layer, time-major.  xs_tmajor: list of [S, B, Din_i] inputs
    (layer 0: [embed]; later layers: [fwd_hidden, bwd_hidden]).  Returns
    out_f, out_b: [S, B, H] hidden states in time order."""
    S, B = xs_tmajor[0].shape[:2]
    H = pf["W_hh"].shape[1]
    G = 4 * H
    d_ins = [x.shape[-1] for x in xs_tmajor]
    xs2d = [x.reshape(S * B, d) for x, d in zip(xs_tmajor, d_ins)]

    def split_w(w_ih):
        # Row-split W_ih^T to match each input chunk (avoids the fwd/bwd concat in HBM).
        wt = w_ih.T
        parts, off = [], 0
        for d in d_ins:
            parts.append(wt[off:off + d])
            off += d
        return parts

    # Hoisted input projection for both directions: one fused matmul per layer.
    pre_f, pre_b = fused_linear(
        xs2d, [split_w(pf["W_ih"]), split_w(pb["W_ih"])],
        [pf["b_ih"] + pf["b_hh"], pb["b_ih"] + pb["b_hh"]],
        leaky=False, out_dtypes=[jnp.float32, jnp.float32])
    pre_f = pre_f.reshape(S, B, G)
    pre_b = pre_b.reshape(S, B, G)

    out_f, out_b = pl.pallas_call(
        functools.partial(_bilstm_cell_kernel, hidden=H),
        out_shape=(jax.ShapeDtypeStruct((S, B, H), jnp.float32),
                   jax.ShapeDtypeStruct((S, B, H), jnp.float32)),
        grid=(S,),
        in_specs=[
            pl.BlockSpec((1, B, G), lambda t: (t, 0, 0)),
            pl.BlockSpec((1, B, G), lambda t: (S - 1 - t, 0, 0)),   # time reversal via index_map
            pl.BlockSpec((H, G), lambda t: (0, 0)),
            pl.BlockSpec((H, G), lambda t: (0, 0)),
        ],
        out_specs=(
            pl.BlockSpec((1, B, H), lambda t: (t, 0, 0)),
            pl.BlockSpec((1, B, H), lambda t: (S - 1 - t, 0, 0)),
        ),
        scratch_shapes=[pltpu.VMEM((2, B, H), jnp.float32),   # h state (fwd, bwd)
                        pltpu.VMEM((2, B, H), jnp.float32)],  # c state (fwd, bwd)
        compiler_params=pltpu.CompilerParams(
            dimension_semantics=("arbitrary",),
            vmem_limit_bytes=_VMEM_LIMIT),
    )(pre_f, pre_b,
      pf["W_hh"].T.astype(jnp.bfloat16), pb["W_hh"].T.astype(jnp.bfloat16))
    return out_f, out_b


# ------------------------------- biaffine kernels --------------------------------

def _arc_kernel(d_ref, h_ref, w0_ref, wb_ref, m_ref, o_ref):
    # d_ref: [1, tq, Ma] bf16; h_ref: [1, S, Ma] bf16 (resident per batch);
    # w0_ref: [Ma, Ma] bf16; wb_ref: [1, Ma] f32 (bias_x row folded in);
    # m_ref: [1, 1, S] f32; o_ref: [1, tq, S] f32.
    t = jnp.dot(d_ref[0], w0_ref[...], preferred_element_type=jnp.float32) + wb_ref[...]
    s = lax.dot_general(t.astype(jnp.bfloat16), h_ref[0],
                        (((1,), (1,)), ((), ())),           # NT: contract last dims, no h.T
                        preferred_element_type=jnp.float32)  # [tq, S]
    # torch: s_arc.masked_fill_(~mask.unsqueeze(1), -inf)  -> mask over head axis
    o_ref[0] = jnp.where(m_ref[0] > 0, s, -jnp.inf)


def biaffine_arc(arc_d, arc_h, w_arc, mask_f):
    B, S, Ma = arc_d.shape
    w0 = w_arc[:Ma].astype(jnp.bfloat16)           # [Ma, Ma]
    wb = w_arc[Ma:Ma + 1].astype(jnp.float32)      # [1, Ma]  (bias_x row)
    tq = _row_tile(S, S * 4)
    return pl.pallas_call(
        _arc_kernel,
        out_shape=jax.ShapeDtypeStruct((B, S, S), jnp.float32),
        grid=(B, pl.cdiv(S, tq)),
        in_specs=[
            pl.BlockSpec((1, tq, Ma), lambda b, q: (b, q, 0)),
            pl.BlockSpec((1, S, Ma), lambda b, q: (b, 0, 0)),
            pl.BlockSpec((Ma, Ma), lambda b, q: (0, 0)),
            pl.BlockSpec((1, Ma), lambda b, q: (0, 0)),
            pl.BlockSpec((1, 1, S), lambda b, q: (b, 0, 0)),
        ],
        out_specs=pl.BlockSpec((1, tq, S), lambda b, q: (b, q, 0)),
        compiler_params=pltpu.CompilerParams(
            dimension_semantics=("parallel", "parallel"),
            vmem_limit_bytes=_VMEM_LIMIT),
    )(arc_d.astype(jnp.bfloat16), arc_h.astype(jnp.bfloat16), w0, wb, mask_f)


def _rel_kernel(d_ref, v0_ref, vb_ref, o_ref):
    # d_ref: [1, tq, Mr] bf16; v0_ref: [1, S*R, Mr] bf16 (resident per batch);
    # vb_ref: [1, 1, S*R] f32; o_ref: [1, tq, S*R] f32.
    # o[x, y*R + r] = sum_i d[x,i] * v0[y*R+r, i] + vb[y*R+r]
    s = lax.dot_general(d_ref[0], v0_ref[0],
                        (((1,), (1,)), ((), ())),
                        preferred_element_type=jnp.float32)
    o_ref[0] = s + vb_ref[0]


def biaffine_rel(rel_d, rel_h2d, w_rel):
    """Rel biaffine (bias_x=True, bias_y=True): returns [B, S, S, R] with no transpose.

    Both ones-columns are folded into bias rows; head-side projection (v0, vb) runs
    as one fused row-tiled matmul over all batches, then a per-(batch, row-tile) NT
    matmul produces the lane-dense [tq, S*R] block."""
    B, S, Mr = rel_d.shape
    R = w_rel.shape[0]

    # v0[(b,y), (r,i)] = sum_j h[b,y,j] W[r,i,j] + W[r,i,Mr]   (i, j < Mr)
    # vb[(b,y), r]     = sum_j h[b,y,j] W[r,Mr,j] + W[r,Mr,Mr]
    w_v0 = jnp.transpose(w_rel[:, :Mr, :Mr], (2, 0, 1)).reshape(Mr, R * Mr)
    b_v0 = w_rel[:, :Mr, Mr].reshape(R * Mr)
    w_vb = jnp.transpose(w_rel[:, Mr, :Mr], (1, 0))          # [Mr, R]
    b_vb = w_rel[:, Mr, Mr]                                   # [R]

    v0, vb = fused_linear([rel_h2d], [[w_v0], [w_vb]], [b_v0, b_vb],
                          leaky=False, out_dtypes=[jnp.bfloat16, jnp.float32])
    v0 = v0.reshape(B, S * R, Mr)      # rows ordered (y, r): free reshape
    vb = vb.reshape(B, 1, S * R)

    tq = _row_tile(S, S * R * 4)
    out = pl.pallas_call(
        _rel_kernel,
        out_shape=jax.ShapeDtypeStruct((B, S, S * R), jnp.float32),
        grid=(B, pl.cdiv(S, tq)),
        in_specs=[
            pl.BlockSpec((1, tq, Mr), lambda b, q: (b, q, 0)),
            pl.BlockSpec((1, S * R, Mr), lambda b, q: (b, 0, 0)),
            pl.BlockSpec((1, 1, S * R), lambda b, q: (b, 0, 0)),
        ],
        out_specs=pl.BlockSpec((1, tq, S * R), lambda b, q: (b, q, 0)),
        compiler_params=pltpu.CompilerParams(
            dimension_semantics=("parallel", "parallel"),
            vmem_limit_bytes=_VMEM_LIMIT),
    )(rel_d.astype(jnp.bfloat16), v0, vb)
    # [B, S, S*R] -> [B, S, S, R] is a contiguous split: free reshape (no transpose).
    return out.reshape(B, S, S, R)


# ------------------------------- forward pass ------------------------------------

def forward(params, words, cfg):
    B, S = words.shape
    H = cfg["n_lstm_hidden"]
    Ma, Mr = cfg["n_mlp_arc"], cfg["n_mlp_rel"]
    mask = words != cfg["pad_index"]

    # Embedding lookup directly in time-major layout (gather stays in XLA).
    # embed_dropout / lstm_dropout / mlp_dropout are identity in eval mode.
    x = params["word_embed"][words.T]                     # [S, B, n_embed]

    # 3-layer BiLSTM.
    # TODO(synk): pack_padded_sequence semantics are reproduced only for
    # full-length (no-pad) sequences, which the demo inputs guarantee.
    xs = [x]
    for l in range(cfg["n_lstm_layers"]):
        out_f, out_b = _bilstm_layer(xs, params["lstm"][l]["f"], params["lstm"][l]["b"])
        xs = [out_f, out_b]

    # Back to batch-major for MLP / biaffine (two small transposes).
    xf = jnp.transpose(xs[0], (1, 0, 2)).reshape(B * S, H)
    xb = jnp.transpose(xs[1], (1, 0, 2)).reshape(B * S, H)

    # Fused 4-way MLP: one launch, four lane-dense outputs, LeakyReLU(0.1).
    names = ("mlp_arc_d", "mlp_arc_h", "mlp_rel_d", "mlp_rel_h")
    ws = [[params[n]["w"][:H], params[n]["w"][H:]] for n in names]
    bs = [params[n]["b"] for n in names]
    arc_d, arc_h, rel_d, rel_h = fused_linear(
        [xf, xb], ws, bs, leaky=True, out_dtypes=[jnp.bfloat16] * 4)

    mask_f = mask.astype(jnp.float32).reshape(B, 1, S)
    s_arc = biaffine_arc(arc_d.reshape(B, S, Ma), arc_h.reshape(B, S, Ma),
                         params["w_arc"], mask_f)                       # [B, S, S]
    s_rel = biaffine_rel(rel_d.reshape(B, S, Mr), rel_h, params["w_rel"])  # [B, S, S, R]
    return s_arc, s_rel


# ----------------------------------- init ----------------------------------------

def _uniform(key, shape, scale):
    return jax.random.uniform(key, shape, jnp.float32, -scale, scale)


def init_params(key, cfg):
    keys = iter(jax.random.split(key, 64))
    H = cfg["n_lstm_hidden"]
    params = {}
    params["word_embed"] = 0.1 * jax.random.normal(
        next(keys), (cfg["n_words"], cfg["n_embed"]), jnp.float32)

    lstm = []
    for l in range(cfg["n_lstm_layers"]):
        d_in = cfg["n_embed"] if l == 0 else 2 * H
        layer = {}
        for d in ("f", "b"):
            layer[d] = {
                "W_ih": _uniform(next(keys), (4 * H, d_in), 0.1),
                "W_hh": _uniform(next(keys), (4 * H, H), 0.1),
                "b_ih": _uniform(next(keys), (4 * H,), 0.1),
                "b_hh": _uniform(next(keys), (4 * H,), 0.1),
            }
        lstm.append(layer)
    params["lstm"] = lstm

    for name, d_out in (("mlp_arc_d", cfg["n_mlp_arc"]),
                        ("mlp_arc_h", cfg["n_mlp_arc"]),
                        ("mlp_rel_d", cfg["n_mlp_rel"]),
                        ("mlp_rel_h", cfg["n_mlp_rel"])):
        params[name] = {
            "w": _uniform(next(keys), (2 * H, d_out), (1.0 / (2 * H)) ** 0.5),
            "b": jnp.zeros((d_out,), jnp.float32),
        }

    # Biaffine weights (supar zero-inits; use small random so outputs are nontrivial).
    params["w_arc"] = _uniform(next(keys),
                               (cfg["n_mlp_arc"] + 1, cfg["n_mlp_arc"]), 0.1)
    params["w_rel"] = _uniform(next(keys),
                               (cfg["n_rels"], cfg["n_mlp_rel"] + 1, cfg["n_mlp_rel"] + 1), 0.1)
    return params


# ----------------------------------- main -----------------------------------------

if __name__ == "__main__":
    cfg = dict(
        n_words=100, n_embed=32,
        n_lstm_hidden=32, n_lstm_layers=3,
        n_mlp_arc=64, n_mlp_rel=32,
        n_rels=8, pad_index=0,
    )
    B, S = 2, 8

    key = jax.random.PRNGKey(0)
    pkey, wkey = jax.random.split(key)
    params = init_params(pkey, cfg)

    # words in [2, n_words): no pad/unk tokens, so pack_padded_sequence is the
    # identity and mask is all-True (forward semantics identical to torch model).
    words = jax.random.randint(wkey, (B, S), 2, cfg["n_words"], dtype=jnp.int32)

    fwd = jax.jit(lambda p, w: forward(p, w, cfg))
    s_arc, s_rel = fwd(params, words)
    jax.block_until_ready((s_arc, s_rel))

    assert s_arc.shape == (B, S, S)
    assert s_rel.shape == (B, S, S, cfg["n_rels"])
    assert bool(jnp.all(jnp.isfinite(s_arc)))
    assert bool(jnp.all(jnp.isfinite(s_rel)))
    print("KERNEL_OK")
</pallas_src>

<mosaic_0001>
module attributes {stable_mosaic.version = 11 : i64} {
  func.func @_fused_linear_kernel(%arg0: i32, %arg1: memref<16x32xbf16, #tpu.memory_space<vmem>>, %arg2: memref<32x128xbf16, #tpu.memory_space<vmem>>, %arg3: memref<32x128xbf16, #tpu.memory_space<vmem>>, %arg4: memref<1x128xf32, #tpu.memory_space<vmem>>, %arg5: memref<1x128xf32, #tpu.memory_space<vmem>>, %arg6: memref<16x128xf32, #tpu.memory_space<vmem>>, %arg7: memref<16x128xf32, #tpu.memory_space<vmem>>) attributes {dimension_semantics = [#tpu.dimension_semantics<parallel>], iteration_bounds = array<i64: 1>, scalar_prefetch = 0 : i64, scratch_operands = 0 : i64, tpu.core_type = #tpu.core_type<tc>, window_params = [{transform_indices = @transform_0, window_bounds = array<i64: 16, 32>}, {pipeline_mode = #tpu.pipeline_mode<synchronous>, transform_indices = @transform_1, window_bounds = array<i64: 32, 128>}, {pipeline_mode = #tpu.pipeline_mode<synchronous>, transform_indices = @transform_2, window_bounds = array<i64: 32, 128>}, {pipeline_mode = #tpu.pipeline_mode<synchronous>, transform_indices = @transform_3, window_bounds = array<i64: 1, 128>}, {pipeline_mode = #tpu.pipeline_mode<synchronous>, transform_indices = @transform_4, window_bounds = array<i64: 1, 128>}, {transform_indices = @transform_5, window_bounds = array<i64: 16, 128>}, {transform_indices = @transform_6, window_bounds = array<i64: 16, 128>}]} {
    %c0 = arith.constant 0 : index
    %c0_0 = arith.constant 0 : index
    %0 = vector.load %arg1[%c0, %c0_0] : memref<16x32xbf16, #tpu.memory_space<vmem>>, vector<16x32xbf16>
    %c0_1 = arith.constant 0 : index
    %c0_2 = arith.constant 0 : index
    %1 = vector.load %arg4[%c0_1, %c0_2] : memref<1x128xf32, #tpu.memory_space<vmem>>, vector<1x128xf32>
    %c0_3 = arith.constant 0 : index
    %c0_4 = arith.constant 0 : index
    %2 = vector.load %arg2[%c0_3, %c0_4] : memref<32x128xbf16, #tpu.memory_space<vmem>>, vector<32x128xbf16>
    %cst = arith.constant dense<0.000000e+00> : vector<16x128xf32>
    %3 = tpu.matmul %0, %2, %cst {dimension_numbers = #tpu.dot_dimension_numbers<[1], [0], [0], [1], [0, 0, 1, 1], [], []>} : vector<16x32xbf16>, vector<32x128xbf16>, vector<16x128xf32> -> vector<16x128xf32>
    %4 = vector.broadcast %1 : vector<1x128xf32> to vector<16x128xf32>
    %5 = arith.addf %4, %3 : vector<16x128xf32>
    %c0_5 = arith.constant 0 : index
    %c0_6 = arith.constant 0 : index
    %6 = vector.load %arg6[%c0_5, %c0_6] : memref<16x128xf32, #tpu.memory_space<vmem>>, vector<16x128xf32>
    tpu.vector_store %arg6[%c0_5, %c0_6], %5 {strides = array<i32>} : memref<16x128xf32, #tpu.memory_space<vmem>>, vector<16x128xf32>,
    %c0_7 = arith.constant 0 : index
    %c0_8 = arith.constant 0 : index
    %7 = vector.load %arg5[%c0_7, %c0_8] : memref<1x128xf32, #tpu.memory_space<vmem>>, vector<1x128xf32>
    %c0_9 = arith.constant 0 : index
    %c0_10 = arith.constant 0 : index
    %8 = vector.load %arg3[%c0_9, %c0_10] : memref<32x128xbf16, #tpu.memory_space<vmem>>, vector<32x128xbf16>
    %cst_11 = arith.constant dense<0.000000e+00> : vector<16x128xf32>
    %9 = tpu.matmul %0, %8, %cst_11 {dimension_numbers = #tpu.dot_dimension_numbers<[1], [0], [0], [1], [0, 0, 1, 1], [], []>} : vector<16x32xbf16>, vector<32x128xbf16>, vector<16x128xf32> -> vector<16x128xf32>
    %10 = vector.broadcast %7 : vector<1x128xf32> to vector<16x128xf32>
    %11 = arith.addf %10, %9 : vector<16x128xf32>
    %c0_12 = arith.constant 0 : index
    %c0_13 = arith.constant 0 : index
    %12 = vector.load %arg7[%c0_12, %c0_13] : memref<16x128xf32, #tpu.memory_space<vmem>>, vector<16x128xf32>
    tpu.vector_store %arg7[%c0_12, %c0_13], %11 {strides = array<i32>} : memref<16x128xf32, #tpu.memory_space<vmem>>, vector<16x128xf32>,
    return
  }
  func.func @transform_0(%arg0: i32) -> (i32, i32) {
    %c0_i32 = arith.constant 0 : i32
    %c0_i32_0 = arith.constant 0 : i32
    return %arg0, %c0_i32 : i32, i32
  }
  func.func @transform_1(%arg0: i32) -> (i32, i32) {
    %c0_i32 = arith.constant 0 : i32
    %c0_i32_0 = arith.constant 0 : i32
    %c0_i32_1 = arith.constant 0 : i32
    return %c0_i32, %c0_i32_0 : i32, i32
  }
  func.func @transform_2(%arg0: i32) -> (i32, i32) {
    %c0_i32 = arith.constant 0 : i32
    %c0_i32_0 = arith.constant 0 : i32
    %c0_i32_1 = arith.constant 0 : i32
    return %c0_i32, %c0_i32_0 : i32, i32
  }
  func.func @transform_3(%arg0: i32) -> (i32, i32) {
    %c0_i32 = arith.constant 0 : i32
    %c0_i32_0 = arith.constant 0 : i32
    %c0_i32_1 = arith.constant 0 : i32
    return %c0_i32, %c0_i32_0 : i32, i32
  }
  func.func @transform_4(%arg0: i32) -> (i32, i32) {
    %c0_i32 = arith.constant 0 : i32
    %c0_i32_0 = arith.constant 0 : i32
    %c0_i32_1 = arith.constant 0 : i32
    return %c0_i32, %c0_i32_0 : i32, i32
  }
  func.func @transform_5(%arg0: i32) -> (i32, i32) {
    %c0_i32 = arith.constant 0 : i32
    %c0_i32_0 = arith.constant 0 : i32
    return %arg0, %c0_i32 : i32, i32
  }
  func.func @transform_6(%arg0: i32) -> (i32, i32) {
    %c0_i32 = arith.constant 0 : i32
    %c0_i32_0 = arith.constant 0 : i32
    return %arg0, %c0_i32 : i32, i32
  }
}

module attributes {stable_mosaic.version = 11 : i64} {
  func.func @_fused_linear_kernel(%arg0: i32, %arg1: memref<16x32xbf16, #tpu.memory_space<vmem>>, %arg2: memref<16x32xbf16, #tpu.memory_space<vmem>>, %arg3: memref<32x128xbf16, #tpu.memory_space<vmem>>, %arg4: memref<32x128xbf16, #tpu.memory_space<vmem>>, %arg5: memref<32x128xbf16, #tpu.memory_space<vmem>>, %arg6: memref<32x128xbf16, #tpu.memory_space<vmem>>, %arg7: memref<1x128xf32, #tpu.memory_space<vmem>>, %arg8: memref<1x128xf32, #tpu.memory_space<vmem>>, %arg9: memref<16x128xf32, #tpu.memory_space<vmem>>, %arg10: memref<16x128xf32, #tpu.memory_space<vmem>>) attributes {dimension_semantics = [#tpu.dimension_semantics<parallel>], iteration_bounds = array<i64: 1>, scalar_prefetch = 0 : i64, scratch_operands = 0 : i64, tpu.core_type = #tpu.core_type<tc>, window_params = [{transform_indices = @transform_0, window_bounds = array<i64: 16, 32>}, {transform_indices = @transform_1, window_bounds = array<i64: 16, 32>}, {pipeline_mode = #tpu.pipeline_mode<synchronous>, transform_indices = @transform_2, window_bounds = array<i64: 32, 128>}, {pipeline_mode = #tpu.pipeline_mode<synchronous>, transform_indices = @transform_3, window_bounds = array<i64: 32, 128>}, {pipeline_mode = #tpu.pipeline_mode<synchronous>, transform_indices = @transform_4, window_bounds = array<i64: 32, 128>}, {pipeline_mode = #tpu.pipeline_mode<synchronous>, transform_indices = @transform_5, window_bounds = array<i64: 32, 128>}, {pipeline_mode = #tpu.pipeline_mode<synchronous>, transform_indices = @transform_6, window_bounds = array<i64: 1, 128>}, {pipeline_mode = #tpu.pipeline_mode<synchronous>, transform_indices = @transform_7, window_bounds = array<i64: 1, 128>}, {transform_indices = @transform_8, window_bounds = array<i64: 16, 128>}, {transform_indices = @transform_9, window_bounds = array<i64: 16, 128>}]} {
    %c0 = arith.constant 0 : index
    %c0_0 = arith.constant 0 : index
    %0 = vector.load %arg1[%c0, %c0_0] : memref<16x32xbf16, #tpu.memory_space<vmem>>, vector<16x32xbf16>
    %c0_1 = arith.constant 0 : index
    %c0_2 = arith.constant 0 : index
    %1 = vector.load %arg2[%c0_1, %c0_2] : memref<16x32xbf16, #tpu.memory_space<vmem>>, vector<16x32xbf16>
    %c0_3 = arith.constant 0 : index
    %c0_4 = arith.constant 0 : index
    %2 = vector.load %arg7[%c0_3, %c0_4] : memref<1x128xf32, #tpu.memory_space<vmem>>, vector<1x128xf32>
    %c0_5 = arith.constant 0 : index
    %c0_6 = arith.constant 0 : index
    %3 = vector.load %arg3[%c0_5, %c0_6] : memref<32x128xbf16, #tpu.memory_space<vmem>>, vector<32x128xbf16>
    %cst = arith.constant dense<0.000000e+00> : vector<16x128xf32>
    %4 = tpu.matmul %0, %3, %cst {dimension_numbers = #tpu.dot_dimension_numbers<[1], [0], [0], [1], [0, 0, 1, 1], [], []>} : vector<16x32xbf16>, vector<32x128xbf16>, vector<16x128xf32> -> vector<16x128xf32>
    %5 = vector.broadcast %2 : vector<1x128xf32> to vector<16x128xf32>
    %6 = arith.addf %5, %4 : vector<16x128xf32>
    %c0_7 = arith.constant 0 : index
    %c0_8 = arith.constant 0 : index
    %7 = vector.load %arg4[%c0_7, %c0_8] : memref<32x128xbf16, #tpu.memory_space<vmem>>, vector<32x128xbf16>
    %cst_9 = arith.constant dense<0.000000e+00> : vector<16x128xf32>
    %8 = tpu.matmul %1, %7, %cst_9 {dimension_numbers = #tpu.dot_dimension_numbers<[1], [0], [0], [1], [0, 0, 1, 1], [], []>} : vector<16x32xbf16>, vector<32x128xbf16>, vector<16x128xf32> -> vector<16x128xf32>
    %9 = arith.addf %6, %8 : vector<16x128xf32>
    %c0_10 = arith.constant 0 : index
    %c0_11 = arith.constant 0 : index
    %10 = vector.load %arg9[%c0_10, %c0_11] : memref<16x128xf32, #tpu.memory_space<vmem>>, vector<16x128xf32>
    tpu.vector_store %arg9[%c0_10, %c0_11], %9 {strides = array<i32>} : memref<16x128xf32, #tpu.memory_space<vmem>>, vector<16x128xf32>,
    %c0_12 = arith.constant 0 : index
    %c0_13 = arith.constant 0 : index
    %11 = vector.load %arg8[%c0_12, %c0_13] : memref<1x128xf32, #tpu.memory_space<vmem>>, vector<1x128xf32>
    %c0_14 = arith.constant 0 : index
    %c0_15 = arith.constant 0 : index
    %12 = vector.load %arg5[%c0_14, %c0_15] : memref<32x128xbf16, #tpu.memory_space<vmem>>, vector<32x128xbf16>
    %cst_16 = arith.constant dense<0.000000e+00> : vector<16x128xf32>
    %13 = tpu.matmul %0, %12, %cst_16 {dimension_numbers = #tpu.dot_dimension_numbers<[1], [0], [0], [1], [0, 0, 1, 1], [], []>} : vector<16x32xbf16>, vector<32x128xbf16>, vector<16x128xf32> -> vector<16x128xf32>
    %14 = vector.broadcast %11 : vector<1x128xf32> to vector<16x128xf32>
    %15 = arith.addf %14, %13 : vector<16x128xf32>
    %c0_17 = arith.constant 0 : index
    %c0_18 = arith.constant 0 : index
    %16 = vector.load %arg6[%c0_17, %c0_18] : memref<32x128xbf16, #tpu.memory_space<vmem>>, vector<32x128xbf16>
    %cst_19 = arith.constant dense<0.000000e+00> : vector<16x128xf32>
    %17 = tpu.matmul %1, %16, %cst_19 {dimension_numbers = #tpu.dot_dimension_numbers<[1], [0], [0], [1], [0, 0, 1, 1], [], []>} : vector<16x32xbf16>, vector<32x128xbf16>, vector<16x128xf32> -> vector<16x128xf32>
    %18 = arith.addf %15, %17 : vector<16x128xf32>
    %c0_20 = arith.constant 0 : index
    %c0_21 = arith.constant 0 : index
    %19 = vector.load %arg10[%c0_20, %c0_21] : memref<16x128xf32, #tpu.memory_space<vmem>>, vector<16x128xf32>
    tpu.vector_store %arg10[%c0_20, %c0_21], %18 {strides = array<i32>} : memref<16x128xf32, #tpu.memory_space<vmem>>, vector<16x128xf32>,
    return
  }
  func.func @transform_0(%arg0: i32) -> (i32, i32) {
    %c0_i32 = arith.constant 0 : i32
    %c0_i32_0 = arith.constant 0 : i32
    return %arg0, %c0_i32 : i32, i32
  }
  func.func @transform_1(%arg0: i32) -> (i32, i32) {
    %c0_i32 = arith.constant 0 : i32
    %c0_i32_0 = arith.constant 0 : i32
    return %arg0, %c0_i32 : i32, i32
  }
  func.func @transform_2(%arg0: i32) -> (i32, i32) {
    %c0_i32 = arith.constant 0 : i32
    %c0_i32_0 = arith.constant 0 : i32
    %c0_i32_1 = arith.constant 0 : i32
    return %c0_i32, %c0_i32_0 : i32, i32
  }
  func.func @transform_3(%arg0: i32) -> (i32, i32) {
    %c0_i32 = arith.constant 0 : i32
    %c0_i32_0 = arith.constant 0 : i32
    %c0_i32_1 = arith.constant 0 : i32
    return %c0_i32, %c0_i32_0 : i32, i32
  }
  func.func @transform_4(%arg0: i32) -> (i32, i32) {
    %c0_i32 = arith.constant 0 : i32
    %c0_i32_0 = arith.constant 0 : i32
    %c0_i32_1 = arith.constant 0 : i32
    return %c0_i32, %c0_i32_0 : i32, i32
  }
  func.func @transform_5(%arg0: i32) -> (i32, i32) {
    %c0_i32 = arith.constant 0 : i32
    %c0_i32_0 = arith.constant 0 : i32
    %c0_i32_1 = arith.constant 0 : i32
    return %c0_i32, %c0_i32_0 : i32, i32
  }
  func.func @transform_6(%arg0: i32) -> (i32, i32) {
    %c0_i32 = arith.constant 0 : i32
    %c0_i32_0 = arith.constant 0 : i32
    %c0_i32_1 = arith.constant 0 : i32
    return %c0_i32, %c0_i32_0 : i32, i32
  }
  func.func @transform_7(%arg0: i32) -> (i32, i32) {
    %c0_i32 = arith.constant 0 : i32
    %c0_i32_0 = arith.constant 0 : i32
    %c0_i32_1 = arith.constant 0 : i32
    return %c0_i32, %c0_i32_0 : i32, i32
  }
  func.func @transform_8(%arg0: i32) -> (i32, i32) {
    %c0_i32 = arith.constant 0 : i32
    %c0_i32_0 = arith.constant 0 : i32
    return %arg0, %c0_i32 : i32, i32
  }
  func.func @transform_9(%arg0: i32) -> (i32, i32) {
    %c0_i32 = arith.constant 0 : i32
    %c0_i32_0 = arith.constant 0 : i32
    return %arg0, %c0_i32 : i32, i32
  }
}

module attributes {stable_mosaic.version = 11 : i64} {
  func.func @_bilstm_cell_kernel(%arg0: i32, %arg1: memref<1x2x128xf32, #tpu.memory_space<vmem>>, %arg2: memref<1x2x128xf32, #tpu.memory_space<vmem>>, %arg3: memref<32x128xbf16, #tpu.memory_space<vmem>>, %arg4: memref<32x128xbf16, #tpu.memory_space<vmem>>, %arg5: memref<1x2x32xf32, #tpu.memory_space<vmem>>, %arg6: memref<1x2x32xf32, #tpu.memory_space<vmem>>, %arg7: memref<2x2x32xf32, #tpu.memory_space<vmem>>, %arg8: memref<2x2x32xf32, #tpu.memory_space<vmem>>) attributes {dimension_semantics = [#tpu.dimension_semantics<arbitrary>], iteration_bounds = array<i64: 8>, scalar_prefetch = 0 : i64, scratch_operands = 2 : i64, tpu.core_type = #tpu.core_type<tc>, window_params = [{transform_indices = @transform_0, window_bounds = array<i64: 1, 2, 128>}, {transform_indices = @transform_1, window_bounds = array<i64: 1, 2, 128>}, {pipeline_mode = #tpu.pipeline_mode<synchronous>, transform_indices = @transform_2, window_bounds = array<i64: 32, 128>}, {pipeline_mode = #tpu.pipeline_mode<synchronous>, transform_indices = @transform_3, window_bounds = array<i64: 32, 128>}, {transform_indices = @transform_4, window_bounds = array<i64: 1, 2, 32>}, {transform_indices = @transform_5, window_bounds = array<i64: 1, 2, 32>}]} {
    %c0_i32 = arith.constant 0 : i32
    %0 = arith.cmpi eq, %arg0, %c0_i32 : i32
    %1 = arith.extui %0 : i1 to i32
    %c0_i32_0 = arith.constant 0 : i32
    %2 = arith.cmpi ne, %1, %c0_i32_0 : i32
    scf.if %2 {
      %cst_46 = arith.constant 0.000000e+00 : f32
      %91 = vector.broadcast %cst_46 : f32 to vector<2x2x32xf32>
      %c0_47 = arith.constant 0 : index
      %c0_48 = arith.constant 0 : index
      %c0_49 = arith.constant 0 : index
      %92 = vector.load %arg7[%c0_47, %c0_48, %c0_49] : memref<2x2x32xf32, #tpu.memory_space<vmem>>, vector<2x2x32xf32>
      tpu.vector_store %arg7[%c0_47, %c0_48, %c0_49], %91 {strides = array<i32>} : memref<2x2x32xf32, #tpu.memory_space<vmem>>, vector<2x2x32xf32>,
      %cst_50 = arith.constant 0.000000e+00 : f32
      %93 = vector.broadcast %cst_50 : f32 to vector<2x2x32xf32>
      %c0_51 = arith.constant 0 : index
      %c0_52 = arith.constant 0 : index
      %c0_53 = arith.constant 0 : index
      %94 = vector.load %arg8[%c0_51, %c0_52, %c0_53] : memref<2x2x32xf32, #tpu.memory_space<vmem>>, vector<2x2x32xf32>
      tpu.vector_store %arg8[%c0_51, %c0_52, %c0_53], %93 {strides = array<i32>} : memref<2x2x32xf32, #tpu.memory_space<vmem>>, vector<2x2x32xf32>,
    } else {
    }
    %c0 = arith.constant 0 : index
    %c0_1 = arith.constant 0 : index
    %c0_2 = arith.constant 0 : index
    %3 = vector.load %arg1[%c0, %c0_1, %c0_2] : memref<1x2x128xf32, #tpu.memory_space<vmem>>, vector<1x2x128xf32>
    %4 = vector.shape_cast %3 : vector<1x2x128xf32> to vector<2x128xf32>
    %c0_3 = arith.constant 0 : index
    %c0_4 = arith.constant 0 : index
    %c0_5 = arith.constant 0 : index
    %5 = vector.load %arg7[%c0_3, %c0_4, %c0_5] : memref<2x2x32xf32, #tpu.memory_space<vmem>>, vector<1x2x32xf32>
    %6 = vector.shape_cast %5 : vector<1x2x32xf32> to vector<2x32xf32>
    %c0_6 = arith.constant 0 : index
    %c0_7 = arith.constant 0 : index
    %c0_8 = arith.constant 0 : index
    %7 = vector.load %arg8[%c0_6, %c0_7, %c0_8] : memref<2x2x32xf32, #tpu.memory_space<vmem>>, vector<1x2x32xf32>
    %8 = vector.shape_cast %7 : vector<1x2x32xf32> to vector<2x32xf32>
    %c0_9 = arith.constant 0 : index
    %c0_10 = arith.constant 0 : index
    %9 = vector.load %arg3[%c0_9, %c0_10] : memref<32x128xbf16, #tpu.memory_space<vmem>>, vector<32x128xbf16>
    %10 = arith.truncf %6 : vector<2x32xf32> to vector<2x32xbf16>
    %cst = arith.constant dense<0.000000e+00> : vector<2x128xf32>
    %11 = tpu.matmul %10, %9, %cst {dimension_numbers = #tpu.dot_dimension_numbers<[1], [0], [0], [1], [0, 0, 1, 1], [], []>} : vector<2x32xbf16>, vector<32x128xbf16>, vector<2x128xf32> -> vector<2x128xf32>
    %12 = arith.addf %4, %11 : vector<2x128xf32>
    %13 = vector.extract_strided_slice %12 {offsets = [0, 0], sizes = [2, 32], strides = [1, 1]} : vector<2x128xf32> to vector<2x32xf32>
    %14 = arith.negf %13 : vector<2x32xf32>
    %15 = math.exp %14 : vector<2x32xf32>
    %cst_11 = arith.constant 1.000000e+00 : f32
    %16 = vector.broadcast %cst_11 : f32 to vector<2x32xf32>
    %17 = arith.addf %16, %15 : vector<2x32xf32>
    %18 = arith.divf %16, %17 : vector<2x32xf32>
    %19 = vector.extract_strided_slice %12 {offsets = [0, 32], sizes = [2, 32], strides = [1, 1]} : vector<2x128xf32> to vector<2x32xf32>
    %20 = arith.negf %19 : vector<2x32xf32>
    %21 = math.exp %20 : vector<2x32xf32>
    %cst_12 = arith.constant 1.000000e+00 : f32
    %22 = vector.broadcast %cst_12 : f32 to vector<2x32xf32>
    %23 = arith.addf %22, %21 : vector<2x32xf32>
    %24 = arith.divf %22, %23 : vector<2x32xf32>
    %25 = vector.extract_strided_slice %12 {offsets = [0, 64], sizes = [2, 32], strides = [1, 1]} : vector<2x128xf32> to vector<2x32xf32>
    %26 = math.tanh %25 : vector<2x32xf32>
    %27 = vector.extract_strided_slice %12 {offsets = [0, 96], sizes = [2, 32], strides = [1, 1]} : vector<2x128xf32> to vector<2x32xf32>
    %28 = arith.negf %27 : vector<2x32xf32>
    %29 = math.exp %28 : vector<2x32xf32>
    %cst_13 = arith.constant 1.000000e+00 : f32
    %30 = vector.broadcast %cst_13 : f32 to vector<2x32xf32>
    %31 = arith.addf %30, %29 : vector<2x32xf32>
    %32 = arith.divf %30, %31 : vector<2x32xf32>
    %33 = arith.mulf %24, %8 : vector<2x32xf32>
    %34 = arith.mulf %18, %26 : vector<2x32xf32>
    %35 = arith.addf %33, %34 : vector<2x32xf32>
    %36 = math.tanh %35 : vector<2x32xf32>
    %37 = arith.mulf %32, %36 : vector<2x32xf32>
    %c0_14 = arith.constant 0 : index
    %c0_15 = arith.constant 0 : index
    %c0_16 = arith.constant 0 : index
    %38 = vector.load %arg2[%c0_14, %c0_15, %c0_16] : memref<1x2x128xf32, #tpu.memory_space<vmem>>, vector<1x2x128xf32>
    %39 = vector.shape_cast %38 : vector<1x2x128xf32> to vector<2x128xf32>
    %c1 = arith.constant 1 : index
    %c0_17 = arith.constant 0 : index
    %c0_18 = arith.constant 0 : index
    %40 = vector.load %arg7[%c1, %c0_17, %c0_18] : memref<2x2x32xf32, #tpu.memory_space<vmem>>, vector<1x2x32xf32>
    %41 = vector.shape_cast %40 : vector<1x2x32xf32> to vector<2x32xf32>
    %c1_19 = arith.constant 1 : index
    %c0_20 = arith.constant 0 : index
    %c0_21 = arith.constant 0 : index
    %42 = vector.load %arg8[%c1_19, %c0_20, %c0_21] : memref<2x2x32xf32, #tpu.memory_space<vmem>>, vector<1x2x32xf32>
    %43 = vector.shape_cast %42 : vector<1x2x32xf32> to vector<2x32xf32>
    %c0_22 = arith.constant 0 : index
    %c0_23 = arith.constant 0 : index
    %44 = vector.load %arg4[%c0_22, %c0_23] : memref<32x128xbf16, #tpu.memory_space<vmem>>, vector<32x128xbf16>
    %45 = arith.truncf %41 : vector<2x32xf32> to vector<2x32xbf16>
    %cst_24 = arith.constant dense<0.000000e+00> : vector<2x128xf32>
    %46 = tpu.matmul %45, %44, %cst_24 {dimension_numbers = #tpu.dot_dimension_numbers<[1], [0], [0], [1], [0, 0, 1, 1], [], []>} : vector<2x32xbf16>, vector<32x128xbf16>, vector<2x128xf32> -> vector<2x128xf32>
    %47 = arith.addf %39, %46 : vector<2x128xf32>
    %48 = vector.extract_strided_slice %47 {offsets = [0, 0], sizes = [2, 32], strides = [1, 1]} : vector<2x128xf32> to vector<2x32xf32>
    %49 = arith.negf %48 : vector<2x32xf32>
    %50 = math.exp %49 : vector<2x32xf32>
    %cst_25 = arith.constant 1.000000e+00 : f32
    %51 = vector.broadcast %cst_25 : f32 to vector<2x32xf32>
    %52 = arith.addf %51, %50 : vector<2x32xf32>
    %53 = arith.divf %51, %52 : vector<2x32xf32>
    %54 = vector.extract_strided_slice %47 {offsets = [0, 32], sizes = [2, 32], strides = [1, 1]} : vector<2x128xf32> to vector<2x32xf32>
    %55 = arith.negf %54 : vector<2x32xf32>
    %56 = math.exp %55 : vector<2x32xf32>
    %cst_26 = arith.constant 1.000000e+00 : f32
    %57 = vector.broadcast %cst_26 : f32 to vector<2x32xf32>
    %58 = arith.addf %57, %56 : vector<2x32xf32>
    %59 = arith.divf %57, %58 : vector<2x32xf32>
    %60 = vector.extract_strided_slice %47 {offsets = [0, 64], sizes = [2, 32], strides = [1, 1]} : vector<2x128xf32> to vector<2x32xf32>
    %61 = math.tanh %60 : vector<2x32xf32>
    %62 = vector.extract_strided_slice %47 {offsets = [0, 96], sizes = [2, 32], strides = [1, 1]} : vector<2x128xf32> to vector<2x32xf32>
    %63 = arith.negf %62 : vector<2x32xf32>
    %64 = math.exp %63 : vector<2x32xf32>
    %cst_27 = arith.constant 1.000000e+00 : f32
    %65 = vector.broadcast %cst_27 : f32 to vector<2x32xf32>
    %66 = arith.addf %65, %64 : vector<2x32xf32>
    %67 = arith.divf %65, %66 : vector<2x32xf32>
    %68 = arith.mulf %59, %43 : vector<2x32xf32>
    %69 = arith.mulf %53, %61 : vector<2x32xf32>
    %70 = arith.addf %68, %69 : vector<2x32xf32>
    %71 = math.tanh %70 : vector<2x32xf32>
    %72 = arith.mulf %67, %71 : vector<2x32xf32>
    %c0_28 = arith.constant 0 : index
    %c0_29 = arith.constant 0 : index
    %c0_30 = arith.constant 0 : index
    %73 = vector.load %arg7[%c0_28, %c0_29, %c0_30] : memref<2x2x32xf32, #tpu.memory_space<vmem>>, vector<1x2x32xf32>
    %74 = vector.shape_cast %73 : vector<1x2x32xf32> to vector<2x32xf32>
    %75 = vector.shape_cast %37 : vector<2x32xf32> to vector<1x2x32xf32>
    tpu.vector_store %arg7[%c0_28, %c0_29, %c0_30], %75 {strides = array<i32>} : memref<2x2x32xf32, #tpu.memory_space<vmem>>, vector<1x2x32xf32>,
    %c0_31 = arith.constant 0 : index
    %c0_32 = arith.constant 0 : index
    %c0_33 = arith.constant 0 : index
    %76 = vector.load %arg8[%c0_31, %c0_32, %c0_33] : memref<2x2x32xf32, #tpu.memory_space<vmem>>, vector<1x2x32xf32>
    %77 = vector.shape_cast %76 : vector<1x2x32xf32> to vector<2x32xf32>
    %78 = vector.shape_cast %35 : vector<2x32xf32> to vector<1x2x32xf32>
    tpu.vector_store %arg8[%c0_31, %c0_32, %c0_33], %78 {strides = array<i32>} : memref<2x2x32xf32, #tpu.memory_space<vmem>>, vector<1x2x32xf32>,
    %c1_34 = arith.constant 1 : index
    %c0_35 = arith.constant 0 : index
    %c0_36 = arith.constant 0 : index
    %79 = vector.load %arg7[%c1_34, %c0_35, %c0_36] : memref<2x2x32xf32, #tpu.memory_space<vmem>>, vector<1x2x32xf32>
    %80 = vector.shape_cast %79 : vector<1x2x32xf32> to vector<2x32xf32>
    %81 = vector.shape_cast %72 : vector<2x32xf32> to vector<1x2x32xf32>
    tpu.vector_store %arg7[%c1_34, %c0_35, %c0_36], %81 {strides = array<i32>} : memref<2x2x32xf32, #tpu.memory_space<vmem>>, vector<1x2x32xf32>,
    %c1_37 = arith.constant 1 : index
    %c0_38 = arith.constant 0 : index
    %c0_39 = arith.constant 0 : index
    %82 = vector.load %arg8[%c1_37, %c0_38, %c0_39] : memref<2x2x32xf32, #tpu.memory_space<vmem>>, vector<1x2x32xf32>
    %83 = vector.shape_cast %82 : vector<1x2x32xf32> to vector<2x32xf32>
    %84 = vector.shape_cast %70 : vector<2x32xf32> to vector<1x2x32xf32>
    tpu.vector_store %arg8[%c1_37, %c0_38, %c0_39], %84 {strides = array<i32>} : memref<2x2x32xf32, #tpu.memory_space<vmem>>, vector<1x2x32xf32>,
    %c0_40 = arith.constant 0 : index
    %c0_41 = arith.constant 0 : index
    %c0_42 = arith.constant 0 : index
    %85 = vector.load %arg5[%c0_40, %c0_41, %c0_42] : memref<1x2x32xf32, #tpu.memory_space<vmem>>, vector<1x2x32xf32>
    %86 = vector.shape_cast %85 : vector<1x2x32xf32> to vector<2x32xf32>
    %87 = vector.shape_cast %37 : vector<2x32xf32> to vector<1x2x32xf32>
    tpu.vector_store %arg5[%c0_40, %c0_41, %c0_42], %87 {strides = array<i32>} : memref<1x2x32xf32, #tpu.memory_space<vmem>>, vector<1x2x32xf32>,
    %c0_43 = arith.constant 0 : index
    %c0_44 = arith.constant 0 : index
    %c0_45 = arith.constant 0 : index
    %88 = vector.load %arg6[%c0_43, %c0_44, %c0_45] : memref<1x2x32xf32, #tpu.memory_space<vmem>>, vector<1x2x32xf32>
    %89 = vector.shape_cast %88 : vector<1x2x32xf32> to vector<2x32xf32>
    %90 = vector.shape_cast %72 : vector<2x32xf32> to vector<1x2x32xf32>
    tpu.vector_store %arg6[%c0_43, %c0_44, %c0_45], %90 {strides = array<i32>} : memref<1x2x32xf32, #tpu.memory_space<vmem>>, vector<1x2x32xf32>,
    return
  }
  func.func @transform_0(%arg0: i32) -> (i32, i32, i32) {
    %c0_i32 = arith.constant 0 : i32
    %c0_i32_0 = arith.constant 0 : i32
    %c0_i32_1 = arith.constant 0 : i32
    return %arg0, %c0_i32, %c0_i32_0 : i32, i32, i32
  }
  func.func @transform_1(%arg0: i32) -> (i32, i32, i32) {
    %c7_i32 = arith.constant 7 : i32
    %0 = arith.subi %c7_i32, %arg0 : i32
    %c0_i32 = arith.constant 0 : i32
    %c0_i32_0 = arith.constant 0 : i32
    %c0_i32_1 = arith.constant 0 : i32
    return %0, %c0_i32, %c0_i32_0 : i32, i32, i32
  }
  func.func @transform_2(%arg0: i32) -> (i32, i32) {
    %c0_i32 = arith.constant 0 : i32
    %c0_i32_0 = arith.constant 0 : i32
    %c0_i32_1 = arith.constant 0 : i32
    return %c0_i32, %c0_i32_0 : i32, i32
  }
  func.func @transform_3(%arg0: i32) -> (i32, i32) {
    %c0_i32 = arith.constant 0 : i32
    %c0_i32_0 = arith.constant 0 : i32
    %c0_i32_1 = arith.constant 0 : i32
    return %c0_i32, %c0_i32_0 : i32, i32
  }
  func.func @transform_4(%arg0: i32) -> (i32, i32, i32) {
    %c0_i32 = arith.constant 0 : i32
    %c0_i32_0 = arith.constant 0 : i32
    %c0_i32_1 = arith.constant 0 : i32
    return %arg0, %c0_i32, %c0_i32_0 : i32, i32, i32
  }
  func.func @transform_5(%arg0: i32) -> (i32, i32, i32) {
    %c7_i32 = arith.constant 7 : i32
    %0 = arith.subi %c7_i32, %arg0 : i32
    %c0_i32 = arith.constant 0 : i32
    %c0_i32_0 = arith.constant 0 : i32
    %c0_i32_1 = arith.constant 0 : i32
    return %0, %c0_i32, %c0_i32_0 : i32, i32, i32
  }
}

module attributes {stable_mosaic.version = 11 : i64} {
  func.func @_fused_linear_kernel(%arg0: i32, %arg1: memref<16x32xbf16, #tpu.memory_space<vmem>>, %arg2: memref<16x32xbf16, #tpu.memory_space<vmem>>, %arg3: memref<32x64xbf16, #tpu.memory_space<vmem>>, %arg4: memref<32x64xbf16, #tpu.memory_space<vmem>>, %arg5: memref<32x64xbf16, #tpu.memory_space<vmem>>, %arg6: memref<32x64xbf16, #tpu.memory_space<vmem>>, %arg7: memref<32x32xbf16, #tpu.memory_space<vmem>>, %arg8: memref<32x32xbf16, #tpu.memory_space<vmem>>, %arg9: memref<32x32xbf16, #tpu.memory_space<vmem>>, %arg10: memref<32x32xbf16, #tpu.memory_space<vmem>>, %arg11: memref<1x64xf32, #tpu.memory_space<vmem>>, %arg12: memref<1x64xf32, #tpu.memory_space<vmem>>, %arg13: memref<1x32xf32, #tpu.memory_space<vmem>>, %arg14: memref<1x32xf32, #tpu.memory_space<vmem>>, %arg15: memref<16x64xbf16, #tpu.memory_space<vmem>>, %arg16: memref<16x64xbf16, #tpu.memory_space<vmem>>, %arg17: memref<16x32xbf16, #tpu.memory_space<vmem>>, %arg18: memref<16x32xbf16, #tpu.memory_space<vmem>>) attributes {dimension_semantics = [#tpu.dimension_semantics<parallel>], iteration_bounds = array<i64: 1>, scalar_prefetch = 0 : i64, scratch_operands = 0 : i64, tpu.core_type = #tpu.core_type<tc>, window_params = [{transform_indices = @transform_0, window_bounds = array<i64: 16, 32>}, {transform_indices = @transform_1, window_bounds = array<i64: 16, 32>}, {pipeline_mode = #tpu.pipeline_mode<synchronous>, transform_indices = @transform_2, window_bounds = array<i64: 32, 64>}, {pipeline_mode = #tpu.pipeline_mode<synchronous>, transform_indices = @transform_3, window_bounds = array<i64: 32, 64>}, {pipeline_mode = #tpu.pipeline_mode<synchronous>, transform_indices = @transform_4, window_bounds = array<i64: 32, 64>}, {pipeline_mode = #tpu.pipeline_mode<synchronous>, transform_indices = @transform_5, window_bounds = array<i64: 32, 64>}, {pipeline_mode = #tpu.pipeline_mode<synchronous>, transform_indices = @transform_6, window_bounds = array<i64: 32, 32>}, {pipeline_mode = #tpu.pipeline_mode<synchronous>, transform_indices = @transform_7, window_bounds = array<i64: 32, 32>}, {pipeline_mode = #tpu.pipeline_mode<synchronous>, transform_indices = @transform_8, window_bounds = array<i64: 32, 32>}, {pipeline_mode = #tpu.pipeline_mode<synchronous>, transform_indices = @transform_9, window_bounds = array<i64: 32, 32>}, {pipeline_mode = #tpu.pipeline_mode<synchronous>, transform_indices = @transform_10, window_bounds = array<i64: 1, 64>}, {pipeline_mode = #tpu.pipeline_mode<synchronous>, transform_indices = @transform_11, window_bounds = array<i64: 1, 64>}, {pipeline_mode = #tpu.pipeline_mode<synchronous>, transform_indices = @transform_12, window_bounds = array<i64: 1, 32>}, {pipeline_mode = #tpu.pipeline_mode<synchronous>, transform_indices = @transform_13, window_bounds = array<i64: 1, 32>}, {transform_indices = @transform_14, window_bounds = array<i64: 16, 64>}, {transform_indices = @transform_15, window_bounds = array<i64: 16, 64>}, {transform_indices = @transform_16, window_bounds = array<i64: 16, 32>}, {transform_indices = @transform_17, window_bounds = array<i64: 16, 32>}]} {
    %c0 = arith.constant 0 : index
    %c0_0 = arith.constant 0 : index
    %0 = vector.load %arg1[%c0, %c0_0] : memref<16x32xbf16, #tpu.memory_space<vmem>>, vector<16x32xbf16>
    %c0_1 = arith.constant 0 : index
    %c0_2 = arith.constant 0 : index
    %1 = vector.load %arg2[%c0_1, %c0_2] : memref<16x32xbf16, #tpu.memory_space<vmem>>, vector<16x32xbf16>
    %c0_3 = arith.constant 0 : index
    %c0_4 = arith.constant 0 : index
    %2 = vector.load %arg11[%c0_3, %c0_4] : memref<1x64xf32, #tpu.memory_space<vmem>>, vector<1x64xf32>
    %c0_5 = arith.constant 0 : index
    %c0_6 = arith.constant 0 : index
    %3 = vector.load %arg3[%c0_5, %c0_6] : memref<32x64xbf16, #tpu.memory_space<vmem>>, vector<32x64xbf16>
    %cst = arith.constant dense<0.000000e+00> : vector<16x64xf32>
    %4 = tpu.matmul %0, %3, %cst {dimension_numbers = #tpu.dot_dimension_numbers<[1], [0], [0], [1], [0, 0, 1, 1], [], []>} : vector<16x32xbf16>, vector<32x64xbf16>, vector<16x64xf32> -> vector<16x64xf32>
    %5 = vector.broadcast %2 : vector<1x64xf32> to vector<16x64xf32>
    %6 = arith.addf %5, %4 : vector<16x64xf32>
    %c0_7 = arith.constant 0 : index
    %c0_8 = arith.constant 0 : index
    %7 = vector.load %arg4[%c0_7, %c0_8] : memref<32x64xbf16, #tpu.memory_space<vmem>>, vector<32x64xbf16>
    %cst_9 = arith.constant dense<0.000000e+00> : vector<16x64xf32>
    %8 = tpu.matmul %1, %7, %cst_9 {dimension_numbers = #tpu.dot_dimension_numbers<[1], [0], [0], [1], [0, 0, 1, 1], [], []>} : vector<16x32xbf16>, vector<32x64xbf16>, vector<16x64xf32> -> vector<16x64xf32>
    %9 = arith.addf %6, %8 : vector<16x64xf32>
    %cst_10 = arith.constant 1.000000e-01 : f32
    %10 = vector.broadcast %cst_10 : f32 to vector<16x64xf32>
    %11 = arith.mulf %10, %9 : vector<16x64xf32>
    %12 = arith.maximumf %9, %11 : vector<16x64xf32>
    %13 = arith.truncf %12 : vector<16x64xf32> to vector<16x64xbf16>
    %c0_11 = arith.constant 0 : index
    %c0_12 = arith.constant 0 : index
    %14 = vector.load %arg15[%c0_11, %c0_12] : memref<16x64xbf16, #tpu.memory_space<vmem>>, vector<16x64xbf16>
    tpu.vector_store %arg15[%c0_11, %c0_12], %13 {strides = array<i32>} : memref<16x64xbf16, #tpu.memory_space<vmem>>, vector<16x64xbf16>,
    %c0_13 = arith.constant 0 : index
    %c0_14 = arith.constant 0 : index
    %15 = vector.load %arg12[%c0_13, %c0_14] : memref<1x64xf32, #tpu.memory_space<vmem>>, vector<1x64xf32>
    %c0_15 = arith.constant 0 : index
    %c0_16 = arith.constant 0 : index
    %16 = vector.load %arg5[%c0_15, %c0_16] : memref<32x64xbf16, #tpu.memory_space<vmem>>, vector<32x64xbf16>
    %cst_17 = arith.constant dense<0.000000e+00> : vector<16x64xf32>
    %17 = tpu.matmul %0, %16, %cst_17 {dimension_numbers = #tpu.dot_dimension_numbers<[1], [0], [0], [1], [0, 0, 1, 1], [], []>} : vector<16x32xbf16>, vector<32x64xbf16>, vector<16x64xf32> -> vector<16x64xf32>
    %18 = vector.broadcast %15 : vector<1x64xf32> to vector<16x64xf32>
    %19 = arith.addf %18, %17 : vector<16x64xf32>
    %c0_18 = arith.constant 0 : index
    %c0_19 = arith.constant 0 : index
    %20 = vector.load %arg6[%c0_18, %c0_19] : memref<32x64xbf16, #tpu.memory_space<vmem>>, vector<32x64xbf16>
    %cst_20 = arith.constant dense<0.000000e+00> : vector<16x64xf32>
    %21 = tpu.matmul %1, %20, %cst_20 {dimension_numbers = #tpu.dot_dimension_numbers<[1], [0], [0], [1], [0, 0, 1, 1], [], []>} : vector<16x32xbf16>, vector<32x64xbf16>, vector<16x64xf32> -> vector<16x64xf32>
    %22 = arith.addf %19, %21 : vector<16x64xf32>
    %cst_21 = arith.constant 1.000000e-01 : f32
    %23 = vector.broadcast %cst_21 : f32 to vector<16x64xf32>
    %24 = arith.mulf %23, %22 : vector<16x64xf32>
    %25 = arith.maximumf %22, %24 : vector<16x64xf32>
    %26 = arith.truncf %25 : vector<16x64xf32> to vector<16x64xbf16>
    %c0_22 = arith.constant 0 : index
    %c0_23 = arith.constant 0 : index
    %27 = vector.load %arg16[%c0_22, %c0_23] : memref<16x64xbf16, #tpu.memory_space<vmem>>, vector<16x64xbf16>
    tpu.vector_store %arg16[%c0_22, %c0_23], %26 {strides = array<i32>} : memref<16x64xbf16, #tpu.memory_space<vmem>>, vector<16x64xbf16>,
    %c0_24 = arith.constant 0 : index
    %c0_25 = arith.constant 0 : index
    %28 = vector.load %arg13[%c0_24, %c0_25] : memref<1x32xf32, #tpu.memory_space<vmem>>, vector<1x32xf32>
    %c0_26 = arith.constant 0 : index
    %c0_27 = arith.constant 0 : index
    %29 = vector.load %arg7[%c0_26, %c0_27] : memref<32x32xbf16, #tpu.memory_space<vmem>>, vector<32x32xbf16>
    %cst_28 = arith.constant dense<0.000000e+00> : vector<16x32xf32>
    %30 = tpu.matmul %0, %29, %cst_28 {dimension_numbers = #tpu.dot_dimension_numbers<[1], [0], [0], [1], [0, 0, 1, 1], [], []>} : vector<16x32xbf16>, vector<32x32xbf16>, vector<16x32xf32> -> vector<16x32xf32>
    %31 = vector.broadcast %28 : vector<1x32xf32> to vector<16x32xf32>
    %32 = arith.addf %31, %30 : vector<16x32xf32>
    %c0_29 = arith.constant 0 : index
    %c0_30 = arith.constant 0 : index
    %33 = vector.load %arg8[%c0_29, %c0_30] : memref<32x32xbf16, #tpu.memory_space<vmem>>, vector<32x32xbf16>
    %cst_31 = arith.constant dense<0.000000e+00> : vector<16x32xf32>
    %34 = tpu.matmul %1, %33, %cst_31 {dimension_numbers = #tpu.dot_dimension_numbers<[1], [0], [0], [1], [0, 0, 1, 1], [], []>} : vector<16x32xbf16>, vector<32x32xbf16>, vector<16x32xf32> -> vector<16x32xf32>
    %35 = arith.addf %32, %34 : vector<16x32xf32>
    %cst_32 = arith.constant 1.000000e-01 : f32
    %36 = vector.broadcast %cst_32 : f32 to vector<16x32xf32>
    %37 = arith.mulf %36, %35 : vector<16x32xf32>
    %38 = arith.maximumf %35, %37 : vector<16x32xf32>
    %39 = arith.truncf %38 : vector<16x32xf32> to vector<16x32xbf16>
    %c0_33 = arith.constant 0 : index
    %c0_34 = arith.constant 0 : index
    %40 = vector.load %arg17[%c0_33, %c0_34] : memref<16x32xbf16, #tpu.memory_space<vmem>>, vector<16x32xbf16>
    tpu.vector_store %arg17[%c0_33, %c0_34], %39 {strides = array<i32>} : memref<16x32xbf16, #tpu.memory_space<vmem>>, vector<16x32xbf16>,
    %c0_35 = arith.constant 0 : index
    %c0_36 = arith.constant 0 : index
    %41 = vector.load %arg14[%c0_35, %c0_36] : memref<1x32xf32, #tpu.memory_space<vmem>>, vector<1x32xf32>
    %c0_37 = arith.constant 0 : index
    %c0_38 = arith.constant 0 : index
    %42 = vector.load %arg9[%c0_37, %c0_38] : memref<32x32xbf16, #tpu.memory_space<vmem>>, vector<32x32xbf16>
    %cst_39 = arith.constant dense<0.000000e+00> : vector<16x32xf32>
    %43 = tpu.matmul %0, %42, %cst_39 {dimension_numbers = #tpu.dot_dimension_numbers<[1], [0], [0], [1], [0, 0, 1, 1], [], []>} : vector<16x32xbf16>, vector<32x32xbf16>, vector<16x32xf32> -> vector<16x32xf32>
    %44 = vector.broadcast %41 : vector<1x32xf32> to vector<16x32xf32>
    %45 = arith.addf %44, %43 : vector<16x32xf32>
    %c0_40 = arith.constant 0 : index
    %c0_41 = arith.constant 0 : index
    %46 = vector.load %arg10[%c0_40, %c0_41] : memref<32x32xbf16, #tpu.memory_space<vmem>>, vector<32x32xbf16>
    %cst_42 = arith.constant dense<0.000000e+00> : vector<16x32xf32>
    %47 = tpu.matmul %1, %46, %cst_42 {dimension_numbers = #tpu.dot_dimension_numbers<[1], [0], [0], [1], [0, 0, 1, 1], [], []>} : vector<16x32xbf16>, vector<32x32xbf16>, vector<16x32xf32> -> vector<16x32xf32>
    %48 = arith.addf %45, %47 : vector<16x32xf32>
    %cst_43 = arith.constant 1.000000e-01 : f32
    %49 = vector.broadcast %cst_43 : f32 to vector<16x32xf32>
    %50 = arith.mulf %49, %48 : vector<16x32xf32>
    %51 = arith.maximumf %48, %50 : vector<16x32xf32>
    %52 = arith.truncf %51 : vector<16x32xf32> to vector<16x32xbf16>
    %c0_44 = arith.constant 0 : index
    %c0_45 = arith.constant 0 : index
    %53 = vector.load %arg18[%c0_44, %c0_45] : memref<16x32xbf16, #tpu.memory_space<vmem>>, vector<16x32xbf16>
    tpu.vector_store %arg18[%c0_44, %c0_45], %52 {strides = array<i32>} : memref<16x32xbf16, #tpu.memory_space<vmem>>, vector<16x32xbf16>,
    return
  }
  func.func @transform_0(%arg0: i32) -> (i32, i32) {
    %c0_i32 = arith.constant 0 : i32
    %c0_i32_0 = arith.constant 0 : i32
    return %arg0, %c0_i32 : i32, i32
  }
  func.func @transform_1(%arg0: i32) -> (i32, i32) {
    %c0_i32 = arith.constant 0 : i32
    %c0_i32_0 = arith.constant 0 : i32
    return %arg0, %c0_i32 : i32, i32
  }
  func.func @transform_2(%arg0: i32) -> (i32, i32) {
    %c0_i32 = arith.constant 0 : i32
    %c0_i32_0 = arith.constant 0 : i32
    %c0_i32_1 = arith.constant 0 : i32
    return %c0_i32, %c0_i32_0 : i32, i32
  }
  func.func @transform_3(%arg0: i32) -> (i32, i32) {
    %c0_i32 = arith.constant 0 : i32
    %c0_i32_0 = arith.constant 0 : i32
    %c0_i32_1 = arith.constant 0 : i32
    return %c0_i32, %c0_i32_0 : i32, i32
  }
  func.func @transform_4(%arg0: i32) -> (i32, i32) {
    %c0_i32 = arith.constant 0 : i32
    %c0_i32_0 = arith.constant 0 : i32
    %c0_i32_1 = arith.constant 0 : i32
    return %c0_i32, %c0_i32_0 : i32, i32
  }
  func.func @transform_5(%arg0: i32) -> (i32, i32) {
    %c0_i32 = arith.constant 0 : i32
    %c0_i32_0 = arith.constant 0 : i32
    %c0_i32_1 = arith.constant 0 : i32
    return %c0_i32, %c0_i32_0 : i32, i32
  }
  func.func @transform_6(%arg0: i32) -> (i32, i32) {
    %c0_i32 = arith.constant 0 : i32
    %c0_i32_0 = arith.constant 0 : i32
    %c0_i32_1 = arith.constant 0 : i32
    return %c0_i32, %c0_i32_0 : i32, i32
  }
  func.func @transform_7(%arg0: i32) -> (i32, i32) {
    %c0_i32 = arith.constant 0 : i32
    %c0_i32_0 = arith.constant 0 : i32
    %c0_i32_1 = arith.constant 0 : i32
    return %c0_i32, %c0_i32_0 : i32, i32
  }
  func.func @transform_8(%arg0: i32) -> (i32, i32) {
    %c0_i32 = arith.constant 0 : i32
    %c0_i32_0 = arith.constant 0 : i32
    %c0_i32_1 = arith.constant 0 : i32
    return %c0_i32, %c0_i32_0 : i32, i32
  }
  func.func @transform_9(%arg0: i32) -> (i32, i32) {
    %c0_i32 = arith.constant 0 : i32
    %c0_i32_0 = arith.constant 0 : i32
    %c0_i32_1 = arith.constant 0 : i32
    return %c0_i32, %c0_i32_0 : i32, i32
  }
  func.func @transform_10(%arg0: i32) -> (i32, i32) {
    %c0_i32 = arith.constant 0 : i32
    %c0_i32_0 = arith.constant 0 : i32
    %c0_i32_1 = arith.constant 0 : i32
    return %c0_i32, %c0_i32_0 : i32, i32
  }
  func.func @transform_11(%arg0: i32) -> (i32, i32) {
    %c0_i32 = arith.constant 0 : i32
    %c0_i32_0 = arith.constant 0 : i32
    %c0_i32_1 = arith.constant 0 : i32
    return %c0_i32, %c0_i32_0 : i32, i32
  }
  func.func @transform_12(%arg0: i32) -> (i32, i32) {
    %c0_i32 = arith.constant 0 : i32
    %c0_i32_0 = arith.constant 0 : i32
    %c0_i32_1 = arith.constant 0 : i32
    return %c0_i32, %c0_i32_0 : i32, i32
  }
  func.func @transform_13(%arg0: i32) -> (i32, i32) {
    %c0_i32 = arith.constant 0 : i32
    %c0_i32_0 = arith.constant 0 : i32
    %c0_i32_1 = arith.constant 0 : i32
    return %c0_i32, %c0_i32_0 : i32, i32
  }
  func.func @transform_14(%arg0: i32) -> (i32, i32) {
    %c0_i32 = arith.constant 0 : i32
    %c0_i32_0 = arith.constant 0 : i32
    return %arg0, %c0_i32 : i32, i32
  }
  func.func @transform_15(%arg0: i32) -> (i32, i32) {
    %c0_i32 = arith.constant 0 : i32
    %c0_i32_0 = arith.constant 0 : i32
    return %arg0, %c0_i32 : i32, i32
  }
  func.func @transform_16(%arg0: i32) -> (i32, i32) {
    %c0_i32 = arith.constant 0 : i32
    %c0_i32_0 = arith.constant 0 : i32
    return %arg0, %c0_i32 : i32, i32
  }
  func.func @transform_17(%arg0: i32) -> (i32, i32) {
    %c0_i32 = arith.constant 0 : i32
    %c0_i32_0 = arith.constant 0 : i32
    return %arg0, %c0_i32 : i32, i32
  }
}

module attributes {stable_mosaic.version = 11 : i64} {
  func.func @_arc_kernel(%arg0: i32, %arg1: i32, %arg2: memref<1x8x64xbf16, #tpu.memory_space<vmem>>, %arg3: memref<1x8x64xbf16, #tpu.memory_space<vmem>>, %arg4: memref<64x64xbf16, #tpu.memory_space<vmem>>, %arg5: memref<1x64xf32, #tpu.memory_space<vmem>>, %arg6: memref<1x1x8xf32, #tpu.memory_space<vmem>>, %arg7: memref<1x8x8xf32, #tpu.memory_space<vmem>>) attributes {dimension_semantics = [#tpu.dimension_semantics<parallel>, #tpu.dimension_semantics<parallel>], iteration_bounds = array<i64: 2, 1>, scalar_prefetch = 0 : i64, scratch_operands = 0 : i64, tpu.core_type = #tpu.core_type<tc>, window_params = [{transform_indices = @transform_0, window_bounds = array<i64: 1, 8, 64>}, {transform_indices = @transform_1, window_bounds = array<i64: 1, 8, 64>}, {pipeline_mode = #tpu.pipeline_mode<synchronous>, transform_indices = @transform_2, window_bounds = array<i64: 64, 64>}, {pipeline_mode = #tpu.pipeline_mode<synchronous>, transform_indices = @transform_3, window_bounds = array<i64: 1, 64>}, {transform_indices = @transform_4, window_bounds = array<i64: 1, 1, 8>}, {transform_indices = @transform_5, window_bounds = array<i64: 1, 8, 8>}]} {
    %c0 = arith.constant 0 : index
    %c0_0 = arith.constant 0 : index
    %c0_1 = arith.constant 0 : index
    %0 = vector.load %arg2[%c0, %c0_0, %c0_1] : memref<1x8x64xbf16, #tpu.memory_space<vmem>>, vector<1x8x64xbf16>
    %1 = vector.shape_cast %0 : vector<1x8x64xbf16> to vector<8x64xbf16>
    %c0_2 = arith.constant 0 : index
    %c0_3 = arith.constant 0 : index
    %2 = vector.load %arg4[%c0_2, %c0_3] : memref<64x64xbf16, #tpu.memory_space<vmem>>, vector<64x64xbf16>
    %cst = arith.constant dense<0.000000e+00> : vector<8x64xf32>
    %3 = tpu.matmul %1, %2, %cst {dimension_numbers = #tpu.dot_dimension_numbers<[1], [0], [0], [1], [0, 0, 1, 1], [], []>} : vector<8x64xbf16>, vector<64x64xbf16>, vector<8x64xf32> -> vector<8x64xf32>
    %c0_4 = arith.constant 0 : index
    %c0_5 = arith.constant 0 : index
    %4 = vector.load %arg5[%c0_4, %c0_5] : memref<1x64xf32, #tpu.memory_space<vmem>>, vector<1x64xf32>
    %5 = vector.broadcast %4 : vector<1x64xf32> to vector<8x64xf32>
    %6 = arith.addf %3, %5 : vector<8x64xf32>
    %7 = arith.truncf %6 : vector<8x64xf32> to vector<8x64xbf16>
    %c0_6 = arith.constant 0 : index
    %c0_7 = arith.constant 0 : index
    %c0_8 = arith.constant 0 : index
    %8 = vector.load %arg3[%c0_6, %c0_7, %c0_8] : memref<1x8x64xbf16, #tpu.memory_space<vmem>>, vector<1x8x64xbf16>
    %9 = vector.shape_cast %8 : vector<1x8x64xbf16> to vector<8x64xbf16>
    %cst_9 = arith.constant dense<0.000000e+00> : vector<8x8xf32>
    %10 = tpu.matmul %7, %9, %cst_9 {dimension_numbers = #tpu.dot_dimension_numbers<[1], [1], [0], [0], [0, 0, 1, 0], [], []>} : vector<8x64xbf16>, vector<8x64xbf16>, vector<8x8xf32> -> vector<8x8xf32>
    %c0_10 = arith.constant 0 : index
    %c0_11 = arith.constant 0 : index
    %c0_12 = arith.constant 0 : index
    %11 = vector.load %arg6[%c0_10, %c0_11, %c0_12] : memref<1x1x8xf32, #tpu.memory_space<vmem>>, vector<1x1x8xf32>
    %12 = vector.shape_cast %11 : vector<1x1x8xf32> to vector<1x8xf32>
    %cst_13 = arith.constant 0.000000e+00 : f32
    %13 = vector.broadcast %cst_13 : f32 to vector<1x8xf32>
    %14 = arith.cmpf ogt, %12, %13 : vector<1x8xf32>
    %cst_14 = arith.constant 0xFF800000 : f32
    %15 = vector.shape_cast %14 : vector<1x8xi1> to vector<1x8xi1>
    %16 = vector.broadcast %15 : vector<1x8xi1> to vector<8x8xi1>
    %17 = vector.broadcast %cst_14 : f32 to vector<8x8xf32>
    %18 = arith.select %16, %10, %17 : vector<8x8xi1>, vector<8x8xf32>
    %c0_15 = arith.constant 0 : index
    %c0_16 = arith.constant 0 : index
    %c0_17 = arith.constant 0 : index
    %19 = vector.load %arg7[%c0_15, %c0_16, %c0_17] : memref<1x8x8xf32, #tpu.memory_space<vmem>>, vector<1x8x8xf32>
    %20 = vector.shape_cast %19 : vector<1x8x8xf32> to vector<8x8xf32>
    %21 = vector.shape_cast %18 : vector<8x8xf32> to vector<1x8x8xf32>
    tpu.vector_store %arg7[%c0_15, %c0_16, %c0_17], %21 {strides = array<i32>} : memref<1x8x8xf32, #tpu.memory_space<vmem>>, vector<1x8x8xf32>,
    return
  }
  func.func @transform_0(%arg0: i32, %arg1: i32) -> (i32, i32, i32) {
    %c0_i32 = arith.constant 0 : i32
    %c0_i32_0 = arith.constant 0 : i32
    return %arg0, %arg1, %c0_i32 : i32, i32, i32
  }
  func.func @transform_1(%arg0: i32, %arg1: i32) -> (i32, i32, i32) {
    %c0_i32 = arith.constant 0 : i32
    %c0_i32_0 = arith.constant 0 : i32
    %c0_i32_1 = arith.constant 0 : i32
    return %arg0, %c0_i32, %c0_i32_0 : i32, i32, i32
  }
  func.func @transform_2(%arg0: i32, %arg1: i32) -> (i32, i32) {
    %c0_i32 = arith.constant 0 : i32
    %c0_i32_0 = arith.constant 0 : i32
    %c0_i32_1 = arith.constant 0 : i32
    return %c0_i32, %c0_i32_0 : i32, i32
  }
  func.func @transform_3(%arg0: i32, %arg1: i32) -> (i32, i32) {
    %c0_i32 = arith.constant 0 : i32
    %c0_i32_0 = arith.constant 0 : i32
    %c0_i32_1 = arith.constant 0 : i32
    return %c0_i32, %c0_i32_0 : i32, i32
  }
  func.func @transform_4(%arg0: i32, %arg1: i32) -> (i32, i32, i32) {
    %c0_i32 = arith.constant 0 : i32
    %c0_i32_0 = arith.constant 0 : i32
    %c0_i32_1 = arith.constant 0 : i32
    return %arg0, %c0_i32, %c0_i32_0 : i32, i32, i32
  }
  func.func @transform_5(%arg0: i32, %arg1: i32) -> (i32, i32, i32) {
    %c0_i32 = arith.constant 0 : i32
    %c0_i32_0 = arith.constant 0 : i32
    return %arg0, %arg1, %c0_i32 : i32, i32, i32
  }
}

module attributes {stable_mosaic.version = 11 : i64} {
  func.func @_fused_linear_kernel(%arg0: i32, %arg1: memref<16x32xbf16, #tpu.memory_space<vmem>>, %arg2: memref<32x256xbf16, #tpu.memory_space<vmem>>, %arg3: memref<32x8xbf16, #tpu.memory_space<vmem>>, %arg4: memref<1x256xf32, #tpu.memory_space<vmem>>, %arg5: memref<1x8xf32, #tpu.memory_space<vmem>>, %arg6: memref<16x256xbf16, #tpu.memory_space<vmem>>, %arg7: memref<16x8xf32, #tpu.memory_space<vmem>>) attributes {dimension_semantics = [#tpu.dimension_semantics<parallel>], iteration_bounds = array<i64: 1>, scalar_prefetch = 0 : i64, scratch_operands = 0 : i64, tpu.core_type = #tpu.core_type<tc>, window_params = [{transform_indices = @transform_0, window_bounds = array<i64: 16, 32>}, {pipeline_mode = #tpu.pipeline_mode<synchronous>, transform_indices = @transform_1, window_bounds = array<i64: 32, 256>}, {pipeline_mode = #tpu.pipeline_mode<synchronous>, transform_indices = @transform_2, window_bounds = array<i64: 32, 8>}, {pipeline_mode = #tpu.pipeline_mode<synchronous>, transform_indices = @transform_3, window_bounds = array<i64: 1, 256>}, {pipeline_mode = #tpu.pipeline_mode<synchronous>, transform_indices = @transform_4, window_bounds = array<i64: 1, 8>}, {transform_indices = @transform_5, window_bounds = array<i64: 16, 256>}, {transform_indices = @transform_6, window_bounds = array<i64: 16, 8>}]} {
    %c0 = arith.constant 0 : index
    %c0_0 = arith.constant 0 : index
    %0 = vector.load %arg1[%c0, %c0_0] : memref<16x32xbf16, #tpu.memory_space<vmem>>, vector<16x32xbf16>
    %c0_1 = arith.constant 0 : index
    %c0_2 = arith.constant 0 : index
    %1 = vector.load %arg4[%c0_1, %c0_2] : memref<1x256xf32, #tpu.memory_space<vmem>>, vector<1x256xf32>
    %c0_3 = arith.constant 0 : index
    %c0_4 = arith.constant 0 : index
    %2 = vector.load %arg2[%c0_3, %c0_4] : memref<32x256xbf16, #tpu.memory_space<vmem>>, vector<32x256xbf16>
    %cst = arith.constant dense<0.000000e+00> : vector<16x256xf32>
    %3 = tpu.matmul %0, %2, %cst {dimension_numbers = #tpu.dot_dimension_numbers<[1], [0], [0], [1], [0, 0, 1, 1], [], []>} : vector<16x32xbf16>, vector<32x256xbf16>, vector<16x256xf32> -> vector<16x256xf32>
    %4 = vector.broadcast %1 : vector<1x256xf32> to vector<16x256xf32>
    %5 = arith.addf %4, %3 : vector<16x256xf32>
    %6 = arith.truncf %5 : vector<16x256xf32> to vector<16x256xbf16>
    %c0_5 = arith.constant 0 : index
    %c0_6 = arith.constant 0 : index
    %7 = vector.load %arg6[%c0_5, %c0_6] : memref<16x256xbf16, #tpu.memory_space<vmem>>, vector<16x256xbf16>
    tpu.vector_store %arg6[%c0_5, %c0_6], %6 {strides = array<i32>} : memref<16x256xbf16, #tpu.memory_space<vmem>>, vector<16x256xbf16>,
    %c0_7 = arith.constant 0 : index
    %c0_8 = arith.constant 0 : index
    %8 = vector.load %arg5[%c0_7, %c0_8] : memref<1x8xf32, #tpu.memory_space<vmem>>, vector<1x8xf32>
    %c0_9 = arith.constant 0 : index
    %c0_10 = arith.constant 0 : index
    %9 = vector.load %arg3[%c0_9, %c0_10] : memref<32x8xbf16, #tpu.memory_space<vmem>>, vector<32x8xbf16>
    %cst_11 = arith.constant dense<0.000000e+00> : vector<16x8xf32>
    %10 = tpu.matmul %0, %9, %cst_11 {dimension_numbers = #tpu.dot_dimension_numbers<[1], [0], [0], [1], [0, 0, 1, 1], [], []>} : vector<16x32xbf16>, vector<32x8xbf16>, vector<16x8xf32> -> vector<16x8xf32>
    %11 = vector.broadcast %8 : vector<1x8xf32> to vector<16x8xf32>
    %12 = arith.addf %11, %10 : vector<16x8xf32>
    %c0_12 = arith.constant 0 : index
    %c0_13 = arith.constant 0 : index
    %13 = vector.load %arg7[%c0_12, %c0_13] : memref<16x8xf32, #tpu.memory_space<vmem>>, vector<16x8xf32>
    tpu.vector_store %arg7[%c0_12, %c0_13], %12 {strides = array<i32>} : memref<16x8xf32, #tpu.memory_space<vmem>>, vector<16x8xf32>,
    return
  }
  func.func @transform_0(%arg0: i32) -> (i32, i32) {
    %c0_i32 = arith.constant 0 : i32
    %c0_i32_0 = arith.constant 0 : i32
    return %arg0, %c0_i32 : i32, i32
  }
  func.func @transform_1(%arg0: i32) -> (i32, i32) {
    %c0_i32 = arith.constant 0 : i32
    %c0_i32_0 = arith.constant 0 : i32
    %c0_i32_1 = arith.constant 0 : i32
    return %c0_i32, %c0_i32_0 : i32, i32
  }
  func.func @transform_2(%arg0: i32) -> (i32, i32) {
    %c0_i32 = arith.constant 0 : i32
    %c0_i32_0 = arith.constant 0 : i32
    %c0_i32_1 = arith.constant 0 : i32
    return %c0_i32, %c0_i32_0 : i32, i32
  }
  func.func @transform_3(%arg0: i32) -> (i32, i32) {
    %c0_i32 = arith.constant 0 : i32
    %c0_i32_0 = arith.constant 0 : i32
    %c0_i32_1 = arith.constant 0 : i32
    return %c0_i32, %c0_i32_0 : i32, i32
  }
  func.func @transform_4(%arg0: i32) -> (i32, i32) {
    %c0_i32 = arith.constant 0 : i32
    %c0_i32_0 = arith.constant 0 : i32
    %c0_i32_1 = arith.constant 0 : i32
    return %c0_i32, %c0_i32_0 : i32, i32
  }
  func.func @transform_5(%arg0: i32) -> (i32, i32) {
    %c0_i32 = arith.constant 0 : i32
    %c0_i32_0 = arith.constant 0 : i32
    return %arg0, %c0_i32 : i32, i32
  }
  func.func @transform_6(%arg0: i32) -> (i32, i32) {
    %c0_i32 = arith.constant 0 : i32
    %c0_i32_0 = arith.constant 0 : i32
    return %arg0, %c0_i32 : i32, i32
  }
}

module attributes {stable_mosaic.version = 11 : i64} {
  func.func @_rel_kernel(%arg0: i32, %arg1: i32, %arg2: memref<1x8x32xbf16, #tpu.memory_space<vmem>>, %arg3: memref<1x64x32xbf16, #tpu.memory_space<vmem>>, %arg4: memref<1x1x64xf32, #tpu.memory_space<vmem>>, %arg5: memref<1x8x64xf32, #tpu.memory_space<vmem>>) attributes {dimension_semantics = [#tpu.dimension_semantics<parallel>, #tpu.dimension_semantics<parallel>], iteration_bounds = array<i64: 2, 1>, scalar_prefetch = 0 : i64, scratch_operands = 0 : i64, tpu.core_type = #tpu.core_type<tc>, window_params = [{transform_indices = @transform_0, window_bounds = array<i64: 1, 8, 32>}, {transform_indices = @transform_1, window_bounds = array<i64: 1, 64, 32>}, {transform_indices = @transform_2, window_bounds = array<i64: 1, 1, 64>}, {transform_indices = @transform_3, window_bounds = array<i64: 1, 8, 64>}]} {
    %c0 = arith.constant 0 : index
    %c0_0 = arith.constant 0 : index
    %c0_1 = arith.constant 0 : index
    %0 = vector.load %arg2[%c0, %c0_0, %c0_1] : memref<1x8x32xbf16, #tpu.memory_space<vmem>>, vector<1x8x32xbf16>
    %1 = vector.shape_cast %0 : vector<1x8x32xbf16> to vector<8x32xbf16>
    %c0_2 = arith.constant 0 : index
    %c0_3 = arith.constant 0 : index
    %c0_4 = arith.constant 0 : index
    %2 = vector.load %arg3[%c0_2, %c0_3, %c0_4] : memref<1x64x32xbf16, #tpu.memory_space<vmem>>, vector<1x64x32xbf16>
    %3 = vector.shape_cast %2 : vector<1x64x32xbf16> to vector<64x32xbf16>
    %cst = arith.constant dense<0.000000e+00> : vector<8x64xf32>
    %4 = tpu.matmul %1, %3, %cst {dimension_numbers = #tpu.dot_dimension_numbers<[1], [1], [0], [0], [0, 0, 1, 0], [], []>} : vector<8x32xbf16>, vector<64x32xbf16>, vector<8x64xf32> -> vector<8x64xf32>
    %c0_5 = arith.constant 0 : index
    %c0_6 = arith.constant 0 : index
    %c0_7 = arith.constant 0 : index
    %5 = vector.load %arg4[%c0_5, %c0_6, %c0_7] : memref<1x1x64xf32, #tpu.memory_space<vmem>>, vector<1x1x64xf32>
    %6 = vector.shape_cast %5 : vector<1x1x64xf32> to vector<1x64xf32>
    %7 = vector.broadcast %6 : vector<1x64xf32> to vector<8x64xf32>
    %8 = arith.addf %4, %7 : vector<8x64xf32>
    %c0_8 = arith.constant 0 : index
    %c0_9 = arith.constant 0 : index
    %c0_10 = arith.constant 0 : index
    %9 = vector.load %arg5[%c0_8, %c0_9, %c0_10] : memref<1x8x64xf32, #tpu.memory_space<vmem>>, vector<1x8x64xf32>
    %10 = vector.shape_cast %9 : vector<1x8x64xf32> to vector<8x64xf32>
    %11 = vector.shape_cast %8 : vector<8x64xf32> to vector<1x8x64xf32>
    tpu.vector_store %arg5[%c0_8, %c0_9, %c0_10], %11 {strides = array<i32>} : memref<1x8x64xf32, #tpu.memory_space<vmem>>, vector<1x8x64xf32>,
    return
  }
  func.func @transform_0(%arg0: i32, %arg1: i32) -> (i32, i32, i32) {
    %c0_i32 = arith.constant 0 : i32
    %c0_i32_0 = arith.constant 0 : i32
    return %arg0, %arg1, %c0_i32 : i32, i32, i32
  }
  func.func @transform_1(%arg0: i32, %arg1: i32) -> (i32, i32, i32) {
    %c0_i32 = arith.constant 0 : i32
    %c0_i32_0 = arith.constant 0 : i32
    %c0_i32_1 = arith.constant 0 : i32
    return %arg0, %c0_i32, %c0_i32_0 : i32, i32, i32
  }
  func.func @transform_2(%arg0: i32, %arg1: i32) -> (i32, i32, i32) {
    %c0_i32 = arith.constant 0 : i32
    %c0_i32_0 = arith.constant 0 : i32
    %c0_i32_1 = arith.constant 0 : i32
    return %arg0, %c0_i32, %c0_i32_0 : i32, i32, i32
  }
  func.func @transform_3(%arg0: i32, %arg1: i32) -> (i32, i32, i32) {
    %c0_i32 = arith.constant 0 : i32
    %c0_i32_0 = arith.constant 0 : i32
    return %arg0, %arg1, %c0_i32 : i32, i32, i32
  }
}

</mosaic_0001>

<llo_original>
// kernel: _lambda_.10
$region0: #{_lambda_.10}
  #allocation0 [shape = 'u32[]', space=smem, size = 0x4, offset = 0x4, fixed_abs, tag = 'smem constant byte address 0x4 - core index']
  #allocation1 [shape = 'u32[144,128]{1,0:T(1,128)}', space=vmem, size = 0x12000, scoped, tag = 'internal scratch']
  %s0 = inlined_call_operand.hbm [shape: bf16[16,32], index: 0, kind: input, shape index: {}]
  %s1 = inlined_call_operand.hbm [shape: bf16[32,128], index: 1, kind: input, shape index: {}]
  %s2 = inlined_call_operand.hbm [shape: bf16[32,128], index: 2, kind: input, shape index: {}]
  %s3 = inlined_call_operand.hbm [shape: f32[1,128], index: 3, kind: input, shape index: {}]
  %s4 = inlined_call_operand.hbm [shape: f32[1,128], index: 4, kind: input, shape index: {}]
  %s5 = inlined_call_operand.hbm [shape: f32[16,128], index: 5, kind: output, shape index: {0}]
  %s6 = inlined_call_operand.hbm [shape: f32[16,128], index: 6, kind: output, shape index: {1}]
  %7 = xla_tuple %s5, %s6
  %s8 = sld [smem:[#allocation0]]
  $region58: #{_lambda_.10} parent=0
    _
  %s10 = ssub.s32 1, %s8
  %s11 = scalar_select 0, %s10, %s8
  $region1: #{_lambda_.10} parent=0
    #allocation2 [shape = 'u8[4096]{0}', space=vmem, size = 0x1000, scoped, tag = 'input window, operand 0, single buffered']
    #allocation3 [shape = 's32[1]{0}', space=sflag, size = 0x4, scoped, tag = 'scoped memory for _lambda_.10']
    #allocation4 [shape = 's32[1]{0}', space=sflag, size = 0x4, scoped, tag = 'scoped memory for _lambda_.10']
    #allocation5 [shape = 'u8[8192]{0}', space=vmem, size = 0x2000, scoped, tag = 'input window, operand 1, single buffered']
    #allocation6 [shape = 's32[1]{0}', space=sflag, size = 0x4, scoped, tag = 'scoped memory for _lambda_.10']
    #allocation7 [shape = 'u8[8192]{0}', space=vmem, size = 0x2000, scoped, tag = 'input window, operand 2, single buffered']
    #allocation8 [shape = 'u8[512]{0}', space=vmem, size = 0x400, scoped, tag = 'input window, operand 3, single buffered']
    #allocation9 [shape = 's32[1]{0}', space=sflag, size = 0x4, scoped, tag = 'scoped memory for _lambda_.10']
    #allocation10 [shape = 'u8[512]{0}', space=vmem, size = 0x400, scoped, tag = 'input window, operand 4, single buffered']
    #allocation11 [shape = 'u8[8192]{0}', space=vmem, size = 0x2000, scoped, tag = 'output window, operand 0, single buffered']
    #allocation12 [shape = 'u8[8192]{0}', space=vmem, size = 0x2000, scoped, tag = 'output window, operand 1, single buffered']
    #allocation13 [shape = 's32[1]{0}', space=sflag, size = 0x4, scoped, tag = 'scoped memory for _lambda_.10']
    %12 = vsyncpa [#allocation3], 0
    %13 = vsyncpa [#allocation6], 0
    %14 = vsyncpa [#allocation9], 0
    %15 = vsyncpa [#allocation4], 0
    %16 = vsyncpa [#allocation13], 0
    // Predicated region
    $region2: #{_lambda_.10} parent=1 // pred_check
      _
    $region3: #{_lambda_.10} parent=1 // pred_check_branch
      %18 = sbr.rel (0) target = $region5
    $region4: #{_lambda_.10} parent=1 // pred_region
      %s20 = ssub.s32 128, 128
      %21 = vsyncadd [#allocation3], %s20
      %s22 = sshll.u32 [#allocation2], 4
      %s23 = int_to_ptr.vmem [resolvable:$true] %s22
      %28 = dma.hbm_to_vmem [thread:$0]  %s0, 128, %s23, [#allocation3], 64, 64, 4
    $region5: #{_lambda_.10} parent=1 // pred_fallthru
      _
    // Predicated region
    $region6: #{_lambda_.10} parent=1 // pred_check
      _
    $region7: #{_lambda_.10} parent=1 // pred_check_branch
      %30 = sbr.rel (0) target = $region9
    $region8: #{_lambda_.10} parent=1 // pred_region
      %s32 = ssub.s32 256, 256
      %33 = vsyncadd [#allocation6], %s32
      %s34 = sshll.u32 [#allocation5], 4
      %s35 = int_to_ptr.vmem [resolvable:$true] %s34
      %40 = dma.hbm_to_vmem [thread:$0]  %s1, 256, %s35, [#allocation6], 64, 64, 4
    $region9: #{_lambda_.10} parent=1 // pred_fallthru
      _
    // Predicated region
    $region10: #{_lambda_.10} parent=1 // pred_check
      _
    $region11: #{_lambda_.10} parent=1 // pred_check_branch
      %42 = sbr.rel (0) target = $region13
    $region12: #{_lambda_.10} parent=1 // pred_region
      %s44 = ssub.s32 256, 256
      %45 = vsyncadd [#allocation6], %s44
      %s46 = sshll.u32 [#allocation7], 4
      %s47 = int_to_ptr.vmem [resolvable:$true] %s46
      %52 = dma.hbm_to_vmem [thread:$0]  %s2, 256, %s47, [#allocation6], 64, 64, 4
    $region13: #{_lambda_.10} parent=1 // pred_fallthru
      _
    // Predicated region
    $region14: #{_lambda_.10} parent=1 // pred_check
      _
    $region15: #{_lambda_.10} parent=1 // pred_check_branch
      %54 = sbr.rel (0) target = $region17
    $region16: #{_lambda_.10} parent=1 // pred_region
      %s56 = ssub.s32 16, 16
      %57 = vsyncadd [#allocation9], %s56
      %s59 = sshll.u32 [#allocation8], 4
      %s60 = int_to_ptr.vmem [resolvable:$true] %s59
      %62 = dma.hbm_to_vmem [thread:$0]  %s3, 16, %s60, [#allocation9]
    $region17: #{_lambda_.10} parent=1 // pred_fallthru
      _
    // Predicated region
    $region18: #{_lambda_.10} parent=1 // pred_check
      _
    $region19: #{_lambda_.10} parent=1 // pred_check_branch
      %64 = sbr.rel (0) target = $region21
    $region20: #{_lambda_.10} parent=1 // pred_region
      %s66 = ssub.s32 16, 16
      %67 = vsyncadd [#allocation9], %s66
      %s69 = sshll.u32 [#allocation10], 4
      %s70 = int_to_ptr.vmem [resolvable:$true] %s69
      %72 = dma.hbm_to_vmem [thread:$0]  %s4, 16, %s70, [#allocation9]
    $region21: #{_lambda_.10} parent=1 // pred_fallthru
      _
    // Predicated region
    $region22: #{_lambda_.10} parent=1 // pred_check
      _
    $region23: #{_lambda_.10} parent=1 // pred_check_branch
      %74 = sbr.rel (0) target = $region25
    $region24: #{_lambda_.10} parent=1 // pred_region
      %75 = dma.done [#allocation3], 128
    $region25: #{_lambda_.10} parent=1 // pred_fallthru
      _
    // Predicated region
    $region26: #{_lambda_.10} parent=1 // pred_check
      _
    $region27: #{_lambda_.10} parent=1 // pred_check_branch
      %77 = sbr.rel (0) target = $region29
    $region28: #{_lambda_.10} parent=1 // pred_region
      %78 = dma.done [#allocation6], 256
    $region29: #{_lambda_.10} parent=1 // pred_fallthru
      _
    // Predicated region
    $region30: #{_lambda_.10} parent=1 // pred_check
      _
    $region31: #{_lambda_.10} parent=1 // pred_check_branch
      %80 = sbr.rel (0) target = $region33
    $region32: #{_lambda_.10} parent=1 // pred_region
      %81 = dma.done [#allocation6], 256
    $region33: #{_lambda_.10} parent=1 // pred_fallthru
      _
    // Predicated region
    $region34: #{_lambda_.10} parent=1 // pred_check
      _
    $region35: #{_lambda_.10} parent=1 // pred_check_branch
      %83 = sbr.rel (0) target = $region37
    $region36: #{_lambda_.10} parent=1 // pred_region
      %84 = dma.done [#allocation9], 16
    $region37: #{_lambda_.10} parent=1 // pred_fallthru
      _
    // Predicated region
    $region38: #{_lambda_.10} parent=1 // pred_check
      _
    $region39: #{_lambda_.10} parent=1 // pred_check_branch
      %86 = sbr.rel (0) target = $region41
    $region40: #{_lambda_.10} parent=1 // pred_region
      %87 = dma.done [#allocation9], 16
    $region41: #{_lambda_.10} parent=1 // pred_fallthru
      _
    %v89 = vld [vmem:[#allocation2] sm:$0xf]
    %v90 = vld [vmem:[#allocation2 + $0x4] sm:$0xf]
    %v91 = vld [vmem:[#allocation8] sm:$0x1]
    %v92 = vld [vmem:[#allocation5] sm:$0xf]
    %v93 = vld [vmem:[#allocation5 + $0x4] sm:$0xf]
    %v94 = vld [vmem:[#allocation5 + $0x8] sm:$0xf]
    %v95 = vld [vmem:[#allocation5 + $0xc] sm:$0xf]
    %v98 = vunpack.c.l.b16 %v89
    %v99 = vunpack.c.l.b16 %v90
    %v100 = vpack.c.b16 %v99, %v98
    %v105 = vunpack.c.l.b16 %v92
    %v106 = vunpack.c.l.b16 %v93
    %v107 = vunpack.c.l.b16 %v94
    %v108 = vunpack.c.l.b16 %v95
    %v109 = vpack.c.b16 %v106, %v105
    %v110 = vpack.c.b16 %v108, %v107
    %vm113 = vcmask 261120
    %v115 = vsel %vm113, %v100, 0
    %117 = vmatprep.subr.bf16.mxu0 0
    %118 = vmatpush1.bf16.msra.mxu0 %v109
    %119 = vmatprep.subr.bf16.mxu0 0
    %120 = vmatpush1.bf16.msra.mxu0 %v110
    %121 = vmatprep.subr.bf16.mxu0 0
    %122 = vmatpush1.bf16.msra.mxu0 0
    %123 = vmatprep.subr.bf16.mxu0 0
    %124 = vmatpush1.bf16.msra.mxu0 0
    %125 = vmatprep.subr.bf16.mxu0 0
    %126 = vmatpush1.bf16.msra.mxu0 0
    %127 = vmatprep.subr.bf16.mxu0 0
    %128 = vmatpush1.bf16.msra.mxu0 0
    %129 = vmatprep.subr.bf16.mxu0 0
    %130 = vmatpush1.bf16.msra.mxu0 0
    %131 = vmatprep.subr.bf16.mxu0 0
    %132 = vmatpush1.bf16.msra.mxu0 0
    %133 = vmatprep.subr.bf16.mxu0 0
    %134 = vmatpush1.bf16.msra.mxu0 0
    %135 = vmatprep.subr.bf16.mxu0 0
    %136 = vmatpush1.bf16.msra.mxu0 0
    %137 = vmatprep.subr.bf16.mxu0 0
    %138 = vmatpush1.bf16.msra.mxu0 0
    %139 = vmatprep.subr.bf16.mxu0 0
    %140 = vmatpush1.bf16.msra.mxu0 0
    %141 = vmatprep.subr.bf16.mxu0 0
    %142 = vmatpush1.bf16.msra.mxu0 0
    %143 = vmatprep.subr.bf16.mxu0 0
    %144 = vmatpush1.bf16.msra.mxu0 0
    %145 = vmatprep.subr.bf16.mxu0 0
    %146 = vmatpush1.bf16.msra.mxu0 0
    %147 = vmatprep.subr.bf16.mxu0 0
    %148 = vmatpush1.bf16.msra.mxu0 0
    %149 = vmatprep.mubr.bf16.mxu0 0
    %150 = vmatmul.mubr.bf16.gmra.mrb[0].mxu0 %v115
    %v151 = vpop.f32.mrb[0].mxu0
    %v152 = vadd.f32 0.0, %v151
    %v153 = vpop.f32.mrb[0].mxu0
    %v154 = vpop.f32.mrb[0].mxu0
    %v155 = vadd.f32 0.0, %v154
    %v156 = vpop.f32.mrb[0].mxu0
    %157 = vdwg.mxu0
    %v159 = vlaneseq
    %v160 = vshrl.u32 %v159, 7
    %v161 = vsub.s32 0, %v160
    %v162 = vrot.slane %v91, %v161
    %v164 = vadd.f32 %v162, %v152
    %v165 = vadd.f32 %v162, %v155
    %166 = vst [vmem:[#allocation11] sm:$0xff] %v164
    %167 = vst [vmem:[#allocation11 + $0x8] sm:$0xff] %v165
    %v168 = vld [vmem:[#allocation10] sm:$0x1]
    %v169 = vld [vmem:[#allocation7] sm:$0xf]
    %v170 = vld [vmem:[#allocation7 + $0x4] sm:$0xf]
    %v171 = vld [vmem:[#allocation7 + $0x8] sm:$0xf]
    %v172 = vld [vmem:[#allocation7 + $0xc] sm:$0xf]
    %v177 = vunpack.c.l.b16 %v169
    %v178 = vunpack.c.l.b16 %v170
    %v179 = vunpack.c.l.b16 %v171
    %v180 = vunpack.c.l.b16 %v172
    %v181 = vpack.c.b16 %v178, %v177
    %v182 = vpack.c.b16 %v180, %v179
    %185 = vmatprep.subr.bf16.mxu0 0
    %186 = vmatpush1.bf16.msra.mxu0 %v181
    %187 = vmatprep.subr.bf16.mxu0 0
    %188 = vmatpush1.bf16.msra.mxu0 %v182
    %189 = vmatprep.subr.bf16.mxu0 0
    %190 = vmatpush1.bf16.msra.mxu0 0
    %191 = vmatprep.subr.bf16.mxu0 0
    %192 = vmatpush1.bf16.msra.mxu0 0
    %193 = vmatprep.subr.bf16.mxu0 0
    %194 = vmatpush1.bf16.msra.mxu0 0
    %195 = vmatprep.subr.bf16.mxu0 0
    %196 = vmatpush1.bf16.msra.mxu0 0
    %197 = vmatprep.subr.bf16.mxu0 0
    %198 = vmatpush1.bf16.msra.mxu0 0
    %199 = vmatprep.subr.bf16.mxu0 0
    %200 = vmatpush1.bf16.msra.mxu0 0
    %201 = vmatprep.subr.bf16.mxu0 0
    %202 = vmatpush1.bf16.msra.mxu0 0
    %203 = vmatprep.subr.bf16.mxu0 0
    %204 = vmatpush1.bf16.msra.mxu0 0
    %205 = vmatprep.subr.bf16.mxu0 0
    %206 = vmatpush1.bf16.msra.mxu0 0
    %207 = vmatprep.subr.bf16.mxu0 0
    %208 = vmatpush1.bf16.msra.mxu0 0
    %209 = vmatprep.subr.bf16.mxu0 0
    %210 = vmatpush1.bf16.msra.mxu0 0
    %211 = vmatprep.subr.bf16.mxu0 0
    %212 = vmatpush1.bf16.msra.mxu0 0
    %213 = vmatprep.subr.bf16.mxu0 0
    %214 = vmatpush1.bf16.msra.mxu0 0
    %215 = vmatprep.subr.bf16.mxu0 0
    %216 = vmatpush1.bf16.msra.mxu0 0
    %217 = vmatprep.mubr.bf16.mxu0 0
    %218 = vmatmul.mubr.bf16.gmra.mrb[0].mxu0 %v115
    %v219 = vpop.f32.mrb[0].mxu0
    %v220 = vadd.f32 0.0, %v219
    %v221 = vpop.f32.mrb[0].mxu0
    %v222 = vpop.f32.mrb[0].mxu0
    %v223 = vadd.f32 0.0, %v222
    %v224 = vpop.f32.mrb[0].mxu0
    %225 = vdwg.mxu0
    %v227 = vlaneseq
    %v228 = vshrl.u32 %v227, 7
    %v229 = vsub.s32 0, %v228
    %v230 = vrot.slane %v168, %v229
    %v232 = vadd.f32 %v230, %v220
    %v233 = vadd.f32 %v230, %v223
    %234 = vst [vmem:[#allocation12] sm:$0xff] %v232
    %235 = vst [vmem:[#allocation12 + $0x8] sm:$0xff] %v233
    // Predicated region
    $region42: #{_lambda_.10} parent=1 // pred_check
      _
    $region43: #{_lambda_.10} parent=1 // pred_check_branch
      %237 = sbr.rel (0) target = $region45
    $region44: #{_lambda_.10} parent=1 // pred_region
      %s239 = ssub.s32 256, 256
      %240 = vsyncadd [#allocation4], %s239
      %s241 = sshll.u32 [#allocation11], 4
      %s242 = int_to_ptr.vmem [resolvable:$true] %s241
      %247 = dma.vmem_to_hbm [thread:$0]  %s242, 256, %s5, [#allocation4], 128, 128, 8
    $region45: #{_lambda_.10} parent=1 // pred_fallthru
      _
    // Predicated region
    $region46: #{_lambda_.10} parent=1 // pred_check
      _
    $region47: #{_lambda_.10} parent=1 // pred_check_branch
      %249 = sbr.rel (0) target = $region49
    $region48: #{_lambda_.10} parent=1 // pred_region
      %s251 = ssub.s32 256, 256
      %252 = vsyncadd [#allocation13], %s251
      %s253 = sshll.u32 [#allocation12], 4
      %s254 = int_to_ptr.vmem [resolvable:$true] %s253
      %259 = dma.vmem_to_hbm [thread:$0]  %s254, 256, %s6, [#allocation13], 128, 128, 8
    $region49: #{_lambda_.10} parent=1 // pred_fallthru
      _
    // Predicated region
    $region50: #{_lambda_.10} parent=1 // pred_check
      _
    $region51: #{_lambda_.10} parent=1 // pred_check_branch
      %261 = sbr.rel (0) target = $region53
    $region52: #{_lambda_.10} parent=1 // pred_region
      %262 = dma.done [#allocation4], 256
    $region53: #{_lambda_.10} parent=1 // pred_fallthru
      _
    // Predicated region
    $region54: #{_lambda_.10} parent=1 // pred_check
      _
    $region55: #{_lambda_.10} parent=1 // pred_check_branch
      %264 = sbr.rel (0) target = $region57
    $region56: #{_lambda_.10} parent=1 // pred_region
      %265 = dma.done [#allocation13], 256
    $region57: #{_lambda_.10} parent=1 // pred_fallthru
      _
    %266 = vsyncpa [#allocation3], 1
    %267 = vsyncpa [#allocation6], 1
    %268 = vsyncpa [#allocation9], 1
    %269 = vsyncpa [#allocation4], 1
    %270 = vsyncpa [#allocation13], 1

// kernel: _lambda_.12
$region0: #{_lambda_.12}
  #allocation0 [shape = 'u32[]', space=smem, size = 0x4, offset = 0x4, fixed_abs, tag = 'smem constant byte address 0x4 - core index']
  #allocation1 [shape = 'u32[144,128]{1,0:T(1,128)}', space=vmem, size = 0x12000, scoped, tag = 'internal scratch']
  %s0 = inlined_call_operand.hbm [shape: bf16[16,32], index: 0, kind: input, shape index: {}]
  %s1 = inlined_call_operand.hbm [shape: bf16[16,32], index: 1, kind: input, shape index: {}]
  %s2 = inlined_call_operand.hbm [shape: bf16[32,128], index: 2, kind: input, shape index: {}]
  %s3 = inlined_call_operand.hbm [shape: bf16[32,128], index: 3, kind: input, shape index: {}]
  %s4 = inlined_call_operand.hbm [shape: bf16[32,128], index: 4, kind: input, shape index: {}]
  %s5 = inlined_call_operand.hbm [shape: bf16[32,128], index: 5, kind: input, shape index: {}]
  %s6 = inlined_call_operand.hbm [shape: f32[1,128], index: 6, kind: input, shape index: {}]
  %s7 = inlined_call_operand.hbm [shape: f32[1,128], index: 7, kind: input, shape index: {}]
  %s8 = inlined_call_operand.hbm [shape: f32[16,128], index: 8, kind: output, shape index: {0}]
  %s9 = inlined_call_operand.hbm [shape: f32[16,128], index: 9, kind: output, shape index: {1}]
  %10 = xla_tuple %s8, %s9
  %s11 = sld [smem:[#allocation0]]
  $region82: #{_lambda_.12} parent=0
    _
  %s13 = ssub.s32 1, %s11
  %s14 = scalar_select 0, %s13, %s11
  $region1: #{_lambda_.12} parent=0
    #allocation2 [shape = 'u8[4096]{0}', space=vmem, size = 0x1000, scoped, tag = 'input window, operand 0, single buffered']
    #allocation3 [shape = 's32[1]{0}', space=sflag, size = 0x4, scoped, tag = 'scoped memory for _lambda_.12']
    #allocation4 [shape = 's32[1]{0}', space=sflag, size = 0x4, scoped, tag = 'scoped memory for _lambda_.12']
    #allocation5 [shape = 'u8[4096]{0}', space=vmem, size = 0x1000, scoped, tag = 'input window, operand 1, single buffered']
    #allocation6 [shape = 's32[1]{0}', space=sflag, size = 0x4, scoped, tag = 'scoped memory for _lambda_.12']
    #allocation7 [shape = 'u8[8192]{0}', space=vmem, size = 0x2000, scoped, tag = 'input window, operand 2, single buffered']
    #allocation8 [shape = 'u8[8192]{0}', space=vmem, size = 0x2000, scoped, tag = 'input window, operand 3, single buffered']
    #allocation9 [shape = 's32[1]{0}', space=sflag, size = 0x4, scoped, tag = 'scoped memory for _lambda_.12']
    #allocation10 [shape = 'u8[8192]{0}', space=vmem, size = 0x2000, scoped, tag = 'input window, operand 4, single buffered']
    #allocation11 [shape = 'u8[8192]{0}', space=vmem, size = 0x2000, scoped, tag = 'input window, operand 5, single buffered']
    #allocation12 [shape = 's32[1]{0}', space=sflag, size = 0x4, scoped, tag = 'scoped memory for _lambda_.12']
    #allocation13 [shape = 'u8[512]{0}', space=vmem, size = 0x400, scoped, tag = 'input window, operand 6, single buffered']
    #allocation14 [shape = 'u8[512]{0}', space=vmem, size = 0x400, scoped, tag = 'input window, operand 7, single buffered']
    #allocation15 [shape = 's32[1]{0}', space=sflag, size = 0x4, scoped, tag = 'scoped memory for _lambda_.12']
    #allocation16 [shape = 'u8[8192]{0}', space=vmem, size = 0x2000, scoped, tag = 'output window, operand 0, single buffered']
    #allocation17 [shape = 'u8[8192]{0}', space=vmem, size = 0x2000, scoped, tag = 'output window, operand 1, single buffered']
    #allocation18 [shape = 's32[1]{0}', space=sflag, size = 0x4, scoped, tag = 'scoped memory for _lambda_.12']
    %15 = vsyncpa [#allocation3], 0
    %16 = vsyncpa [#allocation6], 0
    %17 = vsyncpa [#allocation9], 0
    %18 = vsyncpa [#allocation12], 0
    %19 = vsyncpa [#allocation15], 0
    %20 = vsyncpa [#allocation4], 0
    %21 = vsyncpa [#allocation18], 0
    // Predicated region
    $region2: #{_lambda_.12} parent=1 // pred_check
      _
    $region3: #{_lambda_.12} parent=1 // pred_check_branch
      %23 = sbr.rel (0) target = $region5
    $region4: #{_lambda_.12} parent=1 // pred_region
      %s25 = ssub.s32 128, 128
      %26 = vsyncadd [#allocation3], %s25
      %s27 = sshll.u32 [#allocation2], 4
      %s28 = int_to_ptr.vmem [resolvable:$true] %s27
      %33 = dma.hbm_to_vmem [thread:$0]  %s0, 128, %s28, [#allocation3], 64, 64, 4
    $region5: #{_lambda_.12} parent=1 // pred_fallthru
      _
    // Predicated region
    $region6: #{_lambda_.12} parent=1 // pred_check
      _
    $region7: #{_lambda_.12} parent=1 // pred_check_branch
      %35 = sbr.rel (0) target = $region9
    $region8: #{_lambda_.12} parent=1 // pred_region
      %s37 = ssub.s32 128, 128
      %38 = vsyncadd [#allocation6], %s37
      %s39 = sshll.u32 [#allocation5], 4
      %s40 = int_to_ptr.vmem [resolvable:$true] %s39
      %45 = dma.hbm_to_vmem [thread:$0]  %s1, 128, %s40, [#allocation6], 64, 64, 4
    $region9: #{_lambda_.12} parent=1 // pred_fallthru
      _
    // Predicated region
    $region10: #{_lambda_.12} parent=1 // pred_check
      _
    $region11: #{_lambda_.12} parent=1 // pred_check_branch
      %47 = sbr.rel (0) target = $region13
    $region12: #{_lambda_.12} parent=1 // pred_region
      %s49 = ssub.s32 256, 256
      %50 = vsyncadd [#allocation6], %s49
      %s51 = sshll.u32 [#allocation7], 4
      %s52 = int_to_ptr.vmem [resolvable:$true] %s51
      %57 = dma.hbm_to_vmem [thread:$0]  %s2, 256, %s52, [#allocation6], 64, 64, 4
    $region13: #{_lambda_.12} parent=1 // pred_fallthru
      _
    // Predicated region
    $region14: #{_lambda_.12} parent=1 // pred_check
      _
    $region15: #{_lambda_.12} parent=1 // pred_check_branch
      %59 = sbr.rel (0) target = $region17
    $region16: #{_lambda_.12} parent=1 // pred_region
      %s61 = ssub.s32 256, 256
      %62 = vsyncadd [#allocation9], %s61
      %s63 = sshll.u32 [#allocation8], 4
      %s64 = int_to_ptr.vmem [resolvable:$true] %s63
      %69 = dma.hbm_to_vmem [thread:$0]  %s3, 256, %s64, [#allocation9], 64, 64, 4
    $region17: #{_lambda_.12} parent=1 // pred_fallthru
      _
    // Predicated region
    $region18: #{_lambda_.12} parent=1 // pred_check
      _
    $region19: #{_lambda_.12} parent=1 // pred_check_branch
      %71 = sbr.rel (0) target = $region21
    $region20: #{_lambda_.12} parent=1 // pred_region
      %s73 = ssub.s32 256, 256
      %74 = vsyncadd [#allocation9], %s73
      %s75 = sshll.u32 [#allocation10], 4
      %s76 = int_to_ptr.vmem [resolvable:$true] %s75
      %81 = dma.hbm_to_vmem [thread:$0]  %s4, 256, %s76, [#allocation9], 64, 64, 4
    $region21: #{_lambda_.12} parent=1 // pred_fallthru
      _
    // Predicated region
    $region22: #{_lambda_.12} parent=1 // pred_check
      _
    $region23: #{_lambda_.12} parent=1 // pred_check_branch
      %83 = sbr.rel (0) target = $region25
    $region24: #{_lambda_.12} parent=1 // pred_region
      %s85 = ssub.s32 256, 256
      %86 = vsyncadd [#allocation12], %s85
      %s87 = sshll.u32 [#allocation11], 4
      %s88 = int_to_ptr.vmem [resolvable:$true] %s87
      %93 = dma.hbm_to_vmem [thread:$0]  %s5, 256, %s88, [#allocation12], 64, 64, 4
    $region25: #{_lambda_.12} parent=1 // pred_fallthru
      _
    // Predicated region
    $region26: #{_lambda_.12} parent=1 // pred_check
      _
    $region27: #{_lambda_.12} parent=1 // pred_check_branch
      %95 = sbr.rel (0) target = $region29
    $region28: #{_lambda_.12} parent=1 // pred_region
      %s97 = ssub.s32 16, 16
      %98 = vsyncadd [#allocation12], %s97
      %s100 = sshll.u32 [#allocation13], 4
      %s101 = int_to_ptr.vmem [resolvable:$true] %s100
      %103 = dma.hbm_to_vmem [thread:$0]  %s6, 16, %s101, [#allocation12]
    $region29: #{_lambda_.12} parent=1 // pred_fallthru
      _
    // Predicated region
    $region30: #{_lambda_.12} parent=1 // pred_check
      _
    $region31: #{_lambda_.12} parent=1 // pred_check_branch
      %105 = sbr.rel (0) target = $region33
    $region32: #{_lambda_.12} parent=1 // pred_region
      %s107 = ssub.s32 16, 16
      %108 = vsyncadd [#allocation15], %s107
      %s110 = sshll.u32 [#allocation14], 4
      %s111 = int_to_ptr.vmem [resolvable:$true] %s110
      %113 = dma.hbm_to_vmem [thread:$0]  %s7, 16, %s111, [#allocation15]
    $region33: #{_lambda_.12} parent=1 // pred_fallthru
      _
    // Predicated region
    $region34: #{_lambda_.12} parent=1 // pred_check
      _
    $region35: #{_lambda_.12} parent=1 // pred_check_branch
      %115 = sbr.rel (0) target = $region37
    $region36: #{_lambda_.12} parent=1 // pred_region
      %116 = dma.done [#allocation3], 128
    $region37: #{_lambda_.12} parent=1 // pred_fallthru
      _
    // Predicated region
    $region38: #{_lambda_.12} parent=1 // pred_check
      _
    $region39: #{_lambda_.12} parent=1 // pred_check_branch
      %118 = sbr.rel (0) target = $region41
    $region40: #{_lambda_.12} parent=1 // pred_region
      %119 = dma.done [#allocation6], 128
    $region41: #{_lambda_.12} parent=1 // pred_fallthru
      _
    // Predicated region
    $region42: #{_lambda_.12} parent=1 // pred_check
      _
    $region43: #{_lambda_.12} parent=1 // pred_check_branch
      %121 = sbr.rel (0) target = $region45
    $region44: #{_lambda_.12} parent=1 // pred_region
      %122 = dma.done [#allocation6], 256
    $region45: #{_lambda_.12} parent=1 // pred_fallthru
      _
    // Predicated region
    $region46: #{_lambda_.12} parent=1 // pred_check
      _
    $region47: #{_lambda_.12} parent=1 // pred_check_branch
      %124 = sbr.rel (0) target = $region49
    $region48: #{_lambda_.12} parent=1 // pred_region
      %125 = dma.done [#allocation9], 256
    $region49: #{_lambda_.12} parent=1 // pred_fallthru
      _
    // Predicated region
    $region50: #{_lambda_.12} parent=1 // pred_check
      _
    $region51: #{_lambda_.12} parent=1 // pred_check_branch
      %127 = sbr.rel (0) target = $region53
    $region52: #{_lambda_.12} parent=1 // pred_region
      %128 = dma.done [#allocation9], 256
    $region53: #{_lambda_.12} parent=1 // pred_fallthru
      _
    // Predicated region
    $region54: #{_lambda_.12} parent=1 // pred_check
      _
    $region55: #{_lambda_.12} parent=1 // pred_check_branch
      %130 = sbr.rel (0) target = $region57
    $region56: #{_lambda_.12} parent=1 // pred_region
      %131 = dma.done [#allocation12], 256
    $region57: #{_lambda_.12} parent=1 // pred_fallthru
      _
    // Predicated region
    $region58: #{_lambda_.12} parent=1 // pred_check
      _
    $region59: #{_lambda_.12} parent=1 // pred_check_branch
      %133 = sbr.rel (0) target = $region61
    $region60: #{_lambda_.12} parent=1 // pred_region
      %134 = dma.done [#allocation12], 16
    $region61: #{_lambda_.12} parent=1 // pred_fallthru
      _
    // Predicated region
    $region62: #{_lambda_.12} parent=1 // pred_check
      _
    $region63: #{_lambda_.12} parent=1 // pred_check_branch
      %136 = sbr.rel (0) target = $region65
    $region64: #{_lambda_.12} parent=1 // pred_region
      %137 = dma.done [#allocation15], 16
    $region65: #{_lambda_.12} parent=1 // pred_fallthru
      _
    %v139 = vld [vmem:[#allocation2] sm:$0xf]
    %v140 = vld [vmem:[#allocation2 + $0x4] sm:$0xf]
    %v141 = vld [vmem:[#allocation5] sm:$0xf]
    %v142 = vld [vmem:[#allocation5 + $0x4] sm:$0xf]
    %v143 = vld [vmem:[#allocation13] sm:$0x1]
    %v144 = vld [vmem:[#allocation7] sm:$0xf]
    %v145 = vld [vmem:[#allocation7 + $0x4] sm:$0xf]
    %v146 = vld [vmem:[#allocation7 + $0x8] sm:$0xf]
    %v147 = vld [vmem:[#allocation7 + $0xc] sm:$0xf]
    %v150 = vunpack.c.l.b16 %v139
    %v151 = vunpack.c.l.b16 %v140
    %v152 = vpack.c.b16 %v151, %v150
    %v157 = vunpack.c.l.b16 %v144
    %v158 = vunpack.c.l.b16 %v145
    %v159 = vunpack.c.l.b16 %v146
    %v160 = vunpack.c.l.b16 %v147
    %v161 = vpack.c.b16 %v158, %v157
    %v162 = vpack.c.b16 %v160, %v159
    %vm165 = vcmask 261120
    %v167 = vsel %vm165, %v152, 0
    %169 = vmatprep.subr.bf16.mxu0 0
    %170 = vmatpush1.bf16.msra.mxu0 %v161
    %171 = vmatprep.subr.bf16.mxu0 0
    %172 = vmatpush1.bf16.msra.mxu0 %v162
    %173 = vmatprep.subr.bf16.mxu0 0
    %174 = vmatpush1.bf16.msra.mxu0 0
    %175 = vmatprep.subr.bf16.mxu0 0
    %176 = vmatpush1.bf16.msra.mxu0 0
    %177 = vmatprep.subr.bf16.mxu0 0
    %178 = vmatpush1.bf16.msra.mxu0 0
    %179 = vmatprep.subr.bf16.mxu0 0
    %180 = vmatpush1.bf16.msra.mxu0 0
    %181 = vmatprep.subr.bf16.mxu0 0
    %182 = vmatpush1.bf16.msra.mxu0 0
    %183 = vmatprep.subr.bf16.mxu0 0
    %184 = vmatpush1.bf16.msra.mxu0 0
    %185 = vmatprep.subr.bf16.mxu0 0
    %186 = vmatpush1.bf16.msra.mxu0 0
    %187 = vmatprep.subr.bf16.mxu0 0
    %188 = vmatpush1.bf16.msra.mxu0 0
    %189 = vmatprep.subr.bf16.mxu0 0
    %190 = vmatpush1.bf16.msra.mxu0 0
    %191 = vmatprep.subr.bf16.mxu0 0
    %192 = vmatpush1.bf16.msra.mxu0 0
    %193 = vmatprep.subr.bf16.mxu0 0
    %194 = vmatpush1.bf16.msra.mxu0 0
    %195 = vmatprep.subr.bf16.mxu0 0
    %196 = vmatpush1.bf16.msra.mxu0 0
    %197 = vmatprep.subr.bf16.mxu0 0
    %198 = vmatpush1.bf16.msra.mxu0 0
    %199 = vmatprep.subr.bf16.mxu0 0
    %200 = vmatpush1.bf16.msra.mxu0 0
    %201 = vmatprep.mubr.bf16.mxu0 0
    %202 = vmatmul.mubr.bf16.gmra.mrb[0].mxu0 %v167
    %v203 = vpop.f32.mrb[0].mxu0
    %v204 = vadd.f32 0.0, %v203
    %v205 = vpop.f32.mrb[0].mxu0
    %v206 = vpop.f32.mrb[0].mxu0
    %v207 = vadd.f32 0.0, %v206
    %v208 = vpop.f32.mrb[0].mxu0
    %209 = vdwg.mxu0
    %v211 = vlaneseq
    %v212 = vshrl.u32 %v211, 7
    %v213 = vsub.s32 0, %v212
    %v214 = vrot.slane %v143, %v213
    %v216 = vadd.f32 %v214, %v204
    %v217 = vadd.f32 %v214, %v207
    %v218 = vld [vmem:[#allocation8] sm:$0xf]
    %v219 = vld [vmem:[#allocation8 + $0x4] sm:$0xf]
    %v220 = vld [vmem:[#allocation8 + $0x8] sm:$0xf]
    %v221 = vld [vmem:[#allocation8 + $0xc] sm:$0xf]
    %v224 = vunpack.c.l.b16 %v141
    %v225 = vunpack.c.l.b16 %v142
    %v226 = vpack.c.b16 %v225, %v224
    %v231 = vunpack.c.l.b16 %v218
    %v232 = vunpack.c.l.b16 %v219
    %v233 = vunpack.c.l.b16 %v220
    %v234 = vunpack.c.l.b16 %v221
    %v235 = vpack.c.b16 %v232, %v231
    %v236 = vpack.c.b16 %v234, %v233
    %v240 = vsel %vm165, %v226, 0
    %242 = vmatprep.subr.bf16.mxu0 0
    %243 = vmatpush1.bf16.msra.mxu0 %v235
    %244 = vmatprep.subr.bf16.mxu0 0
    %245 = vmatpush1.bf16.msra.mxu0 %v236
    %246 = vmatprep.subr.bf16.mxu0 0
    %247 = vmatpush1.bf16.msra.mxu0 0
    %248 = vmatprep.subr.bf16.mxu0 0
    %249 = vmatpush1.bf16.msra.mxu0 0
    %250 = vmatprep.subr.bf16.mxu0 0
    %251 = vmatpush1.bf16.msra.mxu0 0
    %252 = vmatprep.subr.bf16.mxu0 0
    %253 = vmatpush1.bf16.msra.mxu0 0
    %254 = vmatprep.subr.bf16.mxu0 0
    %255 = vmatpush1.bf16.msra.mxu0 0
    %256 = vmatprep.subr.bf16.mxu0 0
    %257 = vmatpush1.bf16.msra.mxu0 0
    %258 = vmatprep.subr.bf16.mxu0 0
    %259 = vmatpush1.bf16.msra.mxu0 0
    %260 = vmatprep.subr.bf16.mxu0 0
    %261 = vmatpush1.bf16.msra.mxu0 0
    %262 = vmatprep.subr.bf16.mxu0 0
    %263 = vmatpush1.bf16.msra.mxu0 0
    %264 = vmatprep.subr.bf16.mxu0 0
    %265 = vmatpush1.bf16.msra.mxu0 0
    %266 = vmatprep.subr.bf16.mxu0 0
    %267 = vmatpush1.bf16.msra.mxu0 0
    %268 = vmatprep.subr.bf16.mxu0 0
    %269 = vmatpush1.bf16.msra.mxu0 0
    %270 = vmatprep.subr.bf16.mxu0 0
    %271 = vmatpush1.bf16.msra.mxu0 0
    %272 = vmatprep.subr.bf16.mxu0 0
    %273 = vmatpush1.bf16.msra.mxu0 0
    %274 = vmatprep.mubr.bf16.mxu0 0
    %275 = vmatmul.mubr.bf16.gmra.mrb[0].mxu0 %v240
    %v276 = vpop.f32.mrb[0].mxu0
    %v277 = vadd.f32 0.0, %v276
    %v278 = vpop.f32.mrb[0].mxu0
    %v279 = vpop.f32.mrb[0].mxu0
    %v280 = vadd.f32 0.0, %v279
    %v281 = vpop.f32.mrb[0].mxu0
    %282 = vdwg.mxu0
    %v283 = vadd.f32 %v216, %v277
    %v284 = vadd.f32 %v217, %v280
    %285 = vst [vmem:[#allocation16] sm:$0xff] %v283
    %286 = vst [vmem:[#allocation16 + $0x8] sm:$0xff] %v284
    %v287 = vld [vmem:[#allocation14] sm:$0x1]
    %v288 = vld [vmem:[#allocation10] sm:$0xf]
    %v289 = vld [vmem:[#allocation10 + $0x4] sm:$0xf]
    %v290 = vld [vmem:[#allocation10 + $0x8] sm:$0xf]
    %v291 = vld [vmem:[#allocation10 + $0xc] sm:$0xf]
    %v296 = vunpack.c.l.b16 %v288
    %v297 = vunpack.c.l.b16 %v289
    %v298 = vunpack.c.l.b16 %v290
    %v299 = vunpack.c.l.b16 %v291
    %v300 = vpack.c.b16 %v297, %v296
    %v301 = vpack.c.b16 %v299, %v298
    %304 = vmatprep.subr.bf16.mxu0 0
    %305 = vmatpush1.bf16.msra.mxu0 %v300
    %306 = vmatprep.subr.bf16.mxu0 0
    %307 = vmatpush1.bf16.msra.mxu0 %v301
    %308 = vmatprep.subr.bf16.mxu0 0
    %309 = vmatpush1.bf16.msra.mxu0 0
    %310 = vmatprep.subr.bf16.mxu0 0
    %311 = vmatpush1.bf16.msra.mxu0 0
    %312 = vmatprep.subr.bf16.mxu0 0
    %313 = vmatpush1.bf16.msra.mxu0 0
    %314 = vmatprep.subr.bf16.mxu0 0
    %315 = vmatpush1.bf16.msra.mxu0 0
    %316 = vmatprep.subr.bf16.mxu0 0
    %317 = vmatpush1.bf16.msra.mxu0 0
    %318 = vmatprep.subr.bf16.mxu0 0
    %319 = vmatpush1.bf16.msra.mxu0 0
    %320 = vmatprep.subr.bf16.mxu0 0
    %321 = vmatpush1.bf16.msra.mxu0 0
    %322 = vmatprep.subr.bf16.mxu0 0
    %323 = vmatpush1.bf16.msra.mxu0 0
    %324 = vmatprep.subr.bf16.mxu0 0
    %325 = vmatpush1.bf16.msra.mxu0 0
    %326 = vmatprep.subr.bf16.mxu0 0
    %327 = vmatpush1.bf16.msra.mxu0 0
    %328 = vmatprep.subr.bf16.mxu0 0
    %329 = vmatpush1.bf16.msra.mxu0 0
    %330 = vmatprep.subr.bf16.mxu0 0
    %331 = vmatpush1.bf16.msra.mxu0 0
    %332 = vmatprep.subr.bf16.mxu0 0
    %333 = vmatpush1.bf16.msra.mxu0 0
    %334 = vmatprep.subr.bf16.mxu0 0
    %335 = vmatpush1.bf16.msra.mxu0 0
    %336 = vmatprep.mubr.bf16.mxu0 0
    %337 = vmatmul.mubr.bf16.gmra.mrb[0].mxu0 %v167
    %v338 = vpop.f32.mrb[0].mxu0
    %v339 = vadd.f32 0.0, %v338
    %v340 = vpop.f32.mrb[0].mxu0
    %v341 = vpop.f32.mrb[0].mxu0
    %v342 = vadd.f32 0.0, %v341
    %v343 = vpop.f32.mrb[0].mxu0
    %344 = vdwg.mxu0
    %v346 = vlaneseq
    %v347 = vshrl.u32 %v346, 7
    %v348 = vsub.s32 0, %v347
    %v349 = vrot.slane %v287, %v348
    %v351 = vadd.f32 %v349, %v339
    %v352 = vadd.f32 %v349, %v342
    %v353 = vld [vmem:[#allocation11] sm:$0xf]
    %v354 = vld [vmem:[#allocation11 + $0x4] sm:$0xf]
    %v355 = vld [vmem:[#allocation11 + $0x8] sm:$0xf]
    %v356 = vld [vmem:[#allocation11 + $0xc] sm:$0xf]
    %v361 = vunpack.c.l.b16 %v353
    %v362 = vunpack.c.l.b16 %v354
    %v363 = vunpack.c.l.b16 %v355
    %v364 = vunpack.c.l.b16 %v356
    %v365 = vpack.c.b16 %v362, %v361
    %v366 = vpack.c.b16 %v364, %v363
    %369 = vmatprep.subr.bf16.mxu0 0
    %370 = vmatpush1.bf16.msra.mxu0 %v365
    %371 = vmatprep.subr.bf16.mxu0 0
    %372 = vmatpush1.bf16.msra.mxu0 %v366
    %373 = vmatprep.subr.bf16.mxu0 0
    %374 = vmatpush1.bf16.msra.mxu0 0
    %375 = vmatprep.subr.bf16.mxu0 0
    %376 = vmatpush1.bf16.msra.mxu0 0
    %377 = vmatprep.subr.bf16.mxu0 0
    %378 = vmatpush1.bf16.msra.mxu0 0
    %379 = vmatprep.subr.bf16.mxu0 0
    %380 = vmatpush1.bf16.msra.mxu0 0
    %381 = vmatprep.subr.bf16.mxu0 0
    %382 = vmatpush1.bf16.msra.mxu0 0
    %383 = vmatprep.subr.bf16.mxu0 0
    %384 = vmatpush1.bf16.msra.mxu0 0
    %385 = vmatprep.subr.bf16.mxu0 0
    %386 = vmatpush1.bf16.msra.mxu0 0
    %387 = vmatprep.subr.bf16.mxu0 0
    %388 = vmatpush1.bf16.msra.mxu0 0
    %389 = vmatprep.subr.bf16.mxu0 0
    %390 = vmatpush1.bf16.msra.mxu0 0
    %391 = vmatprep.subr.bf16.mxu0 0
    %392 = vmatpush1.bf16.msra.mxu0 0
    %393 = vmatprep.subr.bf16.mxu0 0
    %394 = vmatpush1.bf16.msra.mxu0 0
    %395 = vmatprep.subr.bf16.mxu0 0
    %396 = vmatpush1.bf16.msra.mxu0 0
    %397 = vmatprep.subr.bf16.mxu0 0
    %398 = vmatpush1.bf16.msra.mxu0 0
    %399 = vmatprep.subr.bf16.mxu0 0
    %400 = vmatpush1.bf16.msra.mxu0 0
    %401 = vmatprep.mubr.bf16.mxu0 0
    %402 = vmatmul.mubr.bf16.gmra.mrb[0].mxu0 %v240
    %v403 = vpop.f32.mrb[0].mxu0
    %v404 = vadd.f32 0.0, %v403
    %v405 = vpop.f32.mrb[0].mxu0
    %v406 = vpop.f32.mrb[0].mxu0
    %v407 = vadd.f32 0.0, %v406
    %v408 = vpop.f32.mrb[0].mxu0
    %409 = vdwg.mxu0
    %v410 = vadd.f32 %v351, %v404
    %v411 = vadd.f32 %v352, %v407
    %412 = vst [vmem:[#allocation17] sm:$0xff] %v410
    %413 = vst [vmem:[#allocation17 + $0x8] sm:$0xff] %v411
    // Predicated region
    $region66: #{_lambda_.12} parent=1 // pred_check
      _
    $region67: #{_lambda_.12} parent=1 // pred_check_branch
      %415 = sbr.rel (0) target = $region69
    $region68: #{_lambda_.12} parent=1 // pred_region
      %s417 = ssub.s32 256, 256
      %418 = vsyncadd [#allocation4], %s417
      %s419 = sshll.u32 [#allocation16], 4
      %s420 = int_to_ptr.vmem [resolvable:$true] %s419
      %425 = dma.vmem_to_hbm [thread:$0]  %s420, 256, %s8, [#allocation4], 128, 128, 8
    $region69: #{_lambda_.12} parent=1 // pred_fallthru
      _
    // Predicated region
    $region70: #{_lambda_.12} parent=1 // pred_check
      _
    $region71: #{_lambda_.12} parent=1 // pred_check_branch
      %427 = sbr.rel (0) target = $region73
    $region72: #{_lambda_.12} parent=1 // pred_region
      %s429 = ssub.s32 256, 256
      %430 = vsyncadd [#allocation18], %s429
      %s431 = sshll.u32 [#allocation17], 4
      %s432 = int_to_ptr.vmem [resolvable:$true] %s431
      %437 = dma.vmem_to_hbm [thread:$0]  %s432, 256, %s9, [#allocation18], 128, 128, 8
    $region73: #{_lambda_.12} parent=1 // pred_fallthru
      _
    // Predicated region
    $region74: #{_lambda_.12} parent=1 // pred_check
      _
    $region75: #{_lambda_.12} parent=1 // pred_check_branch
      %439 = sbr.rel (0) target = $region77
    $region76: #{_lambda_.12} parent=1 // pred_region
      %440 = dma.done [#allocation4], 256
    $region77: #{_lambda_.12} parent=1 // pred_fallthru
      _
    // Predicated region
    $region78: #{_lambda_.12} parent=1 // pred_check
      _
    $region79: #{_lambda_.12} parent=1 // pred_check_branch
      %442 = sbr.rel (0) target = $region81
    $region80: #{_lambda_.12} parent=1 // pred_region
      %443 = dma.done [#allocation18], 256
    $region81: #{_lambda_.12} parent=1 // pred_fallthru
      _
    %444 = vsyncpa [#allocation3], 1
    %445 = vsyncpa [#allocation6], 1
    %446 = vsyncpa [#allocation9], 1
    %447 = vsyncpa [#allocation12], 1
    %448 = vsyncpa [#allocation15], 1
    %449 = vsyncpa [#allocation4], 1
    %450 = vsyncpa [#allocation18], 1

// kernel: _lambda_.11
$region0: #{_lambda_.11}
  #allocation0 [shape = 'u32[]', space=smem, size = 0x4, offset = 0x4, fixed_abs, tag = 'smem constant byte address 0x4 - core index']
  #allocation1 [shape = 'u32[144,128]{1,0:T(1,128)}', space=vmem, size = 0x12000, scoped, tag = 'internal scratch']
  #allocation2 [shape = 'f32[2,2,32]{2,1,0:T(2,128)}', space=vmem, size = 0x800, scoped, tag = 'scratch operand']
  #allocation3 [shape = 'f32[2,2,32]{2,1,0:T(2,128)}', space=vmem, size = 0x800, scoped, tag = 'scratch operand']
  %s0 = inlined_call_operand.hbm [shape: f32[8,2,128], index: 0, kind: input, shape index: {}]
  %s1 = inlined_call_operand.hbm [shape: f32[8,2,128], index: 1, kind: input, shape index: {}]
  %s2 = inlined_call_operand.hbm [shape: bf16[32,128], index: 2, kind: input, shape index: {}]
  %s3 = inlined_call_operand.hbm [shape: bf16[32,128], index: 3, kind: input, shape index: {}]
  %s4 = inlined_call_operand.hbm [shape: f32[8,2,32], index: 4, kind: output, shape index: {0}]
  %s5 = inlined_call_operand.hbm [shape: f32[8,2,32], index: 5, kind: output, shape index: {1}]
  %6 = xla_tuple %s4, %s5
  %s7 = sld [smem:[#allocation0]]
  $region77: #{_lambda_.11} parent=0
    _
  %s9 = ssub.s32 1, %s7
  %s10 = scalar_select 0, %s9, %s7
  $region1: #{_lambda_.11} parent=0
    #allocation4 [shape = 'u8[2048]{0}', space=vmem, size = 0x800, scoped, tag = 'input window, operand 0']
    #allocation5 [shape = 's32[2]{0}', space=sflag, size = 0x8, scoped, tag = 'scoped memory for _lambda_.11']
    #allocation6 [shape = 's32[2]{0}', space=sflag, size = 0x8, scoped, tag = 'scoped memory for _lambda_.11']
    #allocation7 [shape = 'u8[2048]{0}', space=vmem, size = 0x800, scoped, tag = 'input window, operand 1']
    #allocation8 [shape = 's32[2]{0}', space=sflag, size = 0x8, scoped, tag = 'scoped memory for _lambda_.11']
    #allocation9 [shape = 'u8[8192]{0}', space=vmem, size = 0x2000, scoped, tag = 'input window, operand 2, single buffered']
    #allocation10 [shape = 'u8[8192]{0}', space=vmem, size = 0x2000, scoped, tag = 'input window, operand 3, single buffered']
    #allocation11 [shape = 's32[1]{0}', space=sflag, size = 0x4, scoped, tag = 'scoped memory for _lambda_.11']
    #allocation12 [shape = 'u8[2048]{0}', space=vmem, size = 0x800, scoped, tag = 'output window, operand 0']
    #allocation13 [shape = 'u8[2048]{0}', space=vmem, size = 0x800, scoped, tag = 'output window, operand 1']
    #allocation14 [shape = 's32[2]{0}', space=sflag, size = 0x8, scoped, tag = 'scoped memory for _lambda_.11']
    %11 = vsyncpa [#allocation5], 0
    %s12 = scalar_lea.sflag [#allocation5], 1
    %13 = vsyncpa %s12, 0
    %14 = vsyncpa [#allocation8], 0
    %s15 = scalar_lea.sflag [#allocation8], 1
    %16 = vsyncpa %s15, 0
    %17 = vsyncpa [#allocation11], 0
    %18 = vsyncpa [#allocation6], 0
    %s19 = scalar_lea.sflag [#allocation6], 1
    %20 = vsyncpa %s19, 0
    %21 = vsyncpa [#allocation14], 0
    %s22 = scalar_lea.sflag [#allocation14], 1
    %23 = vsyncpa %s22, 0
    loop: start=0, step=1, limit=10
    $region2: #{_lambda_.11} parent=1 // loop_pre_header
      _
    $region3: #{_lambda_.11} parent=1 // loop_header
      %s25 = sphi 0, %s29
      %p26 = scmp.ge.s32.totalorder %s25, 10
      %s35 = sphi 0, %s37
      %s38 = sphi 0, %s35
      %s39 = sphi 0, %s38
      %s55 = sphi 0, %s39
      %s63 = sphi 0, %s65
      %s66 = sphi 0, %s63
      %s67 = sphi 0, %s66
      %s83 = sphi 0, %s67
      %s87 = sphi 0, %s87
      %s89 = sphi 0, %s87
      %s90 = sphi 0, %s89
      %s104 = sphi 0, %s90
      %s108 = sphi 0, %s108
      %s110 = sphi 0, %s108
      %s111 = sphi 0, %s110
      %s125 = sphi 0, %s111
      %s131 = sphi 0, %s133
      %s134 = sphi 0, %s131
      %s135 = sphi 0, %s134
      %s151 = sphi 0, %s135
      %s159 = sphi 0, %s161
      %s162 = sphi 0, %s159
      %s163 = sphi 0, %s162
      %s179 = sphi 0, %s163
    $region4: #{_lambda_.11} parent=1 // loop_header_branch
      %28 = sbr.rel (%p26) target = $region8
    $region5: #{_lambda_.11} parent=1 // loop_body
      %s30 = ssub.s32 %s25, 1
      %s31 = ssub.s32 %s25, 2
      %s32 = sadd.s32 %s25, 1
      %s33 = ssub.s32 %s25, %s32
      %p34 = scmp.eq.s32.totalorder %s33, 0
      %s36 = sadd.s32 %s35, 1
      %s37 = scalar_select %p34, %s35, %s36
      %p40 = pneg %p34
      %p41 = scmp.eq.s32.totalorder %s25, 7
      %p42 = por %p40, %p41
      %p43 = scmp.ne.s32.totalorder %s35, %s38
      %p44 = scmp.eq.s32.totalorder %s25, 0
      %p45 = por %p43, %p44
      %p46 = scmp.ne.s32.totalorder %s35, %s38
      %p47 = scmp.eq.s32.totalorder %s30, 7
      %p48 = por %p46, %p47
      %p49 = scmp.ne.s32.totalorder %s38, %s39
      %p50 = scmp.eq.s32.totalorder %s30, 0
      %p51 = por %p49, %p50
      %p52 = scmp.ne.s32.totalorder %s38, %s39
      %p53 = scmp.eq.s32.totalorder %s31, 7
      %p54 = por %p52, %p53
      %p56 = scmp.ne.s32.totalorder %s39, %s55
      %p57 = scmp.eq.s32.totalorder %s31, 0
      %p58 = por %p56, %p57
      %s59 = ssub.s32 7, %s25
      %s60 = ssub.s32 7, %s32
      %s61 = ssub.s32 %s59, %s60
      %p62 = scmp.eq.s32.totalorder %s61, 0
      %s64 = sadd.s32 %s63, 1
      %s65 = scalar_select %p62, %s63, %s64
      %p68 = pneg %p62
      %p69 = scmp.eq.s32.totalorder %s25, 7
      %p70 = por %p68, %p69
      %p71 = scmp.ne.s32.totalorder %s63, %s66
      %p72 = scmp.eq.s32.totalorder %s25, 0
      %p73 = por %p71, %p72
      %p74 = scmp.ne.s32.totalorder %s63, %s66
      %p75 = scmp.eq.s32.totalorder %s30, 7
      %p76 = por %p74, %p75
      %p77 = scmp.ne.s32.totalorder %s66, %s67
      %p78 = scmp.eq.s32.totalorder %s30, 0
      %p79 = por %p77, %p78
      %p80 = scmp.ne.s32.totalorder %s66, %s67
      %p81 = scmp.eq.s32.totalorder %s31, 7
      %p82 = por %p80, %p81
      %p84 = scmp.ne.s32.totalorder %s67, %s83
      %p85 = scmp.eq.s32.totalorder %s31, 0
      %p86 = por %p84, %p85
      %s88 = sadd.s32 %s87, 1
      %p91 = scmp.eq.s32.totalorder %s25, 7
      %p92 = scmp.ne.s32.totalorder %s87, %s89
      %p93 = scmp.eq.s32.totalorder %s25, 0
      %p94 = por %p92, %p93
      %p95 = scmp.ne.s32.totalorder %s87, %s89
      %p96 = scmp.eq.s32.totalorder %s30, 7
      %p97 = por %p95, %p96
      %p98 = scmp.ne.s32.totalorder %s89, %s90
      %p99 = scmp.eq.s32.totalorder %s30, 0
      %p100 = por %p98, %p99
      %p101 = scmp.ne.s32.totalorder %s89, %s90
      %p102 = scmp.eq.s32.totalorder %s31, 7
      %p103 = por %p101, %p102
      %p105 = scmp.ne.s32.totalorder %s90, %s104
      %p106 = scmp.eq.s32.totalorder %s31, 0
      %p107 = por %p105, %p106
      %s109 = sadd.s32 %s108, 1
      %p112 = scmp.eq.s32.totalorder %s25, 7
      %p113 = scmp.ne.s32.totalorder %s108, %s110
      %p114 = scmp.eq.s32.totalorder %s25, 0
      %p115 = por %p113, %p114
      %p116 = scmp.ne.s32.totalorder %s108, %s110
      %p117 = scmp.eq.s32.totalorder %s30, 7
      %p118 = por %p116, %p117
      %p119 = scmp.ne.s32.totalorder %s110, %s111
      %p120 = scmp.eq.s32.totalorder %s30, 0
      %p121 = por %p119, %p120
      %p122 = scmp.ne.s32.totalorder %s110, %s111
      %p123 = scmp.eq.s32.totalorder %s31, 7
      %p124 = por %p122, %p123
      %p126 = scmp.ne.s32.totalorder %s111, %s125
      %p127 = scmp.eq.s32.totalorder %s31, 0
      %p128 = por %p126, %p127
      %s129 = ssub.s32 %s25, %s32
      %p130 = scmp.eq.s32.totalorder %s129, 0
      %s132 = sadd.s32 %s131, 1
      %s133 = scalar_select %p130, %s131, %s132
      %p136 = pneg %p130
      %p137 = scmp.eq.s32.totalorder %s25, 7
      %p138 = por %p136, %p137
      %p139 = scmp.ne.s32.totalorder %s131, %s134
      %p140 = scmp.eq.s32.totalorder %s25, 0
      %p141 = por %p139, %p140
      %p142 = scmp.ne.s32.totalorder %s131, %s134
      %p143 = scmp.eq.s32.totalorder %s30, 7
      %p144 = por %p142, %p143
      %p145 = scmp.ne.s32.totalorder %s134, %s135
      %p146 = scmp.eq.s32.totalorder %s30, 0
      %p147 = por %p145, %p146
      %p148 = scmp.ne.s32.totalorder %s134, %s135
      %p149 = scmp.eq.s32.totalorder %s31, 7
      %p150 = por %p148, %p149
      %p152 = scmp.ne.s32.totalorder %s135, %s151
      %p153 = scmp.eq.s32.totalorder %s31, 0
      %p154 = por %p152, %p153
      %s155 = ssub.s32 7, %s25
      %s156 = ssub.s32 7, %s32
      %s157 = ssub.s32 %s155, %s156
      %p158 = scmp.eq.s32.totalorder %s157, 0
      %s160 = sadd.s32 %s159, 1
      %s161 = scalar_select %p158, %s159, %s160
      %p164 = pneg %p158
      %p165 = scmp.eq.s32.totalorder %s25, 7
      %p166 = por %p164, %p165
      %p167 = scmp.ne.s32.totalorder %s159, %s162
      %p168 = scmp.eq.s32.totalorder %s25, 0
      %p169 = por %p167, %p168
      %p170 = scmp.ne.s32.totalorder %s159, %s162
      %p171 = scmp.eq.s32.totalorder %s30, 7
      %p172 = por %p170, %p171
      %p173 = scmp.ne.s32.totalorder %s162, %s163
      %p174 = scmp.eq.s32.totalorder %s30, 0
      %p175 = por %p173, %p174
      %p176 = scmp.ne.s32.totalorder %s162, %s163
      %p177 = scmp.eq.s32.totalorder %s31, 7
      %p178 = por %p176, %p177
      %p180 = scmp.ne.s32.totalorder %s163, %s179
      %p181 = scmp.eq.s32.totalorder %s31, 0
      %p182 = por %p180, %p181
      %p183 = scmp.le.s32.totalorder 1, %s25
      %p184 = scmp.lt.s32.totalorder %s25, 9
      %p185 = pnand %p183, %p184
      %p186 = pneg %p185
      // Predicated region
      $region9: #{_lambda_.11} parent=5 // pred_check
        _
      $region10: #{_lambda_.11} parent=5 // pred_check_branch
        %188 = sbr.rel (%p185) target = $region12
      $region11: #{_lambda_.11} parent=5 // pred_region
        %s189 = ssub.s32 %s25, 1
        // Predicated region
        $region13: #{_lambda_.11} parent=11 // pred_check
          %p190 = pneg %p100
        $region14: #{_lambda_.11} parent=11 // pred_check_branch
          %192 = sbr.rel (%p190) target = $region16
        $region15: #{_lambda_.11} parent=11 // pred_region
          %s194 = ssub.s32 256, 256
          %195 = vsyncadd [#allocation8], %s194
          %s196 = sshll.u32 [#allocation9], 4
          %s197 = int_to_ptr.vmem [resolvable:$true] %s196
          %202 = dma.hbm_to_vmem [thread:$0]  %s2, 256, %s197, [#allocation8], 64, 64, 4
        $region16: #{_lambda_.11} parent=11 // pred_fallthru
          _
        // Predicated region
        $region17: #{_lambda_.11} parent=11 // pred_check
          %p203 = pneg %p121
        $region18: #{_lambda_.11} parent=11 // pred_check_branch
          %205 = sbr.rel (%p203) target = $region20
        $region19: #{_lambda_.11} parent=11 // pred_region
          %s207 = ssub.s32 256, 256
          %208 = vsyncadd [#allocation11], %s207
          %s209 = sshll.u32 [#allocation10], 4
          %s210 = int_to_ptr.vmem [resolvable:$true] %s209
          %215 = dma.hbm_to_vmem [thread:$0]  %s3, 256, %s210, [#allocation11], 64, 64, 4
        $region20: #{_lambda_.11} parent=11 // pred_fallthru
          _
      $region12: #{_lambda_.11} parent=5 // pred_fallthru
        _
      %p216 = scmp.lt.s32.totalorder %s25, 8
      // Predicated region
      $region21: #{_lambda_.11} parent=5 // pred_check
        %p217 = pneg %p216
      $region22: #{_lambda_.11} parent=5 // pred_check_branch
        %219 = sbr.rel (%p217) target = $region24
      $region23: #{_lambda_.11} parent=5 // pred_region
        // Predicated region
        $region25: #{_lambda_.11} parent=23 // pred_check
          %p220 = pneg %p45
        $region26: #{_lambda_.11} parent=23 // pred_check_branch
          %222 = sbr.rel (%p220) target = $region28
        $region27: #{_lambda_.11} parent=23 // pred_region
          %s223 = sand.u32 %s35, 1
          %s224 = scalar_lea.sflag [#allocation5], %s223
          %s225 = sand.u32 %s35, 1
          %s226 = smul.addr %s225, 2
          %s227 = scalar_lea.vmem [#allocation4], %s226
          %s229 = ssub.s32 32, 32
          %230 = vsyncadd %s224, %s229
          %s231 = smul.addr %s25, 32
          %s232 = scalar_lea.hbm %s0, %s231
          %s234 = sshll.u32 %s227, 4
          %s235 = int_to_ptr.vmem [resolvable:$true] %s234
          %237 = dma.hbm_to_vmem [thread:$0]  %s232, 32, %s235, %s224
        $region28: #{_lambda_.11} parent=23 // pred_fallthru
          _
        // Predicated region
        $region29: #{_lambda_.11} parent=23 // pred_check
          %p238 = pneg %p73
        $region30: #{_lambda_.11} parent=23 // pred_check_branch
          %240 = sbr.rel (%p238) target = $region32
        $region31: #{_lambda_.11} parent=23 // pred_region
          %s241 = sand.u32 %s25, 1
          %s242 = scalar_lea.sflag [#allocation8], %s241
          %s243 = sand.u32 %s63, 1
          %s244 = smul.addr %s243, 2
          %s245 = scalar_lea.vmem [#allocation7], %s244
          %s246 = ssub.s32 7, %s25
          %s248 = ssub.s32 32, 32
          %249 = vsyncadd %s242, %s248
          %s250 = smul.addr %s246, 32
          %s251 = scalar_lea.hbm %s1, %s250
          %s253 = sshll.u32 %s245, 4
          %s254 = int_to_ptr.vmem [resolvable:$true] %s253
          %256 = dma.hbm_to_vmem [thread:$0]  %s251, 32, %s254, %s242
        $region32: #{_lambda_.11} parent=23 // pred_fallthru
          _
      $region24: #{_lambda_.11} parent=5 // pred_fallthru
        _
      %p257 = scmp.le.s32.totalorder 1, %s25
      %p258 = scmp.lt.s32.totalorder %s25, 9
      %p259 = pnand %p257, %p258
      %p260 = pneg %p259
      // Predicated region
      $region33: #{_lambda_.11} parent=5 // pred_check
        _
      $region34: #{_lambda_.11} parent=5 // pred_check_branch
        %262 = sbr.rel (%p259) target = $region36
      $region35: #{_lambda_.11} parent=5 // pred_region
        %s263 = ssub.s32 %s25, 1
        %s264 = sand.u32 %s38, 1
        %s265 = scalar_lea.sflag [#allocation5], %s264
        %s266 = sand.u32 %s38, 1
        %s267 = smul.addr %s266, 2
        %s268 = scalar_lea.vmem [#allocation4], %s267
        // Predicated region
        $region37: #{_lambda_.11} parent=35 // pred_check
          %p269 = pneg %p51
        $region38: #{_lambda_.11} parent=35 // pred_check_branch
          %271 = sbr.rel (%p269) target = $region40
        $region39: #{_lambda_.11} parent=35 // pred_region
          %272 = dma.done %s265, 32
        $region40: #{_lambda_.11} parent=35 // pred_fallthru
          _
        %s273 = sand.u32 %s30, 1
        %s274 = scalar_lea.sflag [#allocation8], %s273
        %s275 = sand.u32 %s66, 1
        %s276 = smul.addr %s275, 2
        %s277 = scalar_lea.vmem [#allocation7], %s276
        // Predicated region
        $region41: #{_lambda_.11} parent=35 // pred_check
          %p278 = pneg %p79
        $region42: #{_lambda_.11} parent=35 // pred_check_branch
          %280 = sbr.rel (%p278) target = $region44
        $region43: #{_lambda_.11} parent=35 // pred_region
          %281 = dma.done %s274, 32
        $region44: #{_lambda_.11} parent=35 // pred_fallthru
          _
        // Predicated region
        $region45: #{_lambda_.11} parent=35 // pred_check
          %p282 = pneg %p100
        $region46: #{_lambda_.11} parent=35 // pred_check_branch
          %284 = sbr.rel (%p282) target = $region48
        $region47: #{_lambda_.11} parent=35 // pred_region
          %285 = dma.done [#allocation8], 256
        $region48: #{_lambda_.11} parent=35 // pred_fallthru
          _
        // Predicated region
        $region49: #{_lambda_.11} parent=35 // pred_check
          %p286 = pneg %p121
        $region50: #{_lambda_.11} parent=35 // pred_check_branch
          %288 = sbr.rel (%p286) target = $region52
        $region51: #{_lambda_.11} parent=35 // pred_region
          %289 = dma.done [#allocation11], 256
        $region52: #{_lambda_.11} parent=35 // pred_fallthru
          _
        %s290 = sand.u32 %s38, 1
        %s291 = scalar_lea.sflag [#allocation5], %s290
        %s292 = sand.u32 %s38, 1
        %s293 = smul.addr %s292, 2
        %s294 = scalar_lea.vmem [#allocation4], %s293
        %p295 = pneg %p51
        %p296 = pneg %p48
        %s297 = sand.u32 %s30, 1
        %s298 = scalar_lea.sflag [#allocation8], %s297
        %s299 = sand.u32 %s66, 1
        %s300 = smul.addr %s299, 2
        %s301 = scalar_lea.vmem [#allocation7], %s300
        %p302 = pneg %p79
        %p303 = pneg %p76
        %p304 = pneg %p100
        %p305 = pneg %p97
        %p306 = pneg %p121
        %p307 = pneg %p118
        %p308 = pneg %p147
        %p309 = pneg %p144
        %s310 = sand.u32 %s134, 1
        %s311 = scalar_lea.sflag [#allocation6], %s310
        %s312 = sand.u32 %s134, 1
        %s313 = smul.addr %s312, 2
        %s314 = scalar_lea.vmem [#allocation12], %s313
        %p315 = pneg %p175
        %p316 = pneg %p172
        %s317 = sand.u32 %s162, 1
        %s318 = scalar_lea.sflag [#allocation14], %s317
        %s319 = sand.u32 %s162, 1
        %s320 = smul.addr %s319, 2
        %s321 = scalar_lea.vmem [#allocation13], %s320
        %s322 = ssub.s32 7, %s30
        %s323 = ssub.s32 7, %s30
        %p325 = scmp.eq.s32.totalorder %s30, 0
        // Predicated region
        $region53: #{_lambda_.11} parent=35 // pred_check
          %p326 = pneg %p325
        $region54: #{_lambda_.11} parent=35 // pred_check_branch
          %328 = sbr.rel (%p326) target = $region56
        $region55: #{_lambda_.11} parent=35 // pred_region
          %vm329 = vcmask 254976
          %330 = vst.msk [vmem:[#allocation2] sm:$0x3] %vm329, 0.0
          %331 = vst.msk [vmem:[#allocation2 + $0x2] sm:$0x3] %vm329, 0.0
          %332 = vst.msk [vmem:[#allocation3] sm:$0x3] %vm329, 0.0
          %333 = vst.msk [vmem:[#allocation3 + $0x2] sm:$0x3] %vm329, 0.0
        $region56: #{_lambda_.11} parent=35 // pred_fallthru
          _
        %v334 = vld [vmem:[%s268] sm:$0x3]
        %v335 = vld [vmem:[#allocation2] sm:$0x3]
        %v336 = vld [vmem:[#allocation3] sm:$0x3]
        %v337 = vld [vmem:[#allocation9] sm:$0xf]
        %v338 = vld [vmem:[#allocation9 + $0x4] sm:$0xf]
        %v339 = vld [vmem:[#allocation9 + $0x8] sm:$0xf]
        %v340 = vld [vmem:[#allocation9 + $0xc] sm:$0xf]
        %v341 = vpack.c.bf16 %v335, %v335
        %v346 = vunpack.c.l.b16 %v337
        %v347 = vunpack.c.l.b16 %v338
        %v348 = vunpack.c.l.b16 %v339
        %v349 = vunpack.c.l.b16 %v340
        %v350 = vpack.c.b16 %v347, %v346
        %v351 = vpack.c.b16 %v349, %v348
        %vm354 = vcmask 261120
        %v356 = vsel %vm354, %v341, 0
        %358 = vmatprep.subr.bf16.mxu0 0
        %359 = vmatpush1.bf16.msra.mxu0 %v350
        %360 = vmatprep.subr.bf16.mxu0 0
        %361 = vmatpush1.bf16.msra.mxu0 %v351
        %362 = vmatprep.subr.bf16.mxu0 0
        %363 = vmatpush1.bf16.msra.mxu0 0
        %364 = vmatprep.subr.bf16.mxu0 0
        %365 = vmatpush1.bf16.msra.mxu0 0
        %366 = vmatprep.subr.bf16.mxu0 0
        %367 = vmatpush1.bf16.msra.mxu0 0
        %368 = vmatprep.subr.bf16.mxu0 0
        %369 = vmatpush1.bf16.msra.mxu0 0
        %370 = vmatprep.subr.bf16.mxu0 0
        %371 = vmatpush1.bf16.msra.mxu0 0
        %372 = vmatprep.subr.bf16.mxu0 0
        %373 = vmatpush1.bf16.msra.mxu0 0
        %374 = vmatprep.subr.bf16.mxu0 0
        %375 = vmatpush1.bf16.msra.mxu0 0
        %376 = vmatprep.subr.bf16.mxu0 0
        %377 = vmatpush1.bf16.msra.mxu0 0
        %378 = vmatprep.subr.bf16.mxu0 0
        %379 = vmatpush1.bf16.msra.mxu0 0
        %380 = vmatprep.subr.bf16.mxu0 0
        %381 = vmatpush1.bf16.msra.mxu0 0
        %382 = vmatprep.subr.bf16.mxu0 0
        %383 = vmatpush1.bf16.msra.mxu0 0
        %384 = vmatprep.subr.bf16.mxu0 0
        %385 = vmatpush1.bf16.msra.mxu0 0
        %386 = vmatprep.subr.bf16.mxu0 0
        %387 = vmatpush1.bf16.msra.mxu0 0
        %388 = vmatprep.subr.bf16.mxu0 0
        %389 = vmatpush1.bf16.msra.mxu0 0
        %390 = vmatprep.mubr.bf16.mxu0 0
        %391 = vmatmul.mubr.bf16.gmra.mrb[0].mxu0 %v356
        %v392 = vpop.f32.mrb[0].mxu0
        %v393 = vadd.f32 0.0, %v392
        %v394 = vpop.f32.mrb[0].mxu0
        %v395 = vpop.f32.mrb[0].mxu0
        %v396 = vpop.f32.mrb[0].mxu0
        %397 = vdwg.mxu0
        %v398 = vadd.f32 %v334, %v393
        %v399 = vxor.u32 %v398, 2147483648
        %v400 = vmul.f32 %v399, 1.442695
        %v401 = vpow.pop %v400
        %v402 = vadd.f32 %v401, 1.0
        %v403 = vrcp.pop %v402
        %v404 = vmul.f32 1.0, %v403
        %v405 = vtanh.pop %v398
        %407 = vrot.lane.b32.xlu0 %v336, 32
        %v408 = vpop.permute.xlu0 %407
        %v410 = vmul.f32 %v404, %v408
        %412 = vrot.lane.b32.xlu0 %v405, 64
        %v413 = vpop.permute.xlu0 %412
        %v415 = vmul.f32 %v404, %v413
        %417 = vrot.lane.b32.xlu0 %v415, 32
        %v418 = vpop.permute.xlu0 %417
        %v420 = vadd.f32 %v410, %v418
        %v421 = vtanh.pop %v420
        %423 = vrot.lane.b32.xlu0 %v421, 64
        %v424 = vpop.permute.xlu0 %423
        %v426 = vmul.f32 %v404, %v424
        %v427 = vld [vmem:[%s277] sm:$0x3]
        %s428 = scalar_lea.vmem [#allocation2], 2
        %v429 = vld [vmem:[%s428] sm:$0x3]
        %s430 = scalar_lea.vmem [#allocation3], 2
        %v431 = vld [vmem:[%s430] sm:$0x3]
        %v432 = vld [vmem:[#allocation10] sm:$0xf]
        %v433 = vld [vmem:[#allocation10 + $0x4] sm:$0xf]
        %v434 = vld [vmem:[#allocation10 + $0x8] sm:$0xf]
        %v435 = vld [vmem:[#allocation10 + $0xc] sm:$0xf]
        %v436 = vpack.c.bf16 %v429, %v429
        %v441 = vunpack.c.l.b16 %v432
        %v442 = vunpack.c.l.b16 %v433
        %v443 = vunpack.c.l.b16 %v434
        %v444 = vunpack.c.l.b16 %v435
        %v445 = vpack.c.b16 %v442, %v441
        %v446 = vpack.c.b16 %v444, %v443
        %v450 = vsel %vm354, %v436, 0
        %452 = vmatprep.subr.bf16.mxu0 0
        %453 = vmatpush1.bf16.msra.mxu0 %v445
        %454 = vmatprep.subr.bf16.mxu0 0
        %455 = vmatpush1.bf16.msra.mxu0 %v446
        %456 = vmatprep.subr.bf16.mxu0 0
        %457 = vmatpush1.bf16.msra.mxu0 0
        %458 = vmatprep.subr.bf16.mxu0 0
        %459 = vmatpush1.bf16.msra.mxu0 0
        %460 = vmatprep.subr.bf16.mxu0 0
        %461 = vmatpush1.bf16.msra.mxu0 0
        %462 = vmatprep.subr.bf16.mxu0 0
        %463 = vmatpush1.bf16.msra.mxu0 0
        %464 = vmatprep.subr.bf16.mxu0 0
        %465 = vmatpush1.bf16.msra.mxu0 0
        %466 = vmatprep.subr.bf16.mxu0 0
        %467 = vmatpush1.bf16.msra.mxu0 0
        %468 = vmatprep.subr.bf16.mxu0 0
        %469 = vmatpush1.bf16.msra.mxu0 0
        %470 = vmatprep.subr.bf16.mxu0 0
        %471 = vmatpush1.bf16.msra.mxu0 0
        %472 = vmatprep.subr.bf16.mxu0 0
        %473 = vmatpush1.bf16.msra.mxu0 0
        %474 = vmatprep.subr.bf16.mxu0 0
        %475 = vmatpush1.bf16.msra.mxu0 0
        %476 = vmatprep.subr.bf16.mxu0 0
        %477 = vmatpush1.bf16.msra.mxu0 0
        %478 = vmatprep.subr.bf16.mxu0 0
        %479 = vmatpush1.bf16.msra.mxu0 0
        %480 = vmatprep.subr.bf16.mxu0 0
        %481 = vmatpush1.bf16.msra.mxu0 0
        %482 = vmatprep.subr.bf16.mxu0 0
        %483 = vmatpush1.bf16.msra.mxu0 0
        %484 = vmatprep.mubr.bf16.mxu0 0
        %485 = vmatmul.mubr.bf16.gmra.mrb[0].mxu0 %v450
        %v486 = vpop.f32.mrb[0].mxu0
        %v487 = vadd.f32 0.0, %v486
        %v488 = vpop.f32.mrb[0].mxu0
        %v489 = vpop.f32.mrb[0].mxu0
        %v490 = vpop.f32.mrb[0].mxu0
        %491 = vdwg.mxu0
        %v492 = vadd.f32 %v427, %v487
        %v493 = vxor.u32 %v492, 2147483648
        %v494 = vmul.f32 %v493, 1.442695
        %v495 = vpow.pop %v494
        %v496 = vadd.f32 %v495, 1.0
        %v497 = vrcp.pop %v496
        %v498 = vmul.f32 1.0, %v497
        %v499 = vtanh.pop %v492
        %501 = vrot.lane.b32.xlu0 %v431, 32
        %v502 = vpop.permute.xlu0 %501
        %v504 = vmul.f32 %v498, %v502
        %506 = vrot.lane.b32.xlu0 %v499, 64
        %v507 = vpop.permute.xlu0 %506
        %v509 = vmul.f32 %v498, %v507
        %511 = vrot.lane.b32.xlu0 %v509, 32
        %v512 = vpop.permute.xlu0 %511
        %v514 = vadd.f32 %v504, %v512
        %v515 = vtanh.pop %v514
        %517 = vrot.lane.b32.xlu0 %v515, 64
        %v518 = vpop.permute.xlu0 %517
        %v520 = vmul.f32 %v498, %v518
        %522 = vrot.lane.b32.xlu0 %v426, 32
        %v523 = vpop.permute.xlu0 %522
        %vm525 = vcmask 254976
        %526 = vst.msk [vmem:[#allocation2] sm:$0x3] %vm525, %v523
        %528 = vrot.lane.b32.xlu0 %v420, 96
        %v529 = vpop.permute.xlu0 %528
        %531 = vst.msk [vmem:[#allocation3] sm:$0x3] %vm525, %v529
        %533 = vrot.lane.b32.xlu0 %v520, 32
        %v534 = vpop.permute.xlu0 %533
        %536 = vst.msk [vmem:[%s428] sm:$0x3] %vm525, %v534
        %538 = vrot.lane.b32.xlu0 %v514, 96
        %v539 = vpop.permute.xlu0 %538
        %541 = vst.msk [vmem:[%s430] sm:$0x3] %vm525, %v539
        %542 = vst.msk [vmem:[%s314] sm:$0x3] %vm525, %v523
        %543 = vst.msk [vmem:[%s321] sm:$0x3] %vm525, %v534
        %s544 = sand.u32 %s134, 1
        %s545 = scalar_lea.sflag [#allocation6], %s544
        %s546 = sand.u32 %s134, 1
        %s547 = smul.addr %s546, 2
        %s548 = scalar_lea.vmem [#allocation12], %s547
        %s549 = sand.u32 %s162, 1
        %s550 = scalar_lea.sflag [#allocation14], %s549
        %s551 = sand.u32 %s162, 1
        %s552 = smul.addr %s551, 2
        %s553 = scalar_lea.vmem [#allocation13], %s552
        // Predicated region
        $region57: #{_lambda_.11} parent=35 // pred_check
          %p554 = pneg %p144
        $region58: #{_lambda_.11} parent=35 // pred_check_branch
          %556 = sbr.rel (%p554) target = $region60
        $region59: #{_lambda_.11} parent=35 // pred_region
          %s558 = ssub.s32 32, 32
          %559 = vsyncadd %s545, %s558
          %s560 = smul.addr %s30, 32
          %s561 = scalar_lea.hbm %s4, %s560
          %s563 = sshll.u32 %s548, 4
          %s564 = int_to_ptr.vmem [resolvable:$true] %s563
          %566 = dma.vmem_to_hbm [thread:$0]  %s564, 32, %s561, %s545
        $region60: #{_lambda_.11} parent=35 // pred_fallthru
          _
        // Predicated region
        $region61: #{_lambda_.11} parent=35 // pred_check
          %p567 = pneg %p172
        $region62: #{_lambda_.11} parent=35 // pred_check_branch
          %569 = sbr.rel (%p567) target = $region64
        $region63: #{_lambda_.11} parent=35 // pred_region
          %s570 = ssub.s32 7, %s30
          %s572 = ssub.s32 32, 32
          %573 = vsyncadd %s550, %s572
          %s574 = smul.addr %s570, 32
          %s575 = scalar_lea.hbm %s5, %s574
          %s577 = sshll.u32 %s553, 4
          %s578 = int_to_ptr.vmem [resolvable:$true] %s577
          %580 = dma.vmem_to_hbm [thread:$0]  %s578, 32, %s575, %s550
        $region64: #{_lambda_.11} parent=35 // pred_fallthru
          _
      $region36: #{_lambda_.11} parent=5 // pred_fallthru
        _
      %p581 = scmp.le.s32.totalorder 2, %s25
      // Predicated region
      $region65: #{_lambda_.11} parent=5 // pred_check
        %p582 = pneg %p581
      $region66: #{_lambda_.11} parent=5 // pred_check_branch
        %584 = sbr.rel (%p582) target = $region68
      $region67: #{_lambda_.11} parent=5 // pred_region
        %s585 = ssub.s32 %s25, 2
        // Predicated region
        $region69: #{_lambda_.11} parent=67 // pred_check
          %p586 = pneg %p150
        $region70: #{_lambda_.11} parent=67 // pred_check_branch
          %588 = sbr.rel (%p586) target = $region72
        $region71: #{_lambda_.11} parent=67 // pred_region
          %s589 = sand.u32 %s135, 1
          %s590 = scalar_lea.sflag [#allocation6], %s589
          %s591 = sand.u32 %s135, 1
          %s592 = smul.addr %s591, 2
          %s593 = scalar_lea.vmem [#allocation12], %s592
          %594 = dma.done %s590, 32
        $region72: #{_lambda_.11} parent=67 // pred_fallthru
          _
        // Predicated region
        $region73: #{_lambda_.11} parent=67 // pred_check
          %p595 = pneg %p178
        $region74: #{_lambda_.11} parent=67 // pred_check_branch
          %597 = sbr.rel (%p595) target = $region76
        $region75: #{_lambda_.11} parent=67 // pred_region
          %s598 = sand.u32 %s163, 1
          %s599 = scalar_lea.sflag [#allocation14], %s598
          %s600 = sand.u32 %s163, 1
          %s601 = smul.addr %s600, 2
          %s602 = scalar_lea.vmem [#allocation13], %s601
          %603 = dma.done %s599, 32
        $region76: #{_lambda_.11} parent=67 // pred_fallthru
          _
      $region68: #{_lambda_.11} parent=5 // pred_fallthru
        _
    $region6: #{_lambda_.11} parent=1 // loop_footer
      %s29 = sadd.s32 1, %s25
    $region7: #{_lambda_.11} parent=1 // loop_footer_branch
      %24 = sbr.rel target = $region3
    $region8: #{_lambda_.11} parent=1 // loop_exit
      _
    %604 = vsyncpa [#allocation5], 1
    %s605 = scalar_lea.sflag [#allocation5], 1
    %606 = vsyncpa %s605, 1
    %607 = vsyncpa [#allocation8], 1
    %s608 = scalar_lea.sflag [#allocation8], 1
    %609 = vsyncpa %s608, 1
    %610 = vsyncpa [#allocation11], 1
    %611 = vsyncpa [#allocation6], 1
    %s612 = scalar_lea.sflag [#allocation6], 1
    %613 = vsyncpa %s612, 1
    %614 = vsyncpa [#allocation14], 1
    %s615 = scalar_lea.sflag [#allocation14], 1
    %616 = vsyncpa %s615, 1

// kernel: squeeze.4
$region0: #{squeeze.4}
  %s0 = inlined_call_operand.vmem [shape: f32[8,32,1], index: 0, kind: input, shape index: {}]
  %s1 = inlined_call_operand.hbm [shape: f32[1,256], index: 1, kind: output, shape index: {}]
  $region1: #{squeeze.4} parent=0
    #allocation0 [shape = 'u8[1024]{0}', space=vmem, size = 0x400, scoped, tag = 'operand span for operand 1']
    #allocation1 [shape = 's32[1]{0}', space=sflag, size = 0x4, scoped, tag = 'scoped memory for squeeze.4']
    #allocation2 [shape = 'u8[8192]{0}', space=vmem, size = 0x2000, scoped, tag = 'scoped mem for output reshape']
    %2 = vsyncpa [#allocation1], 0
    %s3 = smov 3
    %v4 = vld [vmem:[%s0] ss:$4 sm:%s3]
    %vm5 = vcmask 261120
    %6 = vst.msk [vmem:[#allocation2] ss:$8 sm:$0x3] %vm5, %v4
    %s7 = scalar_lea.vmem %s0, 3
    %s8 = smov 3
    %v9 = vld [vmem:[%s7] ss:$4 sm:%s8]
    %10 = vrot.lane.b32.xlu0 %v9, 96
    %v11 = vpop.permute.xlu0 %10
    %vm12 = vcmask 1048320
    %13 = vst.msk [vmem:[#allocation2] ss:$8 sm:$0x3] %vm12, %v11
    %s14 = scalar_lea.vmem %s0, 2
    %s15 = smov 3
    %v16 = vld [vmem:[%s14] ss:$4 sm:%s15]
    %17 = vrot.lane.b32.xlu0 %v16, 64
    %v18 = vpop.permute.xlu0 %17
    %vm19 = vcmask 785920
    %20 = vst.msk [vmem:[#allocation2] ss:$8 sm:$0x3] %vm19, %v18
    %s21 = scalar_lea.vmem %s0, 1
    %s22 = smov 3
    %v23 = vld [vmem:[%s21] ss:$4 sm:%s22]
    %24 = vrot.lane.b32.xlu0 %v23, 32
    %v25 = vpop.permute.xlu0 %24
    %vm26 = vcmask 523520
    %27 = vst.msk [vmem:[#allocation2] ss:$8 sm:$0x3] %vm26, %v25
    %s29 = sshllo.u32 0, 1
    %v31 = vld [vmem:[#allocation2] sm:%s29]
    %s32 = sshllo.u32 0, 1
    %33 = vst [vmem:[#allocation0] sm:%s32] %v31
    %s34 = scalar_lea.vmem [#allocation2], 8
    %v35 = vld [vmem:[%s34] sm:%s29]
    %s36 = sshllo.u32 0, 1
    %s37 = scalar_lea.vmem [#allocation0], 1
    %38 = vst [vmem:[%s37] sm:%s36] %v35
    %s40 = ssub.s32 32, 32
    %41 = vsyncadd [#allocation1], %s40
    %s43 = sshll.u32 [#allocation0], 4
    %s44 = int_to_ptr.vmem [resolvable:$true] %s43
    %46 = dma.vmem_to_hbm [thread:$0]  %s44, 32, %s1, [#allocation1]
    %47 = dma.done [#allocation1], 32
    %48 = vsyncpa [#allocation1], 1

// kernel: _lambda_.16
$region0: #{_lambda_.16}
  #allocation0 [shape = 'u32[]', space=smem, size = 0x4, offset = 0x4, fixed_abs, tag = 'smem constant byte address 0x4 - core index']
  #allocation1 [shape = 'u32[144,128]{1,0:T(1,128)}', space=vmem, size = 0x12000, scoped, tag = 'internal scratch']
  %s0 = inlined_call_operand.hbm [shape: bf16[16,32], index: 0, kind: input, shape index: {}]
  %s1 = inlined_call_operand.hbm [shape: bf16[16,32], index: 1, kind: input, shape index: {}]
  %s2 = inlined_call_operand.hbm [shape: bf16[32,64], index: 2, kind: input, shape index: {}]
  %s3 = inlined_call_operand.hbm [shape: bf16[32,64], index: 3, kind: input, shape index: {}]
  %s4 = inlined_call_operand.hbm [shape: bf16[32,64], index: 4, kind: input, shape index: {}]
  %s5 = inlined_call_operand.hbm [shape: bf16[32,64], index: 5, kind: input, shape index: {}]
  %s6 = inlined_call_operand.hbm [shape: bf16[32,32], index: 6, kind: input, shape index: {}]
  %s7 = inlined_call_operand.hbm [shape: bf16[32,32], index: 7, kind: input, shape index: {}]
  %s8 = inlined_call_operand.hbm [shape: bf16[32,32], index: 8, kind: input, shape index: {}]
  %s9 = inlined_call_operand.hbm [shape: bf16[32,32], index: 9, kind: input, shape index: {}]
  %s10 = inlined_call_operand.hbm [shape: f32[1,64], index: 10, kind: input, shape index: {}]
  %s11 = inlined_call_operand.hbm [shape: f32[1,64], index: 11, kind: input, shape index: {}]
  %s12 = inlined_call_operand.hbm [shape: f32[1,32], index: 12, kind: input, shape index: {}]
  %s13 = inlined_call_operand.hbm [shape: f32[1,32], index: 13, kind: input, shape index: {}]
  %s14 = inlined_call_operand.hbm [shape: bf16[16,64], index: 14, kind: output, shape index: {0}]
  %s15 = inlined_call_operand.hbm [shape: bf16[16,64], index: 15, kind: output, shape index: {1}]
  %s16 = inlined_call_operand.hbm [shape: bf16[16,32], index: 16, kind: output, shape index: {2}]
  %s17 = inlined_call_operand.hbm [shape: bf16[16,32], index: 17, kind: output, shape index: {3}]
  %18 = xla_tuple %s14, %s15, %s16, %s17
  %s19 = sld [smem:[#allocation0]]
  $region146: #{_lambda_.16} parent=0
    _
  %s21 = ssub.s32 1, %s19
  %s22 = scalar_select 0, %s21, %s19
  $region1: #{_lambda_.16} parent=0
    #allocation2 [shape = 'u8[4096]{0}', space=vmem, size = 0x1000, scoped, tag = 'input window, operand 0, single buffered']
    #allocation3 [shape = 's32[1]{0}', space=sflag, size = 0x4, scoped, tag = 'scoped memory for _lambda_.16']
    #allocation4 [shape = 's32[1]{0}', space=sflag, size = 0x4, scoped, tag = 'scoped memory for _lambda_.16']
    #allocation5 [shape = 'u8[4096]{0}', space=vmem, size = 0x1000, scoped, tag = 'input window, operand 1, single buffered']
    #allocation6 [shape = 's32[1]{0}', space=sflag, size = 0x4, scoped, tag = 'scoped memory for _lambda_.16']
    #allocation7 [shape = 'u8[8192]{0}', space=vmem, size = 0x2000, scoped, tag = 'input window, operand 2, single buffered']
    #allocation8 [shape = 'u8[8192]{0}', space=vmem, size = 0x2000, scoped, tag = 'input window, operand 3, single buffered']
    #allocation9 [shape = 's32[1]{0}', space=sflag, size = 0x4, scoped, tag = 'scoped memory for _lambda_.16']
    #allocation10 [shape = 'u8[8192]{0}', space=vmem, size = 0x2000, scoped, tag = 'input window, operand 4, single buffered']
    #allocation11 [shape = 'u8[8192]{0}', space=vmem, size = 0x2000, scoped, tag = 'input window, operand 5, single buffered']
    #allocation12 [shape = 's32[1]{0}', space=sflag, size = 0x4, scoped, tag = 'scoped memory for _lambda_.16']
    #allocation13 [shape = 'u8[8192]{0}', space=vmem, size = 0x2000, scoped, tag = 'input window, operand 6, single buffered']
    #allocation14 [shape = 'u8[8192]{0}', space=vmem, size = 0x2000, scoped, tag = 'input window, operand 7, single buffered']
    #allocation15 [shape = 's32[1]{0}', space=sflag, size = 0x4, scoped, tag = 'scoped memory for _lambda_.16']
    #allocation16 [shape = 'u8[8192]{0}', space=vmem, size = 0x2000, scoped, tag = 'input window, operand 8, single buffered']
    #allocation17 [shape = 'u8[8192]{0}', space=vmem, size = 0x2000, scoped, tag = 'input window, operand 9, single buffered']
    #allocation18 [shape = 's32[1]{0}', space=sflag, size = 0x4, scoped, tag = 'scoped memory for _lambda_.16']
    #allocation19 [shape = 'u8[512]{0}', space=vmem, size = 0x400, scoped, tag = 'input window, operand 10, single buffered']
    #allocation20 [shape = 'u8[512]{0}', space=vmem, size = 0x400, scoped, tag = 'input window, operand 11, single buffered']
    #allocation21 [shape = 's32[1]{0}', space=sflag, size = 0x4, scoped, tag = 'scoped memory for _lambda_.16']
    #allocation22 [shape = 'u8[512]{0}', space=vmem, size = 0x400, scoped, tag = 'input window, operand 12, single buffered']
    #allocation23 [shape = 'u8[512]{0}', space=vmem, size = 0x400, scoped, tag = 'input window, operand 13, single buffered']
    #allocation24 [shape = 's32[1]{0}', space=sflag, size = 0x4, scoped, tag = 'scoped memory for _lambda_.16']
    #allocation25 [shape = 'u8[4096]{0}', space=vmem, size = 0x1000, scoped, tag = 'output window, operand 0, single buffered']
    #allocation26 [shape = 'u8[4096]{0}', space=vmem, size = 0x1000, scoped, tag = 'output window, operand 1, single buffered']
    #allocation27 [shape = 's32[1]{0}', space=sflag, size = 0x4, scoped, tag = 'scoped memory for _lambda_.16']
    #allocation28 [shape = 'u8[4096]{0}', space=vmem, size = 0x1000, scoped, tag = 'output window, operand 2, single buffered']
    #allocation29 [shape = 'u8[4096]{0}', space=vmem, size = 0x1000, scoped, tag = 'output window, operand 3, single buffered']
    #allocation30 [shape = 's32[1]{0}', space=sflag, size = 0x4, scoped, tag = 'scoped memory for _lambda_.16']
    %23 = vsyncpa [#allocation3], 0
    %24 = vsyncpa [#allocation6], 0
    %25 = vsyncpa [#allocation9], 0
    %26 = vsyncpa [#allocation12], 0
    %27 = vsyncpa [#allocation15], 0
    %28 = vsyncpa [#allocation18], 0
    %29 = vsyncpa [#allocation21], 0
    %30 = vsyncpa [#allocation24], 0
    %31 = vsyncpa [#allocation4], 0
    %32 = vsyncpa [#allocation27], 0
    %33 = vsyncpa [#allocation30], 0
    // Predicated region
    $region2: #{_lambda_.16} parent=1 // pred_check
      _
    $region3: #{_lambda_.16} parent=1 // pred_check_branch
      %35 = sbr.rel (0) target = $region5
    $region4: #{_lambda_.16} parent=1 // pred_region
      %s37 = ssub.s32 128, 128
      %38 = vsyncadd [#allocation3], %s37
      %s39 = sshll.u32 [#allocation2], 4
      %s40 = int_to_ptr.vmem [resolvable:$true] %s39
      %45 = dma.hbm_to_vmem [thread:$0]  %s0, 128, %s40, [#allocation3], 64, 64, 4
    $region5: #{_lambda_.16} parent=1 // pred_fallthru
      _
    // Predicated region
    $region6: #{_lambda_.16} parent=1 // pred_check
      _
    $region7: #{_lambda_.16} parent=1 // pred_check_branch
      %47 = sbr.rel (0) target = $region9
    $region8: #{_lambda_.16} parent=1 // pred_region
      %s49 = ssub.s32 128, 128
      %50 = vsyncadd [#allocation6], %s49
      %s51 = sshll.u32 [#allocation5], 4
      %s52 = int_to_ptr.vmem [resolvable:$true] %s51
      %57 = dma.hbm_to_vmem [thread:$0]  %s1, 128, %s52, [#allocation6], 64, 64, 4
    $region9: #{_lambda_.16} parent=1 // pred_fallthru
      _
    // Predicated region
    $region10: #{_lambda_.16} parent=1 // pred_check
      _
    $region11: #{_lambda_.16} parent=1 // pred_check_branch
      %59 = sbr.rel (0) target = $region13
    $region12: #{_lambda_.16} parent=1 // pred_region
      %s61 = ssub.s32 256, 256
      %62 = vsyncadd [#allocation6], %s61
      %s63 = sshll.u32 [#allocation7], 4
      %s64 = int_to_ptr.vmem [resolvable:$true] %s63
      %69 = dma.hbm_to_vmem [thread:$0]  %s2, 256, %s64, [#allocation6], 64, 64, 4
    $region13: #{_lambda_.16} parent=1 // pred_fallthru
      _
    // Predicated region
    $region14: #{_lambda_.16} parent=1 // pred_check
      _
    $region15: #{_lambda_.16} parent=1 // pred_check_branch
      %71 = sbr.rel (0) target = $region17
    $region16: #{_lambda_.16} parent=1 // pred_region
      %s73 = ssub.s32 256, 256
      %74 = vsyncadd [#allocation9], %s73
      %s75 = sshll.u32 [#allocation8], 4
      %s76 = int_to_ptr.vmem [resolvable:$true] %s75
      %81 = dma.hbm_to_vmem [thread:$0]  %s3, 256, %s76, [#allocation9], 64, 64, 4
    $region17: #{_lambda_.16} parent=1 // pred_fallthru
      _
    // Predicated region
    $region18: #{_lambda_.16} parent=1 // pred_check
      _
    $region19: #{_lambda_.16} parent=1 // pred_check_branch
      %83 = sbr.rel (0) target = $region21
    $region20: #{_lambda_.16} parent=1 // pred_region
      %s85 = ssub.s32 256, 256
      %86 = vsyncadd [#allocation9], %s85
      %s87 = sshll.u32 [#allocation10], 4
      %s88 = int_to_ptr.vmem [resolvable:$true] %s87
      %93 = dma.hbm_to_vmem [thread:$0]  %s4, 256, %s88, [#allocation9], 64, 64, 4
    $region21: #{_lambda_.16} parent=1 // pred_fallthru
      _
    // Predicated region
    $region22: #{_lambda_.16} parent=1 // pred_check
      _
    $region23: #{_lambda_.16} parent=1 // pred_check_branch
      %95 = sbr.rel (0) target = $region25
    $region24: #{_lambda_.16} parent=1 // pred_region
      %s97 = ssub.s32 256, 256
      %98 = vsyncadd [#allocation12], %s97
      %s99 = sshll.u32 [#allocation11], 4
      %s100 = int_to_ptr.vmem [resolvable:$true] %s99
      %105 = dma.hbm_to_vmem [thread:$0]  %s5, 256, %s100, [#allocation12], 64, 64, 4
    $region25: #{_lambda_.16} parent=1 // pred_fallthru
      _
    // Predicated region
    $region26: #{_lambda_.16} parent=1 // pred_check
      _
    $region27: #{_lambda_.16} parent=1 // pred_check_branch
      %107 = sbr.rel (0) target = $region29
    $region28: #{_lambda_.16} parent=1 // pred_region
      %s109 = ssub.s32 256, 256
      %110 = vsyncadd [#allocation12], %s109
      %s111 = sshll.u32 [#allocation13], 4
      %s112 = int_to_ptr.vmem [resolvable:$true] %s111
      %117 = dma.hbm_to_vmem [thread:$0]  %s6, 256, %s112, [#allocation12], 64, 64, 4
    $region29: #{_lambda_.16} parent=1 // pred_fallthru
      _
    // Predicated region
    $region30: #{_lambda_.16} parent=1 // pred_check
      _
    $region31: #{_lambda_.16} parent=1 // pred_check_branch
      %119 = sbr.rel (0) target = $region33
    $region32: #{_lambda_.16} parent=1 // pred_region
      %s121 = ssub.s32 256, 256
      %122 = vsyncadd [#allocation15], %s121
      %s123 = sshll.u32 [#allocation14], 4
      %s124 = int_to_ptr.vmem [resolvable:$true] %s123
      %129 = dma.hbm_to_vmem [thread:$0]  %s7, 256, %s124, [#allocation15], 64, 64, 4
    $region33: #{_lambda_.16} parent=1 // pred_fallthru
      _
    // Predicated region
    $region34: #{_lambda_.16} parent=1 // pred_check
      _
    $region35: #{_lambda_.16} parent=1 // pred_check_branch
      %131 = sbr.rel (0) target = $region37
    $region36: #{_lambda_.16} parent=1 // pred_region
      %s133 = ssub.s32 256, 256
      %134 = vsyncadd [#allocation15], %s133
      %s135 = sshll.u32 [#allocation16], 4
      %s136 = int_to_ptr.vmem [resolvable:$true] %s135
      %141 = dma.hbm_to_vmem [thread:$0]  %s8, 256, %s136, [#allocation15], 64, 64, 4
    $region37: #{_lambda_.16} parent=1 // pred_fallthru
      _
    // Predicated region
    $region38: #{_lambda_.16} parent=1 // pred_check
      _
    $region39: #{_lambda_.16} parent=1 // pred_check_branch
      %143 = sbr.rel (0) target = $region41
    $region40: #{_lambda_.16} parent=1 // pred_region
      %s145 = ssub.s32 256, 256
      %146 = vsyncadd [#allocation18], %s145
      %s147 = sshll.u32 [#allocation17], 4
      %s148 = int_to_ptr.vmem [resolvable:$true] %s147
      %153 = dma.hbm_to_vmem [thread:$0]  %s9, 256, %s148, [#allocation18], 64, 64, 4
    $region41: #{_lambda_.16} parent=1 // pred_fallthru
      _
    // Predicated region
    $region42: #{_lambda_.16} parent=1 // pred_check
      _
    $region43: #{_lambda_.16} parent=1 // pred_check_branch
      %155 = sbr.rel (0) target = $region45
    $region44: #{_lambda_.16} parent=1 // pred_region
      %s157 = ssub.s32 16, 16
      %158 = vsyncadd [#allocation18], %s157
      %s160 = sshll.u32 [#allocation19], 4
      %s161 = int_to_ptr.vmem [resolvable:$true] %s160
      %163 = dma.hbm_to_vmem [thread:$0]  %s10, 16, %s161, [#allocation18]
    $region45: #{_lambda_.16} parent=1 // pred_fallthru
      _
    // Predicated region
    $region46: #{_lambda_.16} parent=1 // pred_check
      _
    $region47: #{_lambda_.16} parent=1 // pred_check_branch
      %165 = sbr.rel (0) target = $region49
    $region48: #{_lambda_.16} parent=1 // pred_region
      %s167 = ssub.s32 16, 16
      %168 = vsyncadd [#allocation21], %s167
      %s170 = sshll.u32 [#allocation20], 4
      %s171 = int_to_ptr.vmem [resolvable:$true] %s170
      %173 = dma.hbm_to_vmem [thread:$0]  %s11, 16, %s171, [#allocation21]
    $region49: #{_lambda_.16} parent=1 // pred_fallthru
      _
    // Predicated region
    $region50: #{_lambda_.16} parent=1 // pred_check
      _
    $region51: #{_lambda_.16} parent=1 // pred_check_branch
      %175 = sbr.rel (0) target = $region53
    $region52: #{_lambda_.16} parent=1 // pred_region
      %s177 = ssub.s32 16, 16
      %178 = vsyncadd [#allocation21], %s177
      %s180 = sshll.u32 [#allocation22], 4
      %s181 = int_to_ptr.vmem [resolvable:$true] %s180
      %183 = dma.hbm_to_vmem [thread:$0]  %s12, 16, %s181, [#allocation21]
    $region53: #{_lambda_.16} parent=1 // pred_fallthru
      _
    // Predicated region
    $region54: #{_lambda_.16} parent=1 // pred_check
      _
    $region55: #{_lambda_.16} parent=1 // pred_check_branch
      %185 = sbr.rel (0) target = $region57
    $region56: #{_lambda_.16} parent=1 // pred_region
      %s187 = ssub.s32 16, 16
      %188 = vsyncadd [#allocation24], %s187
      %s190 = sshll.u32 [#allocation23], 4
      %s191 = int_to_ptr.vmem [resolvable:$true] %s190
      %193 = dma.hbm_to_vmem [thread:$0]  %s13, 16, %s191, [#allocation24]
    $region57: #{_lambda_.16} parent=1 // pred_fallthru
      _
    // Predicated region
    $region58: #{_lambda_.16} parent=1 // pred_check
      _
    $region59: #{_lambda_.16} parent=1 // pred_check_branch
      %195 = sbr.rel (0) target = $region61
    $region60: #{_lambda_.16} parent=1 // pred_region
      %196 = dma.done [#allocation3], 128
    $region61: #{_lambda_.16} parent=1 // pred_fallthru
      _
    // Predicated region
    $region62: #{_lambda_.16} parent=1 // pred_check
      _
    $region63: #{_lambda_.16} parent=1 // pred_check_branch
      %198 = sbr.rel (0) target = $region65
    $region64: #{_lambda_.16} parent=1 // pred_region
      %199 = dma.done [#allocation6], 128
    $region65: #{_lambda_.16} parent=1 // pred_fallthru
      _
    // Predicated region
    $region66: #{_lambda_.16} parent=1 // pred_check
      _
    $region67: #{_lambda_.16} parent=1 // pred_check_branch
      %201 = sbr.rel (0) target = $region69
    $region68: #{_lambda_.16} parent=1 // pred_region
      %202 = dma.done [#allocation6], 256
    $region69: #{_lambda_.16} parent=1 // pred_fallthru
      _
    // Predicated region
    $region70: #{_lambda_.16} parent=1 // pred_check
      _
    $region71: #{_lambda_.16} parent=1 // pred_check_branch
      %204 = sbr.rel (0) target = $region73
    $region72: #{_lambda_.16} parent=1 // pred_region
      %205 = dma.done [#allocation9], 256
    $region73: #{_lambda_.16} parent=1 // pred_fallthru
      _
    // Predicated region
    $region74: #{_lambda_.16} parent=1 // pred_check
      _
    $region75: #{_lambda_.16} parent=1 // pred_check_branch
      %207 = sbr.rel (0) target = $region77
    $region76: #{_lambda_.16} parent=1 // pred_region
      %208 = dma.done [#allocation9], 256
    $region77: #{_lambda_.16} parent=1 // pred_fallthru
      _
    // Predicated region
    $region78: #{_lambda_.16} parent=1 // pred_check
      _
    $region79: #{_lambda_.16} parent=1 // pred_check_branch
      %210 = sbr.rel (0) target = $region81
    $region80: #{_lambda_.16} parent=1 // pred_region
      %211 = dma.done [#allocation12], 256
    $region81: #{_lambda_.16} parent=1 // pred_fallthru
      _
    // Predicated region
    $region82: #{_lambda_.16} parent=1 // pred_check
      _
    $region83: #{_lambda_.16} parent=1 // pred_check_branch
      %213 = sbr.rel (0) target = $region85
    $region84: #{_lambda_.16} parent=1 // pred_region
      %214 = dma.done [#allocation12], 256
    $region85: #{_lambda_.16} parent=1 // pred_fallthru
      _
    // Predicated region
    $region86: #{_lambda_.16} parent=1 // pred_check
      _
    $region87: #{_lambda_.16} parent=1 // pred_check_branch
      %216 = sbr.rel (0) target = $region89
    $region88: #{_lambda_.16} parent=1 // pred_region
      %217 = dma.done [#allocation15], 256
    $region89: #{_lambda_.16} parent=1 // pred_fallthru
      _
    // Predicated region
    $region90: #{_lambda_.16} parent=1 // pred_check
      _
    $region91: #{_lambda_.16} parent=1 // pred_check_branch
      %219 = sbr.rel (0) target = $region93
    $region92: #{_lambda_.16} parent=1 // pred_region
      %220 = dma.done [#allocation15], 256
    $region93: #{_lambda_.16} parent=1 // pred_fallthru
      _
    // Predicated region
    $region94: #{_lambda_.16} parent=1 // pred_check
      _
    $region95: #{_lambda_.16} parent=1 // pred_check_branch
      %222 = sbr.rel (0) target = $region97
    $region96: #{_lambda_.16} parent=1 // pred_region
      %223 = dma.done [#allocation18], 256
    $region97: #{_lambda_.16} parent=1 // pred_fallthru
      _
    // Predicated region
    $region98: #{_lambda_.16} parent=1 // pred_check
      _
    $region99: #{_lambda_.16} parent=1 // pred_check_branch
      %225 = sbr.rel (0) target = $region101
    $region100: #{_lambda_.16} parent=1 // pred_region
      %226 = dma.done [#allocation18], 16
    $region101: #{_lambda_.16} parent=1 // pred_fallthru
      _
    // Predicated region
    $region102: #{_lambda_.16} parent=1 // pred_check
      _
    $region103: #{_lambda_.16} parent=1 // pred_check_branch
      %228 = sbr.rel (0) target = $region105
    $region104: #{_lambda_.16} parent=1 // pred_region
      %229 = dma.done [#allocation21], 16
    $region105: #{_lambda_.16} parent=1 // pred_fallthru
      _
    // Predicated region
    $region106: #{_lambda_.16} parent=1 // pred_check
      _
    $region107: #{_lambda_.16} parent=1 // pred_check_branch
      %231 = sbr.rel (0) target = $region109
    $region108: #{_lambda_.16} parent=1 // pred_region
      %232 = dma.done [#allocation21], 16
    $region109: #{_lambda_.16} parent=1 // pred_fallthru
      _
    // Predicated region
    $region110: #{_lambda_.16} parent=1 // pred_check
      _
    $region111: #{_lambda_.16} parent=1 // pred_check_branch
      %234 = sbr.rel (0) target = $region113
    $region112: #{_lambda_.16} parent=1 // pred_region
      %235 = dma.done [#allocation24], 16
    $region113: #{_lambda_.16} parent=1 // pred_fallthru
      _
    %v237 = vld [vmem:[#allocation2] sm:$0xf]
    %v238 = vld [vmem:[#allocation2 + $0x4] sm:$0xf]
    %v239 = vld [vmem:[#allocation5] sm:$0xf]
    %v240 = vld [vmem:[#allocation5 + $0x4] sm:$0xf]
    %v241 = vld [vmem:[#allocation19] sm:$0x1]
    %v242 = vld [vmem:[#allocation7] sm:$0xf]
    %v243 = vld [vmem:[#allocation7 + $0x4] sm:$0xf]
    %v244 = vld [vmem:[#allocation7 + $0x8] sm:$0xf]
    %v245 = vld [vmem:[#allocation7 + $0xc] sm:$0xf]
    %v248 = vunpack.c.l.b16 %v237
    %v249 = vunpack.c.l.b16 %v238
    %v250 = vpack.c.b16 %v249, %v248
    %v255 = vunpack.c.l.b16 %v242
    %v256 = vunpack.c.l.b16 %v243
    %v257 = vunpack.c.l.b16 %v244
    %v258 = vunpack.c.l.b16 %v245
    %v259 = vpack.c.b16 %v256, %v255
    %v260 = vpack.c.b16 %v258, %v257
    %vm263 = vcmask 261120
    %v265 = vsel %vm263, %v250, 0
    %267 = vmatprep.subr.bf16.mxu0 0
    %268 = vmatpush1.bf16.msra.mxu0 %v259
    %269 = vmatprep.subr.bf16.mxu0 0
    %270 = vmatpush1.bf16.msra.mxu0 %v260
    %271 = vmatprep.subr.bf16.mxu0 0
    %272 = vmatpush1.bf16.msra.mxu0 0
    %273 = vmatprep.subr.bf16.mxu0 0
    %274 = vmatpush1.bf16.msra.mxu0 0
    %275 = vmatprep.subr.bf16.mxu0 0
    %276 = vmatpush1.bf16.msra.mxu0 0
    %277 = vmatprep.subr.bf16.mxu0 0
    %278 = vmatpush1.bf16.msra.mxu0 0
    %279 = vmatprep.subr.bf16.mxu0 0
    %280 = vmatpush1.bf16.msra.mxu0 0
    %281 = vmatprep.subr.bf16.mxu0 0
    %282 = vmatpush1.bf16.msra.mxu0 0
    %283 = vmatprep.subr.bf16.mxu0 0
    %284 = vmatpush1.bf16.msra.mxu0 0
    %285 = vmatprep.subr.bf16.mxu0 0
    %286 = vmatpush1.bf16.msra.mxu0 0
    %287 = vmatprep.subr.bf16.mxu0 0
    %288 = vmatpush1.bf16.msra.mxu0 0
    %289 = vmatprep.subr.bf16.mxu0 0
    %290 = vmatpush1.bf16.msra.mxu0 0
    %291 = vmatprep.subr.bf16.mxu0 0
    %292 = vmatpush1.bf16.msra.mxu0 0
    %293 = vmatprep.subr.bf16.mxu0 0
    %294 = vmatpush1.bf16.msra.mxu0 0
    %295 = vmatprep.subr.bf16.mxu0 0
    %296 = vmatpush1.bf16.msra.mxu0 0
    %297 = vmatprep.subr.bf16.mxu0 0
    %298 = vmatpush1.bf16.msra.mxu0 0
    %299 = vmatprep.mubr.bf16.mxu0 0
    %300 = vmatmul.mubr.bf16.gmra.mrb[0].mxu0 %v265
    %v301 = vpop.f32.mrb[0].mxu0
    %v302 = vadd.f32 0.0, %v301
    %v303 = vpop.f32.mrb[0].mxu0
    %v304 = vpop.f32.mrb[0].mxu0
    %v305 = vadd.f32 0.0, %v304
    %v306 = vpop.f32.mrb[0].mxu0
    %307 = vdwg.mxu0
    %v309 = vlaneseq
    %v310 = vshrl.u32 %v309, 7
    %v311 = vsub.s32 0, %v310
    %v312 = vrot.slane %v241, %v311
    %v314 = vadd.f32 %v312, %v302
    %v315 = vadd.f32 %v312, %v305
    %v316 = vld [vmem:[#allocation8] sm:$0xf]
    %v317 = vld [vmem:[#allocation8 + $0x4] sm:$0xf]
    %v318 = vld [vmem:[#allocation8 + $0x8] sm:$0xf]
    %v319 = vld [vmem:[#allocation8 + $0xc] sm:$0xf]
    %v322 = vunpack.c.l.b16 %v239
    %v323 = vunpack.c.l.b16 %v240
    %v324 = vpack.c.b16 %v323, %v322
    %v329 = vunpack.c.l.b16 %v316
    %v330 = vunpack.c.l.b16 %v317
    %v331 = vunpack.c.l.b16 %v318
    %v332 = vunpack.c.l.b16 %v319
    %v333 = vpack.c.b16 %v330, %v329
    %v334 = vpack.c.b16 %v332, %v331
    %v338 = vsel %vm263, %v324, 0
    %340 = vmatprep.subr.bf16.mxu0 0
    %341 = vmatpush1.bf16.msra.mxu0 %v333
    %342 = vmatprep.subr.bf16.mxu0 0
    %343 = vmatpush1.bf16.msra.mxu0 %v334
    %344 = vmatprep.subr.bf16.mxu0 0
    %345 = vmatpush1.bf16.msra.mxu0 0
    %346 = vmatprep.subr.bf16.mxu0 0
    %347 = vmatpush1.bf16.msra.mxu0 0
    %348 = vmatprep.subr.bf16.mxu0 0
    %349 = vmatpush1.bf16.msra.mxu0 0
    %350 = vmatprep.subr.bf16.mxu0 0
    %351 = vmatpush1.bf16.msra.mxu0 0
    %352 = vmatprep.subr.bf16.mxu0 0
    %353 = vmatpush1.bf16.msra.mxu0 0
    %354 = vmatprep.subr.bf16.mxu0 0
    %355 = vmatpush1.bf16.msra.mxu0 0
    %356 = vmatprep.subr.bf16.mxu0 0
    %357 = vmatpush1.bf16.msra.mxu0 0
    %358 = vmatprep.subr.bf16.mxu0 0
    %359 = vmatpush1.bf16.msra.mxu0 0
    %360 = vmatprep.subr.bf16.mxu0 0
    %361 = vmatpush1.bf16.msra.mxu0 0
    %362 = vmatprep.subr.bf16.mxu0 0
    %363 = vmatpush1.bf16.msra.mxu0 0
    %364 = vmatprep.subr.bf16.mxu0 0
    %365 = vmatpush1.bf16.msra.mxu0 0
    %366 = vmatprep.subr.bf16.mxu0 0
    %367 = vmatpush1.bf16.msra.mxu0 0
    %368 = vmatprep.subr.bf16.mxu0 0
    %369 = vmatpush1.bf16.msra.mxu0 0
    %370 = vmatprep.subr.bf16.mxu0 0
    %371 = vmatpush1.bf16.msra.mxu0 0
    %372 = vmatprep.mubr.bf16.mxu0 0
    %373 = vmatmul.mubr.bf16.gmra.mrb[0].mxu0 %v338
    %v374 = vpop.f32.mrb[0].mxu0
    %v375 = vadd.f32 0.0, %v374
    %v376 = vpop.f32.mrb[0].mxu0
    %v377 = vpop.f32.mrb[0].mxu0
    %v378 = vadd.f32 0.0, %v377
    %v379 = vpop.f32.mrb[0].mxu0
    %380 = vdwg.mxu0
    %v381 = vadd.f32 %v314, %v375
    %v382 = vadd.f32 %v315, %v378
    %v383 = vmul.f32 %v381, 0.1
    %v384 = vmul.f32 %v382, 0.1
    %v385 = vmax.f32 %v381, %v383
    %v386 = vmax.f32 %v382, %v384
    %v387 = vpack.c.bf16 %v386, %v385
    %v389 = vunpack.c.l.b16 %v387
    %v390 = vunpack.c.h.b16 %v387
    %v391 = vpack.c.b16 %v389, %v389
    %v392 = vpack.c.b16 %v390, %v390
    %vm395 = vcmask 519168
    %396 = vst.msk [vmem:[#allocation25] sm:$0xf] %vm395, %v391
    %397 = vst.msk [vmem:[#allocation25 + $0x4] sm:$0xf] %vm395, %v392
    %v398 = vld [vmem:[#allocation20] sm:$0x1]
    %v399 = vld [vmem:[#allocation10] sm:$0xf]
    %v400 = vld [vmem:[#allocation10 + $0x4] sm:$0xf]
    %v401 = vld [vmem:[#allocation10 + $0x8] sm:$0xf]
    %v402 = vld [vmem:[#allocation10 + $0xc] sm:$0xf]
    %v407 = vunpack.c.l.b16 %v399
    %v408 = vunpack.c.l.b16 %v400
    %v409 = vunpack.c.l.b16 %v401
    %v410 = vunpack.c.l.b16 %v402
    %v411 = vpack.c.b16 %v408, %v407
    %v412 = vpack.c.b16 %v410, %v409
    %415 = vmatprep.subr.bf16.mxu0 0
    %416 = vmatpush1.bf16.msra.mxu0 %v411
    %417 = vmatprep.subr.bf16.mxu0 0
    %418 = vmatpush1.bf16.msra.mxu0 %v412
    %419 = vmatprep.subr.bf16.mxu0 0
    %420 = vmatpush1.bf16.msra.mxu0 0
    %421 = vmatprep.subr.bf16.mxu0 0
    %422 = vmatpush1.bf16.msra.mxu0 0
    %423 = vmatprep.subr.bf16.mxu0 0
    %424 = vmatpush1.bf16.msra.mxu0 0
    %425 = vmatprep.subr.bf16.mxu0 0
    %426 = vmatpush1.bf16.msra.mxu0 0
    %427 = vmatprep.subr.bf16.mxu0 0
    %428 = vmatpush1.bf16.msra.mxu0 0
    %429 = vmatprep.subr.bf16.mxu0 0
    %430 = vmatpush1.bf16.msra.mxu0 0
    %431 = vmatprep.subr.bf16.mxu0 0
    %432 = vmatpush1.bf16.msra.mxu0 0
    %433 = vmatprep.subr.bf16.mxu0 0
    %434 = vmatpush1.bf16.msra.mxu0 0
    %435 = vmatprep.subr.bf16.mxu0 0
    %436 = vmatpush1.bf16.msra.mxu0 0
    %437 = vmatprep.subr.bf16.mxu0 0
    %438 = vmatpush1.bf16.msra.mxu0 0
    %439 = vmatprep.subr.bf16.mxu0 0
    %440 = vmatpush1.bf16.msra.mxu0 0
    %441 = vmatprep.subr.bf16.mxu0 0
    %442 = vmatpush1.bf16.msra.mxu0 0
    %443 = vmatprep.subr.bf16.mxu0 0
    %444 = vmatpush1.bf16.msra.mxu0 0
    %445 = vmatprep.subr.bf16.mxu0 0
    %446 = vmatpush1.bf16.msra.mxu0 0
    %447 = vmatprep.mubr.bf16.mxu0 0
    %448 = vmatmul.mubr.bf16.gmra.mrb[0].mxu0 %v265
    %v449 = vpop.f32.mrb[0].mxu0
    %v450 = vadd.f32 0.0, %v449
    %v451 = vpop.f32.mrb[0].mxu0
    %v452 = vpop.f32.mrb[0].mxu0
    %v453 = vadd.f32 0.0, %v452
    %v454 = vpop.f32.mrb[0].mxu0
    %455 = vdwg.mxu0
    %v457 = vlaneseq
    %v458 = vshrl.u32 %v457, 7
    %v459 = vsub.s32 0, %v458
    %v460 = vrot.slane %v398, %v459
    %v462 = vadd.f32 %v460, %v450
    %v463 = vadd.f32 %v460, %v453
    %v464 = vld [vmem:[#allocation11] sm:$0xf]
    %v465 = vld [vmem:[#allocation11 + $0x4] sm:$0xf]
    %v466 = vld [vmem:[#allocation11 + $0x8] sm:$0xf]
    %v467 = vld [vmem:[#allocation11 + $0xc] sm:$0xf]
    %v472 = vunpack.c.l.b16 %v464
    %v473 = vunpack.c.l.b16 %v465
    %v474 = vunpack.c.l.b16 %v466
    %v475 = vunpack.c.l.b16 %v467
    %v476 = vpack.c.b16 %v473, %v472
    %v477 = vpack.c.b16 %v475, %v474
    %480 = vmatprep.subr.bf16.mxu0 0
    %481 = vmatpush1.bf16.msra.mxu0 %v476
    %482 = vmatprep.subr.bf16.mxu0 0
    %483 = vmatpush1.bf16.msra.mxu0 %v477
    %484 = vmatprep.subr.bf16.mxu0 0
    %485 = vmatpush1.bf16.msra.mxu0 0
    %486 = vmatprep.subr.bf16.mxu0 0
    %487 = vmatpush1.bf16.msra.mxu0 0
    %488 = vmatprep.subr.bf16.mxu0 0
    %489 = vmatpush1.bf16.msra.mxu0 0
    %490 = vmatprep.subr.bf16.mxu0 0
    %491 = vmatpush1.bf16.msra.mxu0 0
    %492 = vmatprep.subr.bf16.mxu0 0
    %493 = vmatpush1.bf16.msra.mxu0 0
    %494 = vmatprep.subr.bf16.mxu0 0
    %495 = vmatpush1.bf16.msra.mxu0 0
    %496 = vmatprep.subr.bf16.mxu0 0
    %497 = vmatpush1.bf16.msra.mxu0 0
    %498 = vmatprep.subr.bf16.mxu0 0
    %499 = vmatpush1.bf16.msra.mxu0 0
    %500 = vmatprep.subr.bf16.mxu0 0
    %501 = vmatpush1.bf16.msra.mxu0 0
    %502 = vmatprep.subr.bf16.mxu0 0
    %503 = vmatpush1.bf16.msra.mxu0 0
    %504 = vmatprep.subr.bf16.mxu0 0
    %505 = vmatpush1.bf16.msra.mxu0 0
    %506 = vmatprep.subr.bf16.mxu0 0
    %507 = vmatpush1.bf16.msra.mxu0 0
    %508 = vmatprep.subr.bf16.mxu0 0
    %509 = vmatpush1.bf16.msra.mxu0 0
    %510 = vmatprep.subr.bf16.mxu0 0
    %511 = vmatpush1.bf16.msra.mxu0 0
    %512 = vmatprep.mubr.bf16.mxu0 0
    %513 = vmatmul.mubr.bf16.gmra.mrb[0].mxu0 %v338
    %v514 = vpop.f32.mrb[0].mxu0
    %v515 = vadd.f32 0.0, %v514
    %v516 = vpop.f32.mrb[0].mxu0
    %v517 = vpop.f32.mrb[0].mxu0
    %v518 = vadd.f32 0.0, %v517
    %v519 = vpop.f32.mrb[0].mxu0
    %520 = vdwg.mxu0
    %v521 = vadd.f32 %v462, %v515
    %v522 = vadd.f32 %v463, %v518
    %v523 = vmul.f32 %v521, 0.1
    %v524 = vmul.f32 %v522, 0.1
    %v525 = vmax.f32 %v521, %v523
    %v526 = vmax.f32 %v522, %v524
    %v527 = vpack.c.bf16 %v526, %v525
    %v529 = vunpack.c.l.b16 %v527
    %v530 = vunpack.c.h.b16 %v527
    %v531 = vpack.c.b16 %v529, %v529
    %v532 = vpack.c.b16 %v530, %v530
    %535 = vst.msk [vmem:[#allocation26] sm:$0xf] %vm395, %v531
    %536 = vst.msk [vmem:[#allocation26 + $0x4] sm:$0xf] %vm395, %v532
    %v537 = vld [vmem:[#allocation22] sm:$0x1]
    %v538 = vld [vmem:[#allocation13] sm:$0xf]
    %v539 = vld [vmem:[#allocation13 + $0x4] sm:$0xf]
    %v540 = vld [vmem:[#allocation13 + $0x8] sm:$0xf]
    %v541 = vld [vmem:[#allocation13 + $0xc] sm:$0xf]
    %v546 = vunpack.c.l.b16 %v538
    %v547 = vunpack.c.l.b16 %v539
    %v548 = vunpack.c.l.b16 %v540
    %v549 = vunpack.c.l.b16 %v541
    %v550 = vpack.c.b16 %v547, %v546
    %v551 = vpack.c.b16 %v549, %v548
    %554 = vmatprep.subr.bf16.mxu0 0
    %555 = vmatpush1.bf16.msra.mxu0 %v550
    %556 = vmatprep.subr.bf16.mxu0 0
    %557 = vmatpush1.bf16.msra.mxu0 %v551
    %558 = vmatprep.subr.bf16.mxu0 0
    %559 = vmatpush1.bf16.msra.mxu0 0
    %560 = vmatprep.subr.bf16.mxu0 0
    %561 = vmatpush1.bf16.msra.mxu0 0
    %562 = vmatprep.subr.bf16.mxu0 0
    %563 = vmatpush1.bf16.msra.mxu0 0
    %564 = vmatprep.subr.bf16.mxu0 0
    %565 = vmatpush1.bf16.msra.mxu0 0
    %566 = vmatprep.subr.bf16.mxu0 0
    %567 = vmatpush1.bf16.msra.mxu0 0
    %568 = vmatprep.subr.bf16.mxu0 0
    %569 = vmatpush1.bf16.msra.mxu0 0
    %570 = vmatprep.subr.bf16.mxu0 0
    %571 = vmatpush1.bf16.msra.mxu0 0
    %572 = vmatprep.subr.bf16.mxu0 0
    %573 = vmatpush1.bf16.msra.mxu0 0
    %574 = vmatprep.subr.bf16.mxu0 0
    %575 = vmatpush1.bf16.msra.mxu0 0
    %576 = vmatprep.subr.bf16.mxu0 0
    %577 = vmatpush1.bf16.msra.mxu0 0
    %578 = vmatprep.subr.bf16.mxu0 0
    %579 = vmatpush1.bf16.msra.mxu0 0
    %580 = vmatprep.subr.bf16.mxu0 0
    %581 = vmatpush1.bf16.msra.mxu0 0
    %582 = vmatprep.subr.bf16.mxu0 0
    %583 = vmatpush1.bf16.msra.mxu0 0
    %584 = vmatprep.subr.bf16.mxu0 0
    %585 = vmatpush1.bf16.msra.mxu0 0
    %586 = vmatprep.mubr.bf16.mxu0 0
    %587 = vmatmul.mubr.bf16.gmra.mrb[0].mxu0 %v265
    %v588 = vpop.f32.mrb[0].mxu0
    %v589 = vadd.f32 0.0, %v588
    %v590 = vpop.f32.mrb[0].mxu0
    %v591 = vpop.f32.mrb[0].mxu0
    %v592 = vadd.f32 0.0, %v591
    %v593 = vpop.f32.mrb[0].mxu0
    %594 = vdwg.mxu0
    %v596 = vlaneseq
    %v597 = vshrl.u32 %v596, 7
    %v598 = vsub.s32 0, %v597
    %v599 = vrot.slane %v537, %v598
    %v601 = vadd.f32 %v599, %v589
    %v602 = vadd.f32 %v599, %v592
    %v603 = vld [vmem:[#allocation14] sm:$0xf]
    %v604 = vld [vmem:[#allocation14 + $0x4] sm:$0xf]
    %v605 = vld [vmem:[#allocation14 + $0x8] sm:$0xf]
    %v606 = vld [vmem:[#allocation14 + $0xc] sm:$0xf]
    %v611 = vunpack.c.l.b16 %v603
    %v612 = vunpack.c.l.b16 %v604
    %v613 = vunpack.c.l.b16 %v605
    %v614 = vunpack.c.l.b16 %v606
    %v615 = vpack.c.b16 %v612, %v611
    %v616 = vpack.c.b16 %v614, %v613
    %619 = vmatprep.subr.bf16.mxu0 0
    %620 = vmatpush1.bf16.msra.mxu0 %v615
    %621 = vmatprep.subr.bf16.mxu0 0
    %622 = vmatpush1.bf16.msra.mxu0 %v616
    %623 = vmatprep.subr.bf16.mxu0 0
    %624 = vmatpush1.bf16.msra.mxu0 0
    %625 = vmatprep.subr.bf16.mxu0 0
    %626 = vmatpush1.bf16.msra.mxu0 0
    %627 = vmatprep.subr.bf16.mxu0 0
    %628 = vmatpush1.bf16.msra.mxu0 0
    %629 = vmatprep.subr.bf16.mxu0 0
    %630 = vmatpush1.bf16.msra.mxu0 0
    %631 = vmatprep.subr.bf16.mxu0 0
    %632 = vmatpush1.bf16.msra.mxu0 0
    %633 = vmatprep.subr.bf16.mxu0 0
    %634 = vmatpush1.bf16.msra.mxu0 0
    %635 = vmatprep.subr.bf16.mxu0 0
    %636 = vmatpush1.bf16.msra.mxu0 0
    %637 = vmatprep.subr.bf16.mxu0 0
    %638 = vmatpush1.bf16.msra.mxu0 0
    %639 = vmatprep.subr.bf16.mxu0 0
    %640 = vmatpush1.bf16.msra.mxu0 0
    %641 = vmatprep.subr.bf16.mxu0 0
    %642 = vmatpush1.bf16.msra.mxu0 0
    %643 = vmatprep.subr.bf16.mxu0 0
    %644 = vmatpush1.bf16.msra.mxu0 0
    %645 = vmatprep.subr.bf16.mxu0 0
    %646 = vmatpush1.bf16.msra.mxu0 0
    %647 = vmatprep.subr.bf16.mxu0 0
    %648 = vmatpush1.bf16.msra.mxu0 0
    %649 = vmatprep.subr.bf16.mxu0 0
    %650 = vmatpush1.bf16.msra.mxu0 0
    %651 = vmatprep.mubr.bf16.mxu0 0
    %652 = vmatmul.mubr.bf16.gmra.mrb[0].mxu0 %v338
    %v653 = vpop.f32.mrb[0].mxu0
    %v654 = vadd.f32 0.0, %v653
    %v655 = vpop.f32.mrb[0].mxu0
    %v656 = vpop.f32.mrb[0].mxu0
    %v657 = vadd.f32 0.0, %v656
    %v658 = vpop.f32.mrb[0].mxu0
    %659 = vdwg.mxu0
    %v660 = vadd.f32 %v601, %v654
    %v661 = vadd.f32 %v602, %v657
    %v662 = vmul.f32 %v660, 0.1
    %v663 = vmul.f32 %v661, 0.1
    %v664 = vmax.f32 %v660, %v662
    %v665 = vmax.f32 %v661, %v663
    %v666 = vpack.c.bf16 %v665, %v664
    %v668 = vunpack.c.l.b16 %v666
    %v669 = vunpack.c.h.b16 %v666
    %v670 = vpack.c.b16 %v668, %v668
    %v671 = vpack.c.b16 %v669, %v669
    %vm674 = vcmask 257024
    %675 = vst.msk [vmem:[#allocation28] sm:$0xf] %vm674, %v670
    %676 = vst.msk [vmem:[#allocation28 + $0x4] sm:$0xf] %vm674, %v671
    %v677 = vld [vmem:[#allocation23] sm:$0x1]
    %v678 = vld [vmem:[#allocation16] sm:$0xf]
    %v679 = vld [vmem:[#allocation16 + $0x4] sm:$0xf]
    %v680 = vld [vmem:[#allocation16 + $0x8] sm:$0xf]
    %v681 = vld [vmem:[#allocation16 + $0xc] sm:$0xf]
    %v686 = vunpack.c.l.b16 %v678
    %v687 = vunpack.c.l.b16 %v679
    %v688 = vunpack.c.l.b16 %v680
    %v689 = vunpack.c.l.b16 %v681
    %v690 = vpack.c.b16 %v687, %v686
    %v691 = vpack.c.b16 %v689, %v688
    %694 = vmatprep.subr.bf16.mxu0 0
    %695 = vmatpush1.bf16.msra.mxu0 %v690
    %696 = vmatprep.subr.bf16.mxu0 0
    %697 = vmatpush1.bf16.msra.mxu0 %v691
    %698 = vmatprep.subr.bf16.mxu0 0
    %699 = vmatpush1.bf16.msra.mxu0 0
    %700 = vmatprep.subr.bf16.mxu0 0
    %701 = vmatpush1.bf16.msra.mxu0 0
    %702 = vmatprep.subr.bf16.mxu0 0
    %703 = vmatpush1.bf16.msra.mxu0 0
    %704 = vmatprep.subr.bf16.mxu0 0
    %705 = vmatpush1.bf16.msra.mxu0 0
    %706 = vmatprep.subr.bf16.mxu0 0
    %707 = vmatpush1.bf16.msra.mxu0 0
    %708 = vmatprep.subr.bf16.mxu0 0
    %709 = vmatpush1.bf16.msra.mxu0 0
    %710 = vmatprep.subr.bf16.mxu0 0
    %711 = vmatpush1.bf16.msra.mxu0 0
    %712 = vmatprep.subr.bf16.mxu0 0
    %713 = vmatpush1.bf16.msra.mxu0 0
    %714 = vmatprep.subr.bf16.mxu0 0
    %715 = vmatpush1.bf16.msra.mxu0 0
    %716 = vmatprep.subr.bf16.mxu0 0
    %717 = vmatpush1.bf16.msra.mxu0 0
    %718 = vmatprep.subr.bf16.mxu0 0
    %719 = vmatpush1.bf16.msra.mxu0 0
    %720 = vmatprep.subr.bf16.mxu0 0
    %721 = vmatpush1.bf16.msra.mxu0 0
    %722 = vmatprep.subr.bf16.mxu0 0
    %723 = vmatpush1.bf16.msra.mxu0 0
    %724 = vmatprep.subr.bf16.mxu0 0
    %725 = vmatpush1.bf16.msra.mxu0 0
    %726 = vmatprep.mubr.bf16.mxu0 0
    %727 = vmatmul.mubr.bf16.gmra.mrb[0].mxu0 %v265
    %v728 = vpop.f32.mrb[0].mxu0
    %v729 = vadd.f32 0.0, %v728
    %v730 = vpop.f32.mrb[0].mxu0
    %v731 = vpop.f32.mrb[0].mxu0
    %v732 = vadd.f32 0.0, %v731
    %v733 = vpop.f32.mrb[0].mxu0
    %734 = vdwg.mxu0
    %v736 = vlaneseq
    %v737 = vshrl.u32 %v736, 7
    %v738 = vsub.s32 0, %v737
    %v739 = vrot.slane %v677, %v738
    %v741 = vadd.f32 %v739, %v729
    %v742 = vadd.f32 %v739, %v732
    %v743 = vld [vmem:[#allocation17] sm:$0xf]
    %v744 = vld [vmem:[#allocation17 + $0x4] sm:$0xf]
    %v745 = vld [vmem:[#allocation17 + $0x8] sm:$0xf]
    %v746 = vld [vmem:[#allocation17 + $0xc] sm:$0xf]
    %v751 = vunpack.c.l.b16 %v743
    %v752 = vunpack.c.l.b16 %v744
    %v753 = vunpack.c.l.b16 %v745
    %v754 = vunpack.c.l.b16 %v746
    %v755 = vpack.c.b16 %v752, %v751
    %v756 = vpack.c.b16 %v754, %v753
    %759 = vmatprep.subr.bf16.mxu0 0
    %760 = vmatpush1.bf16.msra.mxu0 %v755
    %761 = vmatprep.subr.bf16.mxu0 0
    %762 = vmatpush1.bf16.msra.mxu0 %v756
    %763 = vmatprep.subr.bf16.mxu0 0
    %764 = vmatpush1.bf16.msra.mxu0 0
    %765 = vmatprep.subr.bf16.mxu0 0
    %766 = vmatpush1.bf16.msra.mxu0 0
    %767 = vmatprep.subr.bf16.mxu0 0
    %768 = vmatpush1.bf16.msra.mxu0 0
    %769 = vmatprep.subr.bf16.mxu0 0
    %770 = vmatpush1.bf16.msra.mxu0 0
    %771 = vmatprep.subr.bf16.mxu0 0
    %772 = vmatpush1.bf16.msra.mxu0 0
    %773 = vmatprep.subr.bf16.mxu0 0
    %774 = vmatpush1.bf16.msra.mxu0 0
    %775 = vmatprep.subr.bf16.mxu0 0
    %776 = vmatpush1.bf16.msra.mxu0 0
    %777 = vmatprep.subr.bf16.mxu0 0
    %778 = vmatpush1.bf16.msra.mxu0 0
    %779 = vmatprep.subr.bf16.mxu0 0
    %780 = vmatpush1.bf16.msra.mxu0 0
    %781 = vmatprep.subr.bf16.mxu0 0
    %782 = vmatpush1.bf16.msra.mxu0 0
    %783 = vmatprep.subr.bf16.mxu0 0
    %784 = vmatpush1.bf16.msra.mxu0 0
    %785 = vmatprep.subr.bf16.mxu0 0
    %786 = vmatpush1.bf16.msra.mxu0 0
    %787 = vmatprep.subr.bf16.mxu0 0
    %788 = vmatpush1.bf16.msra.mxu0 0
    %789 = vmatprep.subr.bf16.mxu0 0
    %790 = vmatpush1.bf16.msra.mxu0 0
    %791 = vmatprep.mubr.bf16.mxu0 0
    %792 = vmatmul.mubr.bf16.gmra.mrb[0].mxu0 %v338
    %v793 = vpop.f32.mrb[0].mxu0
    %v794 = vadd.f32 0.0, %v793
    %v795 = vpop.f32.mrb[0].mxu0
    %v796 = vpop.f32.mrb[0].mxu0
    %v797 = vadd.f32 0.0, %v796
    %v798 = vpop.f32.mrb[0].mxu0
    %799 = vdwg.mxu0
    %v800 = vadd.f32 %v741, %v794
    %v801 = vadd.f32 %v742, %v797
    %v802 = vmul.f32 %v800, 0.1
    %v803 = vmul.f32 %v801, 0.1
    %v804 = vmax.f32 %v800, %v802
    %v805 = vmax.f32 %v801, %v803
    %v806 = vpack.c.bf16 %v805, %v804
    %v808 = vunpack.c.l.b16 %v806
    %v809 = vunpack.c.h.b16 %v806
    %v810 = vpack.c.b16 %v808, %v808
    %v811 = vpack.c.b16 %v809, %v809
    %814 = vst.msk [vmem:[#allocation29] sm:$0xf] %vm674, %v810
    %815 = vst.msk [vmem:[#allocation29 + $0x4] sm:$0xf] %vm674, %v811
    // Predicated region
    $region114: #{_lambda_.16} parent=1 // pred_check
      _
    $region115: #{_lambda_.16} parent=1 // pred_check_branch
      %817 = sbr.rel (0) target = $region117
    $region116: #{_lambda_.16} parent=1 // pred_region
      %s819 = ssub.s32 128, 128
      %820 = vsyncadd [#allocation4], %s819
      %s821 = sshll.u32 [#allocation25], 4
      %s822 = int_to_ptr.vmem [resolvable:$true] %s821
      %827 = dma.vmem_to_hbm [thread:$0]  %s822, 128, %s14, [#allocation4], 64, 64, 4
    $region117: #{_lambda_.16} parent=1 // pred_fallthru
      _
    // Predicated region
    $region118: #{_lambda_.16} parent=1 // pred_check
      _
    $region119: #{_lambda_.16} parent=1 // pred_check_branch
      %829 = sbr.rel (0) target = $region121
    $region120: #{_lambda_.16} parent=1 // pred_region
      %s831 = ssub.s32 128, 128
      %832 = vsyncadd [#allocation27], %s831
      %s833 = sshll.u32 [#allocation26], 4
      %s834 = int_to_ptr.vmem [resolvable:$true] %s833
      %839 = dma.vmem_to_hbm [thread:$0]  %s834, 128, %s15, [#allocation27], 64, 64, 4
    $region121: #{_lambda_.16} parent=1 // pred_fallthru
      _
    // Predicated region
    $region122: #{_lambda_.16} parent=1 // pred_check
      _
    $region123: #{_lambda_.16} parent=1 // pred_check_branch
      %841 = sbr.rel (0) target = $region125
    $region124: #{_lambda_.16} parent=1 // pred_region
      %s843 = ssub.s32 128, 128
      %844 = vsyncadd [#allocation27], %s843
      %s845 = sshll.u32 [#allocation28], 4
      %s846 = int_to_ptr.vmem [resolvable:$true] %s845
      %851 = dma.vmem_to_hbm [thread:$0]  %s846, 128, %s16, [#allocation27], 64, 64, 4
    $region125: #{_lambda_.16} parent=1 // pred_fallthru
      _
    // Predicated region
    $region126: #{_lambda_.16} parent=1 // pred_check
      _
    $region127: #{_lambda_.16} parent=1 // pred_check_branch
      %853 = sbr.rel (0) target = $region129
    $region128: #{_lambda_.16} parent=1 // pred_region
      %s855 = ssub.s32 128, 128
      %856 = vsyncadd [#allocation30], %s855
      %s857 = sshll.u32 [#allocation29], 4
      %s858 = int_to_ptr.vmem [resolvable:$true] %s857
      %863 = dma.vmem_to_hbm [thread:$0]  %s858, 128, %s17, [#allocation30], 64, 64, 4
    $region129: #{_lambda_.16} parent=1 // pred_fallthru
      _
    // Predicated region
    $region130: #{_lambda_.16} parent=1 // pred_check
      _
    $region131: #{_lambda_.16} parent=1 // pred_check_branch
      %865 = sbr.rel (0) target = $region133
    $region132: #{_lambda_.16} parent=1 // pred_region
      %866 = dma.done [#allocation4], 128
    $region133: #{_lambda_.16} parent=1 // pred_fallthru
      _
    // Predicated region
    $region134: #{_lambda_.16} parent=1 // pred_check
      _
    $region135: #{_lambda_.16} parent=1 // pred_check_branch
      %868 = sbr.rel (0) target = $region137
    $region136: #{_lambda_.16} parent=1 // pred_region
      %869 = dma.done [#allocation27], 128
    $region137: #{_lambda_.16} parent=1 // pred_fallthru
      _
    // Predicated region
    $region138: #{_lambda_.16} parent=1 // pred_check
      _
    $region139: #{_lambda_.16} parent=1 // pred_check_branch
      %871 = sbr.rel (0) target = $region141
    $region140: #{_lambda_.16} parent=1 // pred_region
      %872 = dma.done [#allocation27], 128
    $region141: #{_lambda_.16} parent=1 // pred_fallthru
      _
    // Predicated region
    $region142: #{_lambda_.16} parent=1 // pred_check
      _
    $region143: #{_lambda_.16} parent=1 // pred_check_branch
      %874 = sbr.rel (0) target = $region145
    $region144: #{_lambda_.16} parent=1 // pred_region
      %875 = dma.done [#allocation30], 128
    $region145: #{_lambda_.16} parent=1 // pred_fallthru
      _
    %876 = vsyncpa [#allocation3], 1
    %877 = vsyncpa [#allocation6], 1
    %878 = vsyncpa [#allocation9], 1
    %879 = vsyncpa [#allocation12], 1
    %880 = vsyncpa [#allocation15], 1
    %881 = vsyncpa [#allocation18], 1
    %882 = vsyncpa [#allocation21], 1
    %883 = vsyncpa [#allocation24], 1
    %884 = vsyncpa [#allocation4], 1
    %885 = vsyncpa [#allocation27], 1
    %886 = vsyncpa [#allocation30], 1

// kernel: _lambda_.17
$region0: #{_lambda_.17}
  #allocation0 [shape = 'u32[]', space=smem, size = 0x4, offset = 0x4, fixed_abs, tag = 'smem constant byte address 0x4 - core index']
  #allocation1 [shape = 'u32[144,128]{1,0:T(1,128)}', space=vmem, size = 0x12000, scoped, tag = 'internal scratch']
  %s0 = inlined_call_operand.hbm [shape: bf16[2,8,64], index: 0, kind: input, shape index: {}]
  %s1 = inlined_call_operand.hbm [shape: bf16[2,8,64], index: 1, kind: input, shape index: {}]
  %s2 = inlined_call_operand.hbm [shape: bf16[64,64], index: 2, kind: input, shape index: {}]
  %s3 = inlined_call_operand.hbm [shape: f32[1,64], index: 3, kind: input, shape index: {}]
  %s4 = inlined_call_operand.hbm [shape: f32[2,1,8], index: 4, kind: input, shape index: {}]
  %s5 = inlined_call_operand.hbm [shape: f32[2,8,8], index: 5, kind: output, shape index: {}]
  %s6 = sld [smem:[#allocation0]]
  $region73: #{_lambda_.17} parent=0
    _
  %s8 = ssub.s32 1, %s6
  %s9 = scalar_select 0, %s8, %s6
  $region1: #{_lambda_.17} parent=0
    #allocation2 [shape = 'u8[4096]{0}', space=vmem, size = 0x1000, scoped, tag = 'input window, operand 0']
    #allocation3 [shape = 's32[2]{0}', space=sflag, size = 0x8, scoped, tag = 'scoped memory for _lambda_.17']
    #allocation4 [shape = 's32[2]{0}', space=sflag, size = 0x8, scoped, tag = 'scoped memory for _lambda_.17']
    #allocation5 [shape = 'u8[4096]{0}', space=vmem, size = 0x1000, scoped, tag = 'input window, operand 1']
    #allocation6 [shape = 's32[2]{0}', space=sflag, size = 0x8, scoped, tag = 'scoped memory for _lambda_.17']
    #allocation7 [shape = 'u8[16384]{0}', space=vmem, size = 0x4000, scoped, tag = 'input window, operand 2, single buffered']
    #allocation8 [shape = 'u8[512]{0}', space=vmem, size = 0x400, scoped, tag = 'input window, operand 3, single buffered']
    #allocation9 [shape = 's32[1]{0}', space=sflag, size = 0x4, scoped, tag = 'scoped memory for _lambda_.17']
    #allocation10 [shape = 'u8[1024]{0}', space=vmem, size = 0x400, scoped, tag = 'input window, operand 4']
    #allocation11 [shape = 'u8[8192]{0}', space=vmem, size = 0x2000, scoped, tag = 'output window, operand 0']
    %10 = vsyncpa [#allocation3], 0
    %s11 = scalar_lea.sflag [#allocation3], 1
    %12 = vsyncpa %s11, 0
    %13 = vsyncpa [#allocation6], 0
    %s14 = scalar_lea.sflag [#allocation6], 1
    %15 = vsyncpa %s14, 0
    %16 = vsyncpa [#allocation9], 0
    %17 = vsyncpa [#allocation4], 0
    %s18 = scalar_lea.sflag [#allocation4], 1
    %19 = vsyncpa %s18, 0
    loop: start=0, step=1, limit=4
    $region2: #{_lambda_.17} parent=1 // loop_pre_header
      _
    $region3: #{_lambda_.17} parent=1 // loop_header
      %s21 = sphi 0, %s25
      %p22 = scmp.ge.s32.totalorder %s21, 4
      %s28 = sphi 0, %s40
      %s29 = sphi 0, %s36
      %s30 = sphi 0, %s28
      %s31 = sphi 0, %s29
      %s32 = sphi 0, %s30
      %s33 = sphi 0, %s31
      %s45 = sphi 0, %s47
      %s48 = sphi 0, %s45
      %s49 = sphi 0, %s48
      %s65 = sphi 0, %s49
      %s71 = sphi 0, %s73
      %s74 = sphi 0, %s71
      %s75 = sphi 0, %s74
      %s91 = sphi 0, %s75
      %s95 = sphi 0, %s95
      %s97 = sphi 0, %s95
      %s98 = sphi 0, %s97
      %s112 = sphi 0, %s98
      %s116 = sphi 0, %s116
      %s118 = sphi 0, %s116
      %s119 = sphi 0, %s118
      %s133 = sphi 0, %s119
      %s139 = sphi 0, %s141
      %s142 = sphi 0, %s139
      %s143 = sphi 0, %s142
      %s159 = sphi 0, %s143
      %s167 = sphi 0, %s169
      %s170 = sphi 0, %s167
      %s171 = sphi 0, %s170
      %s187 = sphi 0, %s171
    $region4: #{_lambda_.17} parent=1 // loop_header_branch
      %24 = sbr.rel (%p22) target = $region8
    $region5: #{_lambda_.17} parent=1 // loop_body
      %s26 = ssub.s32 %s21, 1
      %s27 = ssub.s32 %s21, 2
      %s34 = sadd.s32 1, %s29
      %p35 = scmp.ge.s32.totalorder %s34, 1
      %s36 = scalar_select %p35, 0, %s34
      %s37 = sadd.s32 1, %s28
      %s38 = scalar_select %p35, %s37, %s28
      %p39 = scmp.ge.s32.totalorder %s38, 2
      %s40 = scalar_select %p39, 0, %s38
      %s41 = ssub.s32 %s28, %s40
      %s42 = ssub.s32 %s29, %s36
      %s43 = sor.u32 %s41, %s42
      %p44 = scmp.eq.s32.totalorder %s43, 0
      %s46 = sadd.s32 %s45, 1
      %s47 = scalar_select %p44, %s45, %s46
      %p50 = pneg %p44
      %p51 = scmp.eq.s32.totalorder %s21, 1
      %p52 = por %p50, %p51
      %p53 = scmp.ne.s32.totalorder %s45, %s48
      %p54 = scmp.eq.s32.totalorder %s21, 0
      %p55 = por %p53, %p54
      %p56 = scmp.ne.s32.totalorder %s45, %s48
      %p57 = scmp.eq.s32.totalorder %s26, 1
      %p58 = por %p56, %p57
      %p59 = scmp.ne.s32.totalorder %s48, %s49
      %p60 = scmp.eq.s32.totalorder %s26, 0
      %p61 = por %p59, %p60
      %p62 = scmp.ne.s32.totalorder %s48, %s49
      %p63 = scmp.eq.s32.totalorder %s27, 1
      %p64 = por %p62, %p63
      %p66 = scmp.ne.s32.totalorder %s49, %s65
      %p67 = scmp.eq.s32.totalorder %s27, 0
      %p68 = por %p66, %p67
      %s69 = ssub.s32 %s28, %s40
      %p70 = scmp.eq.s32.totalorder %s69, 0
      %s72 = sadd.s32 %s71, 1
      %s73 = scalar_select %p70, %s71, %s72
      %p76 = pneg %p70
      %p77 = scmp.eq.s32.totalorder %s21, 1
      %p78 = por %p76, %p77
      %p79 = scmp.ne.s32.totalorder %s71, %s74
      %p80 = scmp.eq.s32.totalorder %s21, 0
      %p81 = por %p79, %p80
      %p82 = scmp.ne.s32.totalorder %s71, %s74
      %p83 = scmp.eq.s32.totalorder %s26, 1
      %p84 = por %p82, %p83
      %p85 = scmp.ne.s32.totalorder %s74, %s75
      %p86 = scmp.eq.s32.totalorder %s26, 0
      %p87 = por %p85, %p86
      %p88 = scmp.ne.s32.totalorder %s74, %s75
      %p89 = scmp.eq.s32.totalorder %s27, 1
      %p90 = por %p88, %p89
      %p92 = scmp.ne.s32.totalorder %s75, %s91
      %p93 = scmp.eq.s32.totalorder %s27, 0
      %p94 = por %p92, %p93
      %s96 = sadd.s32 %s95, 1
      %p99 = scmp.eq.s32.totalorder %s21, 1
      %p100 = scmp.ne.s32.totalorder %s95, %s97
      %p101 = scmp.eq.s32.totalorder %s21, 0
      %p102 = por %p100, %p101
      %p103 = scmp.ne.s32.totalorder %s95, %s97
      %p104 = scmp.eq.s32.totalorder %s26, 1
      %p105 = por %p103, %p104
      %p106 = scmp.ne.s32.totalorder %s97, %s98
      %p107 = scmp.eq.s32.totalorder %s26, 0
      %p108 = por %p106, %p107
      %p109 = scmp.ne.s32.totalorder %s97, %s98
      %p110 = scmp.eq.s32.totalorder %s27, 1
      %p111 = por %p109, %p110
      %p113 = scmp.ne.s32.totalorder %s98, %s112
      %p114 = scmp.eq.s32.totalorder %s27, 0
      %p115 = por %p113, %p114
      %s117 = sadd.s32 %s116, 1
      %p120 = scmp.eq.s32.totalorder %s21, 1
      %p121 = scmp.ne.s32.totalorder %s116, %s118
      %p122 = scmp.eq.s32.totalorder %s21, 0
      %p123 = por %p121, %p122
      %p124 = scmp.ne.s32.totalorder %s116, %s118
      %p125 = scmp.eq.s32.totalorder %s26, 1
      %p126 = por %p124, %p125
      %p127 = scmp.ne.s32.totalorder %s118, %s119
      %p128 = scmp.eq.s32.totalorder %s26, 0
      %p129 = por %p127, %p128
      %p130 = scmp.ne.s32.totalorder %s118, %s119
      %p131 = scmp.eq.s32.totalorder %s27, 1
      %p132 = por %p130, %p131
      %p134 = scmp.ne.s32.totalorder %s119, %s133
      %p135 = scmp.eq.s32.totalorder %s27, 0
      %p136 = por %p134, %p135
      %s137 = ssub.s32 %s28, %s40
      %p138 = scmp.eq.s32.totalorder %s137, 0
      %s140 = sadd.s32 %s139, 1
      %s141 = scalar_select %p138, %s139, %s140
      %p144 = pneg %p138
      %p145 = scmp.eq.s32.totalorder %s21, 1
      %p146 = por %p144, %p145
      %p147 = scmp.ne.s32.totalorder %s139, %s142
      %p148 = scmp.eq.s32.totalorder %s21, 0
      %p149 = por %p147, %p148
      %p150 = scmp.ne.s32.totalorder %s139, %s142
      %p151 = scmp.eq.s32.totalorder %s26, 1
      %p152 = por %p150, %p151
      %p153 = scmp.ne.s32.totalorder %s142, %s143
      %p154 = scmp.eq.s32.totalorder %s26, 0
      %p155 = por %p153, %p154
      %p156 = scmp.ne.s32.totalorder %s142, %s143
      %p157 = scmp.eq.s32.totalorder %s27, 1
      %p158 = por %p156, %p157
      %p160 = scmp.ne.s32.totalorder %s143, %s159
      %p161 = scmp.eq.s32.totalorder %s27, 0
      %p162 = por %p160, %p161
      %s163 = ssub.s32 %s28, %s40
      %s164 = ssub.s32 %s29, %s36
      %s165 = sor.u32 %s163, %s164
      %p166 = scmp.eq.s32.totalorder %s165, 0
      %s168 = sadd.s32 %s167, 1
      %s169 = scalar_select %p166, %s167, %s168
      %p172 = pneg %p166
      %p173 = scmp.eq.s32.totalorder %s21, 1
      %p174 = por %p172, %p173
      %p175 = scmp.ne.s32.totalorder %s167, %s170
      %p176 = scmp.eq.s32.totalorder %s21, 0
      %p177 = por %p175, %p176
      %p178 = scmp.ne.s32.totalorder %s167, %s170
      %p179 = scmp.eq.s32.totalorder %s26, 1
      %p180 = por %p178, %p179
      %p181 = scmp.ne.s32.totalorder %s170, %s171
      %p182 = scmp.eq.s32.totalorder %s26, 0
      %p183 = por %p181, %p182
      %p184 = scmp.ne.s32.totalorder %s170, %s171
      %p185 = scmp.eq.s32.totalorder %s27, 1
      %p186 = por %p184, %p185
      %p188 = scmp.ne.s32.totalorder %s171, %s187
      %p189 = scmp.eq.s32.totalorder %s27, 0
      %p190 = por %p188, %p189
      %p191 = scmp.le.s32.totalorder 1, %s21
      %p192 = scmp.lt.s32.totalorder %s21, 3
      %p193 = pnand %p191, %p192
      %p194 = pneg %p193
      // Predicated region
      $region9: #{_lambda_.17} parent=5 // pred_check
        _
      $region10: #{_lambda_.17} parent=5 // pred_check_branch
        %196 = sbr.rel (%p193) target = $region12
      $region11: #{_lambda_.17} parent=5 // pred_region
        %s197 = ssub.s32 %s21, 1
        // Predicated region
        $region13: #{_lambda_.17} parent=11 // pred_check
          %p198 = pneg %p108
        $region14: #{_lambda_.17} parent=11 // pred_check_branch
          %200 = sbr.rel (%p198) target = $region16
        $region15: #{_lambda_.17} parent=11 // pred_region
          %s202 = ssub.s32 512, 512
          %203 = vsyncadd [#allocation6], %s202
          %s204 = sshll.u32 [#allocation7], 4
          %s205 = int_to_ptr.vmem [resolvable:$true] %s204
          %210 = dma.hbm_to_vmem [thread:$0]  %s2, 512, %s205, [#allocation6], 64, 64, 4
        $region16: #{_lambda_.17} parent=11 // pred_fallthru
          _
        // Predicated region
        $region17: #{_lambda_.17} parent=11 // pred_check
          %p211 = pneg %p129
        $region18: #{_lambda_.17} parent=11 // pred_check_branch
          %213 = sbr.rel (%p211) target = $region20
        $region19: #{_lambda_.17} parent=11 // pred_region
          %s215 = ssub.s32 16, 16
          %216 = vsyncadd [#allocation9], %s215
          %s218 = sshll.u32 [#allocation8], 4
          %s219 = int_to_ptr.vmem [resolvable:$true] %s218
          %221 = dma.hbm_to_vmem [thread:$0]  %s3, 16, %s219, [#allocation9]
        $region20: #{_lambda_.17} parent=11 // pred_fallthru
          _
      $region12: #{_lambda_.17} parent=5 // pred_fallthru
        _
      %p222 = scmp.lt.s32.totalorder %s21, 2
      // Predicated region
      $region21: #{_lambda_.17} parent=5 // pred_check
        %p223 = pneg %p222
      $region22: #{_lambda_.17} parent=5 // pred_check_branch
        %225 = sbr.rel (%p223) target = $region24
      $region23: #{_lambda_.17} parent=5 // pred_region
        // Predicated region
        $region25: #{_lambda_.17} parent=23 // pred_check
          %p226 = pneg %p55
        $region26: #{_lambda_.17} parent=23 // pred_check_branch
          %228 = sbr.rel (%p226) target = $region28
        $region27: #{_lambda_.17} parent=23 // pred_region
          %s229 = sand.u32 %s21, 1
          %s230 = scalar_lea.sflag [#allocation3], %s229
          %s231 = sand.u32 %s45, 1
          %s232 = smul.addr %s231, 4
          %s233 = scalar_lea.vmem [#allocation2], %s232
          %s235 = ssub.s32 64, 64
          %236 = vsyncadd %s230, %s235
          %s237 = sadd.s32 %s29, %s28
          %s238 = smul.addr %s237, 64
          %s239 = scalar_lea.hbm %s0, %s238
          %s241 = sshll.u32 %s233, 4
          %s242 = int_to_ptr.vmem [resolvable:$true] %s241
          %244 = dma.hbm_to_vmem [thread:$0]  %s239, 64, %s242, %s230
        $region28: #{_lambda_.17} parent=23 // pred_fallthru
          _
        // Predicated region
        $region29: #{_lambda_.17} parent=23 // pred_check
          %p245 = pneg %p81
        $region30: #{_lambda_.17} parent=23 // pred_check_branch
          %247 = sbr.rel (%p245) target = $region32
        $region31: #{_lambda_.17} parent=23 // pred_region
          %s248 = sand.u32 %s21, 1
          %s249 = scalar_lea.sflag [#allocation6], %s248
          %s250 = sand.u32 %s71, 1
          %s251 = smul.addr %s250, 4
          %s252 = scalar_lea.vmem [#allocation5], %s251
          %s254 = ssub.s32 64, 64
          %255 = vsyncadd %s249, %s254
          %s256 = smul.addr %s28, 64
          %s257 = scalar_lea.hbm %s1, %s256
          %s259 = sshll.u32 %s252, 4
          %s260 = int_to_ptr.vmem [resolvable:$true] %s259
          %262 = dma.hbm_to_vmem [thread:$0]  %s257, 64, %s260, %s249
        $region32: #{_lambda_.17} parent=23 // pred_fallthru
          _
        // Predicated region
        $region33: #{_lambda_.17} parent=23 // pred_check
          %p263 = pneg %p149
        $region34: #{_lambda_.17} parent=23 // pred_check_branch
          %265 = sbr.rel (%p263) target = $region36
        $region35: #{_lambda_.17} parent=23 // pred_region
          %s266 = sand.u32 %s21, 1
          %s267 = scalar_lea.sflag [#allocation3], %s266
          %s268 = sand.u32 %s139, 1
          %s269 = scalar_lea.vmem [#allocation10], %s268
          %s271 = ssub.s32 16, 16
          %272 = vsyncadd %s267, %s271
          %s273 = smul.addr %s28, 16
          %s274 = scalar_lea.hbm %s4, %s273
          %s276 = sshll.u32 %s269, 4
          %s277 = int_to_ptr.vmem [resolvable:$true] %s276
          %279 = dma.hbm_to_vmem [thread:$0]  %s274, 16, %s277, %s267
        $region36: #{_lambda_.17} parent=23 // pred_fallthru
          _
      $region24: #{_lambda_.17} parent=5 // pred_fallthru
        _
      %p280 = scmp.le.s32.totalorder 1, %s21
      %p281 = scmp.lt.s32.totalorder %s21, 3
      %p282 = pnand %p280, %p281
      %p283 = pneg %p282
      // Predicated region
      $region37: #{_lambda_.17} parent=5 // pred_check
        _
      $region38: #{_lambda_.17} parent=5 // pred_check_branch
        %285 = sbr.rel (%p282) target = $region40
      $region39: #{_lambda_.17} parent=5 // pred_region
        %s286 = ssub.s32 %s21, 1
        %s287 = sand.u32 %s26, 1
        %s288 = scalar_lea.sflag [#allocation3], %s287
        %s289 = sand.u32 %s48, 1
        %s290 = smul.addr %s289, 4
        %s291 = scalar_lea.vmem [#allocation2], %s290
        // Predicated region
        $region41: #{_lambda_.17} parent=39 // pred_check
          %p292 = pneg %p61
        $region42: #{_lambda_.17} parent=39 // pred_check_branch
          %294 = sbr.rel (%p292) target = $region44
        $region43: #{_lambda_.17} parent=39 // pred_region
          %295 = dma.done %s288, 64
        $region44: #{_lambda_.17} parent=39 // pred_fallthru
          _
        %s296 = sand.u32 %s26, 1
        %s297 = scalar_lea.sflag [#allocation6], %s296
        %s298 = sand.u32 %s74, 1
        %s299 = smul.addr %s298, 4
        %s300 = scalar_lea.vmem [#allocation5], %s299
        // Predicated region
        $region45: #{_lambda_.17} parent=39 // pred_check
          %p301 = pneg %p87
        $region46: #{_lambda_.17} parent=39 // pred_check_branch
          %303 = sbr.rel (%p301) target = $region48
        $region47: #{_lambda_.17} parent=39 // pred_region
          %304 = dma.done %s297, 64
        $region48: #{_lambda_.17} parent=39 // pred_fallthru
          _
        // Predicated region
        $region49: #{_lambda_.17} parent=39 // pred_check
          %p305 = pneg %p108
        $region50: #{_lambda_.17} parent=39 // pred_check_branch
          %307 = sbr.rel (%p305) target = $region52
        $region51: #{_lambda_.17} parent=39 // pred_region
          %308 = dma.done [#allocation6], 512
        $region52: #{_lambda_.17} parent=39 // pred_fallthru
          _
        // Predicated region
        $region53: #{_lambda_.17} parent=39 // pred_check
          %p309 = pneg %p129
        $region54: #{_lambda_.17} parent=39 // pred_check_branch
          %311 = sbr.rel (%p309) target = $region56
        $region55: #{_lambda_.17} parent=39 // pred_region
          %312 = dma.done [#allocation9], 16
        $region56: #{_lambda_.17} parent=39 // pred_fallthru
          _
        %s313 = sand.u32 %s26, 1
        %s314 = scalar_lea.sflag [#allocation3], %s313
        %s315 = sand.u32 %s142, 1
        %s316 = scalar_lea.vmem [#allocation10], %s315
        // Predicated region
        $region57: #{_lambda_.17} parent=39 // pred_check
          %p317 = pneg %p155
        $region58: #{_lambda_.17} parent=39 // pred_check_branch
          %319 = sbr.rel (%p317) target = $region60
        $region59: #{_lambda_.17} parent=39 // pred_region
          %320 = dma.done %s314, 16
        $region60: #{_lambda_.17} parent=39 // pred_fallthru
          _
        %s321 = sand.u32 %s26, 1
        %s322 = scalar_lea.sflag [#allocation3], %s321
        %s323 = sand.u32 %s48, 1
        %s324 = smul.addr %s323, 4
        %s325 = scalar_lea.vmem [#allocation2], %s324
        %p326 = pneg %p61
        %p327 = pneg %p58
        %s328 = sand.u32 %s26, 1
        %s329 = scalar_lea.sflag [#allocation6], %s328
        %s330 = sand.u32 %s74, 1
        %s331 = smul.addr %s330, 4
        %s332 = scalar_lea.vmem [#allocation5], %s331
        %p333 = pneg %p87
        %p334 = pneg %p84
        %p335 = pneg %p108
        %p336 = pneg %p105
        %p337 = pneg %p129
        %p338 = pneg %p126
        %s339 = sand.u32 %s26, 1
        %s340 = scalar_lea.sflag [#allocation3], %s339
        %s341 = sand.u32 %s142, 1
        %s342 = scalar_lea.vmem [#allocation10], %s341
        %p343 = pneg %p155
        %p344 = pneg %p152
        %p345 = pneg %p183
        %p346 = pneg %p180
        %s347 = sand.u32 %s170, 1
        %s348 = scalar_lea.sflag [#allocation4], %s347
        %s349 = sand.u32 %s170, 1
        %s350 = smul.addr %s349, 8
        %s351 = scalar_lea.vmem [#allocation11], %s350
        %v353 = vld [vmem:[%s291] sm:$0xf]
        %v354 = vld [vmem:[#allocation7] sm:$0xf]
        %v355 = vld [vmem:[#allocation7 + $0x4] sm:$0xf]
        %v356 = vld [vmem:[#allocation7 + $0x8] sm:$0xf]
        %v357 = vld [vmem:[#allocation7 + $0xc] sm:$0xf]
        %v358 = vld [vmem:[#allocation7 + $0x10] sm:$0xf]
        %v359 = vld [vmem:[#allocation7 + $0x14] sm:$0xf]
        %v360 = vld [vmem:[#allocation7 + $0x18] sm:$0xf]
        %v361 = vld [vmem:[#allocation7 + $0x1c] sm:$0xf]
        %v362 = vld [vmem:[#allocation8] sm:$0x1]
        %v364 = vlaneseq
        %v365 = vshrl.u32 %v364, 7
        %v366 = vsub.s32 0, %v365
        %v367 = vrot.slane %v362, %v366
        %v377 = vunpack.c.l.b16 %v354
        %v378 = vunpack.c.l.b16 %v355
        %v379 = vunpack.c.l.b16 %v356
        %v380 = vunpack.c.l.b16 %v357
        %v381 = vunpack.c.l.b16 %v358
        %v382 = vunpack.c.l.b16 %v359
        %v383 = vunpack.c.l.b16 %v360
        %v384 = vunpack.c.l.b16 %v361
        %v385 = vpack.c.b16 %v378, %v377
        %v386 = vpack.c.b16 %v380, %v379
        %v387 = vpack.c.b16 %v382, %v381
        %v388 = vpack.c.b16 %v384, %v383
        %vm393 = vcmask 523264
        %v395 = vsel %vm393, %v353, 0
        %397 = vmatprep.subr.bf16.mxu0 0
        %398 = vmatpush1.bf16.msra.mxu0 %v385
        %399 = vmatprep.subr.bf16.mxu0 0
        %400 = vmatpush1.bf16.msra.mxu0 %v386
        %401 = vmatprep.subr.bf16.mxu0 0
        %402 = vmatpush1.bf16.msra.mxu0 %v387
        %403 = vmatprep.subr.bf16.mxu0 0
        %404 = vmatpush1.bf16.msra.mxu0 %v388
        %405 = vmatprep.subr.bf16.mxu0 0
        %406 = vmatpush1.bf16.msra.mxu0 0
        %407 = vmatprep.subr.bf16.mxu0 0
        %408 = vmatpush1.bf16.msra.mxu0 0
        %409 = vmatprep.subr.bf16.mxu0 0
        %410 = vmatpush1.bf16.msra.mxu0 0
        %411 = vmatprep.subr.bf16.mxu0 0
        %412 = vmatpush1.bf16.msra.mxu0 0
        %413 = vmatprep.subr.bf16.mxu0 0
        %414 = vmatpush1.bf16.msra.mxu0 0
        %415 = vmatprep.subr.bf16.mxu0 0
        %416 = vmatpush1.bf16.msra.mxu0 0
        %417 = vmatprep.subr.bf16.mxu0 0
        %418 = vmatpush1.bf16.msra.mxu0 0
        %419 = vmatprep.subr.bf16.mxu0 0
        %420 = vmatpush1.bf16.msra.mxu0 0
        %421 = vmatprep.subr.bf16.mxu0 0
        %422 = vmatpush1.bf16.msra.mxu0 0
        %423 = vmatprep.subr.bf16.mxu0 0
        %424 = vmatpush1.bf16.msra.mxu0 0
        %425 = vmatprep.subr.bf16.mxu0 0
        %426 = vmatpush1.bf16.msra.mxu0 0
        %427 = vmatprep.subr.bf16.mxu0 0
        %428 = vmatpush1.bf16.msra.mxu0 0
        %429 = vmatprep.mubr.bf16.mxu0 0
        %430 = vmatmul.mubr.bf16.gmra.mrb[0].mxu0 %v395
        %v431 = vpop.f32.mrb[0].mxu0
        %v432 = vadd.f32 %v367, %v431
        %v433 = vpop.f32.mrb[0].mxu0
        %v434 = vpop.f32.mrb[0].mxu0
        %v435 = vpop.f32.mrb[0].mxu0
        %436 = vdwg.mxu0
        %v437 = vpack.c.bf16 %v432, %v432
        %v438 = vld [vmem:[%s300] sm:$0xf]
        %v440 = vsel %vm393, %v437, 0
        %v443 = vsel %vm393, %v438, 0
        %445 = vmatprep.subr.bf16.mxu0 0
        %446 = vmatpush1.bf16.xpose.msra.mxu0 %v443
        %447 = vmatprep.subr.bf16.mxu0 0
        %448 = vmatpush1.bf16.xpose.msra.mxu0 0
        %449 = vmatprep.subr.bf16.mxu0 0
        %450 = vmatpush1.bf16.xpose.msra.mxu0 0
        %451 = vmatprep.subr.bf16.mxu0 0
        %452 = vmatpush1.bf16.xpose.msra.mxu0 0
        %453 = vmatprep.subr.bf16.mxu0 0
        %454 = vmatpush1.bf16.xpose.msra.mxu0 0
        %455 = vmatprep.subr.bf16.mxu0 0
        %456 = vmatpush1.bf16.xpose.msra.mxu0 0
        %457 = vmatprep.subr.bf16.mxu0 0
        %458 = vmatpush1.bf16.xpose.msra.mxu0 0
        %459 = vmatprep.subr.bf16.mxu0 0
        %460 = vmatpush1.bf16.xpose.msra.mxu0 0
        %461 = vmatprep.subr.bf16.mxu0 0
        %462 = vmatpush1.bf16.xpose.msra.mxu0 0
        %463 = vmatprep.subr.bf16.mxu0 0
        %464 = vmatpush1.bf16.xpose.msra.mxu0 0
        %465 = vmatprep.subr.bf16.mxu0 0
        %466 = vmatpush1.bf16.xpose.msra.mxu0 0
        %467 = vmatprep.subr.bf16.mxu0 0
        %468 = vmatpush1.bf16.xpose.msra.mxu0 0
        %469 = vmatprep.subr.bf16.mxu0 0
        %470 = vmatpush1.bf16.xpose.msra.mxu0 0
        %471 = vmatprep.subr.bf16.mxu0 0
        %472 = vmatpush1.bf16.xpose.msra.mxu0 0
        %473 = vmatprep.subr.bf16.mxu0 0
        %474 = vmatpush1.bf16.xpose.msra.mxu0 0
        %475 = vmatprep.subr.bf16.mxu0 0
        %476 = vmatpush1.bf16.xpose.msra.mxu0 0
        %477 = vmatprep.mubr.bf16.mxu0 0
        %478 = vmatmul.mubr.bf16.gmra.mrb[0].mxu0 %v440
        %v479 = vpop.f32.mrb[0].mxu0
        %v480 = vadd.f32 0.0, %v479
        %v481 = vpop.f32.mrb[0].mxu0
        %v482 = vpop.f32.mrb[0].mxu0
        %v483 = vpop.f32.mrb[0].mxu0
        %484 = vdwg.mxu0
        %v485 = vld [vmem:[%s316] sm:$0x1]
        %vm486 = vcmp.gt.f32.partialorder %v485, 0.0
        %v487 = vsel %vm486, 1, 0
        %v488 = vlaneseq
        %v489 = vshrl.u32 %v488, 7
        %v490 = vsub.s32 0, %v489
        %v491 = vrot.slane %v487, %v490
        %vm492 = vcmp.eq.s32.totalorder %v491, 1
        %v493 = vsel %vm492, %v480, -inf
        %vm494 = vcmask 64512
        %495 = vst.msk [vmem:[%s351] sm:$0xff] %vm494, %v493
        %s496 = sand.u32 %s170, 1
        %s497 = scalar_lea.sflag [#allocation4], %s496
        %s498 = sand.u32 %s170, 1
        %s499 = smul.addr %s498, 8
        %s500 = scalar_lea.vmem [#allocation11], %s499
        // Predicated region
        $region61: #{_lambda_.17} parent=39 // pred_check
          %p501 = pneg %p180
        $region62: #{_lambda_.17} parent=39 // pred_check_branch
          %503 = sbr.rel (%p501) target = $region64
        $region63: #{_lambda_.17} parent=39 // pred_region
          %s505 = ssub.s32 128, 128
          %506 = vsyncadd %s497, %s505
          %s507 = sadd.s32 %s31, %s30
          %s508 = smul.addr %s507, 128
          %s509 = scalar_lea.hbm %s5, %s508
          %s511 = sshll.u32 %s500, 4
          %s512 = int_to_ptr.vmem [resolvable:$true] %s511
          %514 = dma.vmem_to_hbm [thread:$0]  %s512, 128, %s509, %s497
        $region64: #{_lambda_.17} parent=39 // pred_fallthru
          _
      $region40: #{_lambda_.17} parent=5 // pred_fallthru
        _
      %p515 = scmp.le.s32.totalorder 2, %s21
      // Predicated region
      $region65: #{_lambda_.17} parent=5 // pred_check
        %p516 = pneg %p515
      $region66: #{_lambda_.17} parent=5 // pred_check_branch
        %518 = sbr.rel (%p516) target = $region68
      $region67: #{_lambda_.17} parent=5 // pred_region
        %s519 = ssub.s32 %s21, 2
        // Predicated region
        $region69: #{_lambda_.17} parent=67 // pred_check
          %p520 = pneg %p186
        $region70: #{_lambda_.17} parent=67 // pred_check_branch
          %522 = sbr.rel (%p520) target = $region72
        $region71: #{_lambda_.17} parent=67 // pred_region
          %s523 = sand.u32 %s171, 1
          %s524 = scalar_lea.sflag [#allocation4], %s523
          %s525 = sand.u32 %s171, 1
          %s526 = smul.addr %s525, 8
          %s527 = scalar_lea.vmem [#allocation11], %s526
          %528 = dma.done %s524, 128
        $region72: #{_lambda_.17} parent=67 // pred_fallthru
          _
      $region68: #{_lambda_.17} parent=5 // pred_fallthru
        _
    $region6: #{_lambda_.17} parent=1 // loop_footer
      %s25 = sadd.s32 1, %s21
    $region7: #{_lambda_.17} parent=1 // loop_footer_branch
      %20 = sbr.rel target = $region3
    $region8: #{_lambda_.17} parent=1 // loop_exit
      _
    %529 = vsyncpa [#allocation3], 1
    %s530 = scalar_lea.sflag [#allocation3], 1
    %531 = vsyncpa %s530, 1
    %532 = vsyncpa [#allocation6], 1
    %s533 = scalar_lea.sflag [#allocation6], 1
    %534 = vsyncpa %s533, 1
    %535 = vsyncpa [#allocation9], 1
    %536 = vsyncpa [#allocation4], 1
    %s537 = scalar_lea.sflag [#allocation4], 1
    %538 = vsyncpa %s537, 1

// kernel: _lambda_.18
$region0: #{_lambda_.18}
  #allocation0 [shape = 'u32[]', space=smem, size = 0x4, offset = 0x4, fixed_abs, tag = 'smem constant byte address 0x4 - core index']
  #allocation1 [shape = 'u32[144,128]{1,0:T(1,128)}', space=vmem, size = 0x12000, scoped, tag = 'internal scratch']
  %s0 = inlined_call_operand.hbm [shape: bf16[16,32], index: 0, kind: input, shape index: {}]
  %s1 = inlined_call_operand.hbm [shape: bf16[32,256], index: 1, kind: input, shape index: {}]
  %s2 = inlined_call_operand.hbm [shape: bf16[32,8], index: 2, kind: input, shape index: {}]
  %s3 = inlined_call_operand.hbm [shape: f32[1,256], index: 3, kind: input, shape index: {}]
  %s4 = inlined_call_operand.hbm [shape: f32[1,8], index: 4, kind: input, shape index: {}]
  %s5 = inlined_call_operand.hbm [shape: bf16[16,256], index: 5, kind: output, shape index: {0}]
  %s6 = inlined_call_operand.hbm [shape: f32[16,8], index: 6, kind: output, shape index: {1}]
  %7 = xla_tuple %s5, %s6
  %s8 = sld [smem:[#allocation0]]
  $region58: #{_lambda_.18} parent=0
    _
  %s10 = ssub.s32 1, %s8
  %s11 = scalar_select 0, %s10, %s8
  $region1: #{_lambda_.18} parent=0
    #allocation2 [shape = 'u8[4096]{0}', space=vmem, size = 0x1000, scoped, tag = 'input window, operand 0, single buffered']
    #allocation3 [shape = 's32[1]{0}', space=sflag, size = 0x4, scoped, tag = 'scoped memory for _lambda_.18']
    #allocation4 [shape = 's32[1]{0}', space=sflag, size = 0x4, scoped, tag = 'scoped memory for _lambda_.18']
    #allocation5 [shape = 'u8[16384]{0}', space=vmem, size = 0x4000, scoped, tag = 'input window, operand 1, single buffered']
    #allocation6 [shape = 's32[1]{0}', space=sflag, size = 0x4, scoped, tag = 'scoped memory for _lambda_.18']
    #allocation7 [shape = 'u8[8192]{0}', space=vmem, size = 0x2000, scoped, tag = 'input window, operand 2, single buffered']
    #allocation8 [shape = 'u8[1024]{0}', space=vmem, size = 0x400, scoped, tag = 'input window, operand 3, single buffered']
    #allocation9 [shape = 's32[1]{0}', space=sflag, size = 0x4, scoped, tag = 'scoped memory for _lambda_.18']
    #allocation10 [shape = 'u8[512]{0}', space=vmem, size = 0x400, scoped, tag = 'input window, operand 4, single buffered']
    #allocation11 [shape = 'u8[8192]{0}', space=vmem, size = 0x2000, scoped, tag = 'output window, operand 0, single buffered']
    #allocation12 [shape = 'u8[8192]{0}', space=vmem, size = 0x2000, scoped, tag = 'output window, operand 1, single buffered']
    #allocation13 [shape = 's32[1]{0}', space=sflag, size = 0x4, scoped, tag = 'scoped memory for _lambda_.18']
    %12 = vsyncpa [#allocation3], 0
    %13 = vsyncpa [#allocation6], 0
    %14 = vsyncpa [#allocation9], 0
    %15 = vsyncpa [#allocation4], 0
    %16 = vsyncpa [#allocation13], 0
    // Predicated region
    $region2: #{_lambda_.18} parent=1 // pred_check
      _
    $region3: #{_lambda_.18} parent=1 // pred_check_branch
      %18 = sbr.rel (0) target = $region5
    $region4: #{_lambda_.18} parent=1 // pred_region
      %s20 = ssub.s32 128, 128
      %21 = vsyncadd [#allocation3], %s20
      %s22 = sshll.u32 [#allocation2], 4
      %s23 = int_to_ptr.vmem [resolvable:$true] %s22
      %28 = dma.hbm_to_vmem [thread:$0]  %s0, 128, %s23, [#allocation3], 64, 64, 4
    $region5: #{_lambda_.18} parent=1 // pred_fallthru
      _
    // Predicated region
    $region6: #{_lambda_.18} parent=1 // pred_check
      _
    $region7: #{_lambda_.18} parent=1 // pred_check_branch
      %30 = sbr.rel (0) target = $region9
    $region8: #{_lambda_.18} parent=1 // pred_region
      %s32 = ssub.s32 512, 512
      %33 = vsyncadd [#allocation6], %s32
      %s34 = sshll.u32 [#allocation5], 4
      %s35 = int_to_ptr.vmem [resolvable:$true] %s34
      %40 = dma.hbm_to_vmem [thread:$0]  %s1, 512, %s35, [#allocation6], 128, 128, 8
    $region9: #{_lambda_.18} parent=1 // pred_fallthru
      _
    // Predicated region
    $region10: #{_lambda_.18} parent=1 // pred_check
      _
    $region11: #{_lambda_.18} parent=1 // pred_check_branch
      %42 = sbr.rel (0) target = $region13
    $region12: #{_lambda_.18} parent=1 // pred_region
      %s44 = ssub.s32 256, 256
      %45 = vsyncadd [#allocation6], %s44
      %s46 = sshll.u32 [#allocation7], 4
      %s47 = int_to_ptr.vmem [resolvable:$true] %s46
      %52 = dma.hbm_to_vmem [thread:$0]  %s2, 256, %s47, [#allocation6], 64, 64, 4
    $region13: #{_lambda_.18} parent=1 // pred_fallthru
      _
    // Predicated region
    $region14: #{_lambda_.18} parent=1 // pred_check
      _
    $region15: #{_lambda_.18} parent=1 // pred_check_branch
      %54 = sbr.rel (0) target = $region17
    $region16: #{_lambda_.18} parent=1 // pred_region
      %s56 = ssub.s32 32, 32
      %57 = vsyncadd [#allocation9], %s56
      %s59 = sshll.u32 [#allocation8], 4
      %s60 = int_to_ptr.vmem [resolvable:$true] %s59
      %62 = dma.hbm_to_vmem [thread:$0]  %s3, 32, %s60, [#allocation9]
    $region17: #{_lambda_.18} parent=1 // pred_fallthru
      _
    // Predicated region
    $region18: #{_lambda_.18} parent=1 // pred_check
      _
    $region19: #{_lambda_.18} parent=1 // pred_check_branch
      %64 = sbr.rel (0) target = $region21
    $region20: #{_lambda_.18} parent=1 // pred_region
      %s66 = ssub.s32 16, 16
      %67 = vsyncadd [#allocation9], %s66
      %s69 = sshll.u32 [#allocation10], 4
      %s70 = int_to_ptr.vmem [resolvable:$true] %s69
      %72 = dma.hbm_to_vmem [thread:$0]  %s4, 16, %s70, [#allocation9]
    $region21: #{_lambda_.18} parent=1 // pred_fallthru
      _
    // Predicated region
    $region22: #{_lambda_.18} parent=1 // pred_check
      _
    $region23: #{_lambda_.18} parent=1 // pred_check_branch
      %74 = sbr.rel (0) target = $region25
    $region24: #{_lambda_.18} parent=1 // pred_region
      %75 = dma.done [#allocation3], 128
    $region25: #{_lambda_.18} parent=1 // pred_fallthru
      _
    // Predicated region
    $region26: #{_lambda_.18} parent=1 // pred_check
      _
    $region27: #{_lambda_.18} parent=1 // pred_check_branch
      %77 = sbr.rel (0) target = $region29
    $region28: #{_lambda_.18} parent=1 // pred_region
      %78 = dma.done [#allocation6], 512
    $region29: #{_lambda_.18} parent=1 // pred_fallthru
      _
    // Predicated region
    $region30: #{_lambda_.18} parent=1 // pred_check
      _
    $region31: #{_lambda_.18} parent=1 // pred_check_branch
      %80 = sbr.rel (0) target = $region33
    $region32: #{_lambda_.18} parent=1 // pred_region
      %81 = dma.done [#allocation6], 256
    $region33: #{_lambda_.18} parent=1 // pred_fallthru
      _
    // Predicated region
    $region34: #{_lambda_.18} parent=1 // pred_check
      _
    $region35: #{_lambda_.18} parent=1 // pred_check_branch
      %83 = sbr.rel (0) target = $region37
    $region36: #{_lambda_.18} parent=1 // pred_region
      %84 = dma.done [#allocation9], 32
    $region37: #{_lambda_.18} parent=1 // pred_fallthru
      _
    // Predicated region
    $region38: #{_lambda_.18} parent=1 // pred_check
      _
    $region39: #{_lambda_.18} parent=1 // pred_check_branch
      %86 = sbr.rel (0) target = $region41
    $region40: #{_lambda_.18} parent=1 // pred_region
      %87 = dma.done [#allocation9], 16
    $region41: #{_lambda_.18} parent=1 // pred_fallthru
      _
    %v89 = vld [vmem:[#allocation2] sm:$0xf]
    %v90 = vld [vmem:[#allocation2 + $0x4] sm:$0xf]
    %v91 = vld [vmem:[#allocation8] sm:$0x3]
    %v92 = vld [vmem:[#allocation5] sm:$0xff]
    %v93 = vld [vmem:[#allocation5 + $0x8] sm:$0xff]
    %v94 = vld [vmem:[#allocation5 + $0x10] sm:$0xff]
    %v95 = vld [vmem:[#allocation5 + $0x18] sm:$0xff]
    %v98 = vunpack.c.l.b16 %v89
    %v99 = vunpack.c.l.b16 %v90
    %v100 = vpack.c.b16 %v99, %v98
    %v105 = vunpack.c.l.b16 %v92
    %v106 = vunpack.c.h.b16 %v92
    %v107 = vunpack.c.l.b16 %v93
    %v108 = vunpack.c.h.b16 %v93
    %v109 = vunpack.c.l.b16 %v94
    %v110 = vunpack.c.h.b16 %v94
    %v111 = vunpack.c.l.b16 %v95
    %v112 = vunpack.c.h.b16 %v95
    %v113 = vpack.c.b16 %v107, %v105
    %v114 = vpack.c.b16 %v108, %v106
    %v115 = vpack.c.b16 %v111, %v109
    %v116 = vpack.c.b16 %v112, %v110
    %vm121 = vcmask 261120
    %v123 = vsel %vm121, %v100, 0
    %125 = vmatprep.subr.bf16.mxu0 %v114
    %126 = vmatpush1.bf16.msra.mxu0 %v113
    %127 = vmatprep.subr.bf16.mxu0 %v116
    %128 = vmatpush1.bf16.msra.mxu0 %v115
    %129 = vmatprep.subr.bf16.mxu0 0
    %130 = vmatpush1.bf16.msra.mxu0 0
    %131 = vmatprep.subr.bf16.mxu0 0
    %132 = vmatpush1.bf16.msra.mxu0 0
    %133 = vmatprep.subr.bf16.mxu0 0
    %134 = vmatpush1.bf16.msra.mxu0 0
    %135 = vmatprep.subr.bf16.mxu0 0
    %136 = vmatpush1.bf16.msra.mxu0 0
    %137 = vmatprep.subr.bf16.mxu0 0
    %138 = vmatpush1.bf16.msra.mxu0 0
    %139 = vmatprep.subr.bf16.mxu0 0
    %140 = vmatpush1.bf16.msra.mxu0 0
    %141 = vmatprep.subr.bf16.mxu0 0
    %142 = vmatpush1.bf16.msra.mxu0 0
    %143 = vmatprep.subr.bf16.mxu0 0
    %144 = vmatpush1.bf16.msra.mxu0 0
    %145 = vmatprep.subr.bf16.mxu0 0
    %146 = vmatpush1.bf16.msra.mxu0 0
    %147 = vmatprep.subr.bf16.mxu0 0
    %148 = vmatpush1.bf16.msra.mxu0 0
    %149 = vmatprep.subr.bf16.mxu0 0
    %150 = vmatpush1.bf16.msra.mxu0 0
    %151 = vmatprep.subr.bf16.mxu0 0
    %152 = vmatpush1.bf16.msra.mxu0 0
    %153 = vmatprep.subr.bf16.mxu0 0
    %154 = vmatpush1.bf16.msra.mxu0 0
    %155 = vmatprep.subr.bf16.mxu0 0
    %156 = vmatpush1.bf16.msra.mxu0 0
    %157 = vmatprep.mubr.bf16.mxu0 0
    %158 = vmatmul.mubr.bf16.gmra.mrb[0].mxu0 %v123
    %v159 = vpop.f32.mrb[0].mxu0
    %v160 = vadd.f32 0.0, %v159
    %v161 = vpop.f32.mrb[0].mxu0
    %v162 = vadd.f32 0.0, %v161
    %v163 = vpop.f32.mrb[0].mxu0
    %v164 = vadd.f32 0.0, %v163
    %v165 = vpop.f32.mrb[0].mxu0
    %v166 = vadd.f32 0.0, %v165
    %167 = vdwg.mxu0
    %v169 = vlaneseq
    %v170 = vshrl.u32 %v169, 7
    %v171 = vsub.s32 0, %v170
    %v172 = vrot.slane %v91, %v171
    %v173 = vlaneseq
    %v174 = vshrl.u32 %v173, 7
    %v175 = vsub.s32 1, %v174
    %v176 = vrot.slane %v91, %v175
    %v179 = vadd.f32 %v172, %v160
    %v180 = vadd.f32 %v176, %v162
    %v181 = vadd.f32 %v172, %v164
    %v182 = vadd.f32 %v176, %v166
    %v183 = vpack.c.bf16 %v181, %v179
    %v184 = vpack.c.bf16 %v182, %v180
    %v187 = vunpack.c.l.b16 %v183
    %v188 = vunpack.c.l.b16 %v184
    %v189 = vunpack.c.h.b16 %v183
    %v190 = vunpack.c.h.b16 %v184
    %v191 = vpack.c.b16 %v188, %v187
    %v192 = vpack.c.b16 %v190, %v189
    %195 = vst [vmem:[#allocation11] sm:$0xff] %v191
    %196 = vst [vmem:[#allocation11 + $0x8] sm:$0xff] %v192
    %v197 = vld [vmem:[#allocation10] sm:$0x1]
    %v198 = vld [vmem:[#allocation7] sm:$0xf]
    %v199 = vld [vmem:[#allocation7 + $0x4] sm:$0xf]
    %v200 = vld [vmem:[#allocation7 + $0x8] sm:$0xf]
    %v201 = vld [vmem:[#allocation7 + $0xc] sm:$0xf]
    %v206 = vunpack.c.l.b16 %v198
    %v207 = vunpack.c.l.b16 %v199
    %v208 = vunpack.c.l.b16 %v200
    %v209 = vunpack.c.l.b16 %v201
    %v210 = vpack.c.b16 %v207, %v206
    %v211 = vpack.c.b16 %v209, %v208
    %214 = vmatprep.subr.bf16.mxu0 0
    %215 = vmatpush1.bf16.msra.mxu0 %v210
    %216 = vmatprep.subr.bf16.mxu0 0
    %217 = vmatpush1.bf16.msra.mxu0 %v211
    %218 = vmatprep.subr.bf16.mxu0 0
    %219 = vmatpush1.bf16.msra.mxu0 0
    %220 = vmatprep.subr.bf16.mxu0 0
    %221 = vmatpush1.bf16.msra.mxu0 0
    %222 = vmatprep.subr.bf16.mxu0 0
    %223 = vmatpush1.bf16.msra.mxu0 0
    %224 = vmatprep.subr.bf16.mxu0 0
    %225 = vmatpush1.bf16.msra.mxu0 0
    %226 = vmatprep.subr.bf16.mxu0 0
    %227 = vmatpush1.bf16.msra.mxu0 0
    %228 = vmatprep.subr.bf16.mxu0 0
    %229 = vmatpush1.bf16.msra.mxu0 0
    %230 = vmatprep.subr.bf16.mxu0 0
    %231 = vmatpush1.bf16.msra.mxu0 0
    %232 = vmatprep.subr.bf16.mxu0 0
    %233 = vmatpush1.bf16.msra.mxu0 0
    %234 = vmatprep.subr.bf16.mxu0 0
    %235 = vmatpush1.bf16.msra.mxu0 0
    %236 = vmatprep.subr.bf16.mxu0 0
    %237 = vmatpush1.bf16.msra.mxu0 0
    %238 = vmatprep.subr.bf16.mxu0 0
    %239 = vmatpush1.bf16.msra.mxu0 0
    %240 = vmatprep.subr.bf16.mxu0 0
    %241 = vmatpush1.bf16.msra.mxu0 0
    %242 = vmatprep.subr.bf16.mxu0 0
    %243 = vmatpush1.bf16.msra.mxu0 0
    %244 = vmatprep.subr.bf16.mxu0 0
    %245 = vmatpush1.bf16.msra.mxu0 0
    %246 = vmatprep.mubr.bf16.mxu0 0
    %247 = vmatmul.mubr.bf16.gmra.mrb[0].mxu0 %v123
    %v248 = vpop.f32.mrb[0].mxu0
    %v249 = vadd.f32 0.0, %v248
    %v250 = vpop.f32.mrb[0].mxu0
    %v251 = vpop.f32.mrb[0].mxu0
    %v252 = vadd.f32 0.0, %v251
    %v253 = vpop.f32.mrb[0].mxu0
    %254 = vdwg.mxu0
    %v256 = vlaneseq
    %v257 = vshrl.u32 %v256, 7
    %v258 = vsub.s32 0, %v257
    %v259 = vrot.slane %v197, %v258
    %v261 = vadd.f32 %v259, %v249
    %v262 = vadd.f32 %v259, %v252
    %vm263 = vcmask 64512
    %264 = vst.msk [vmem:[#allocation12] sm:$0xff] %vm263, %v261
    %265 = vst.msk [vmem:[#allocation12 + $0x8] sm:$0xff] %vm263, %v262
    // Predicated region
    $region42: #{_lambda_.18} parent=1 // pred_check
      _
    $region43: #{_lambda_.18} parent=1 // pred_check_branch
      %267 = sbr.rel (0) target = $region45
    $region44: #{_lambda_.18} parent=1 // pred_region
      %s269 = ssub.s32 256, 256
      %270 = vsyncadd [#allocation4], %s269
      %s271 = sshll.u32 [#allocation11], 4
      %s272 = int_to_ptr.vmem [resolvable:$true] %s271
      %277 = dma.vmem_to_hbm [thread:$0]  %s272, 256, %s5, [#allocation4], 128, 128, 8
    $region45: #{_lambda_.18} parent=1 // pred_fallthru
      _
    // Predicated region
    $region46: #{_lambda_.18} parent=1 // pred_check
      _
    $region47: #{_lambda_.18} parent=1 // pred_check_branch
      %279 = sbr.rel (0) target = $region49
    $region48: #{_lambda_.18} parent=1 // pred_region
      %s281 = ssub.s32 256, 256
      %282 = vsyncadd [#allocation13], %s281
      %s283 = sshll.u32 [#allocation12], 4
      %s284 = int_to_ptr.vmem [resolvable:$true] %s283
      %289 = dma.vmem_to_hbm [thread:$0]  %s284, 256, %s6, [#allocation13], 128, 128, 8
    $region49: #{_lambda_.18} parent=1 // pred_fallthru
      _
    // Predicated region
    $region50: #{_lambda_.18} parent=1 // pred_check
      _
    $region51: #{_lambda_.18} parent=1 // pred_check_branch
      %291 = sbr.rel (0) target = $region53
    $region52: #{_lambda_.18} parent=1 // pred_region
      %292 = dma.done [#allocation4], 256
    $region53: #{_lambda_.18} parent=1 // pred_fallthru
      _
    // Predicated region
    $region54: #{_lambda_.18} parent=1 // pred_check
      _
    $region55: #{_lambda_.18} parent=1 // pred_check_branch
      %294 = sbr.rel (0) target = $region57
    $region56: #{_lambda_.18} parent=1 // pred_region
      %295 = dma.done [#allocation13], 256
    $region57: #{_lambda_.18} parent=1 // pred_fallthru
      _
    %296 = vsyncpa [#allocation3], 1
    %297 = vsyncpa [#allocation6], 1
    %298 = vsyncpa [#allocation9], 1
    %299 = vsyncpa [#allocation4], 1
    %300 = vsyncpa [#allocation13], 1

// kernel: _lambda_.19
$region0: #{_lambda_.19}
  #allocation0 [shape = 'u32[]', space=smem, size = 0x4, offset = 0x4, fixed_abs, tag = 'smem constant byte address 0x4 - core index']
  #allocation1 [shape = 'u32[144,128]{1,0:T(1,128)}', space=vmem, size = 0x12000, scoped, tag = 'internal scratch']
  %s0 = inlined_call_operand.hbm [shape: bf16[2,8,32], index: 0, kind: input, shape index: {}]
  %s1 = inlined_call_operand.hbm [shape: bf16[2,64,32], index: 1, kind: input, shape index: {}]
  %s2 = inlined_call_operand.hbm [shape: f32[2,1,64], index: 2, kind: input, shape index: {}]
  %s3 = inlined_call_operand.hbm [shape: f32[2,8,64], index: 3, kind: output, shape index: {}]
  %s4 = sld [smem:[#allocation0]]
  $region57: #{_lambda_.19} parent=0
    _
  %s6 = ssub.s32 1, %s4
  %s7 = scalar_select 0, %s6, %s4
  $region1: #{_lambda_.19} parent=0
    #allocation2 [shape = 'u8[4096]{0}', space=vmem, size = 0x1000, scoped, tag = 'input window, operand 0']
    #allocation3 [shape = 's32[2]{0}', space=sflag, size = 0x8, scoped, tag = 'scoped memory for _lambda_.19']
    #allocation4 [shape = 's32[2]{0}', space=sflag, size = 0x8, scoped, tag = 'scoped memory for _lambda_.19']
    #allocation5 [shape = 'u8[32768]{0}', space=vmem, size = 0x8000, scoped, tag = 'input window, operand 1']
    #allocation6 [shape = 's32[2]{0}', space=sflag, size = 0x8, scoped, tag = 'scoped memory for _lambda_.19']
    #allocation7 [shape = 'u8[1024]{0}', space=vmem, size = 0x400, scoped, tag = 'input window, operand 2']
    #allocation8 [shape = 'u8[8192]{0}', space=vmem, size = 0x2000, scoped, tag = 'output window, operand 0']
    %8 = vsyncpa [#allocation3], 0
    %s9 = scalar_lea.sflag [#allocation3], 1
    %10 = vsyncpa %s9, 0
    %11 = vsyncpa [#allocation6], 0
    %s12 = scalar_lea.sflag [#allocation6], 1
    %13 = vsyncpa %s12, 0
    %14 = vsyncpa [#allocation4], 0
    %s15 = scalar_lea.sflag [#allocation4], 1
    %16 = vsyncpa %s15, 0
    loop: start=0, step=1, limit=4
    $region2: #{_lambda_.19} parent=1 // loop_pre_header
      _
    $region3: #{_lambda_.19} parent=1 // loop_header
      %s18 = sphi 0, %s22
      %p19 = scmp.ge.s32.totalorder %s18, 4
      %s25 = sphi 0, %s37
      %s26 = sphi 0, %s33
      %s27 = sphi 0, %s25
      %s28 = sphi 0, %s26
      %s29 = sphi 0, %s27
      %s30 = sphi 0, %s28
      %s42 = sphi 0, %s44
      %s45 = sphi 0, %s42
      %s46 = sphi 0, %s45
      %s62 = sphi 0, %s46
      %s68 = sphi 0, %s70
      %s71 = sphi 0, %s68
      %s72 = sphi 0, %s71
      %s88 = sphi 0, %s72
      %s94 = sphi 0, %s96
      %s97 = sphi 0, %s94
      %s98 = sphi 0, %s97
      %s114 = sphi 0, %s98
      %s122 = sphi 0, %s124
      %s125 = sphi 0, %s122
      %s126 = sphi 0, %s125
      %s142 = sphi 0, %s126
    $region4: #{_lambda_.19} parent=1 // loop_header_branch
      %21 = sbr.rel (%p19) target = $region8
    $region5: #{_lambda_.19} parent=1 // loop_body
      %s23 = ssub.s32 %s18, 1
      %s24 = ssub.s32 %s18, 2
      %s31 = sadd.s32 1, %s26
      %p32 = scmp.ge.s32.totalorder %s31, 1
      %s33 = scalar_select %p32, 0, %s31
      %s34 = sadd.s32 1, %s25
      %s35 = scalar_select %p32, %s34, %s25
      %p36 = scmp.ge.s32.totalorder %s35, 2
      %s37 = scalar_select %p36, 0, %s35
      %s38 = ssub.s32 %s25, %s37
      %s39 = ssub.s32 %s26, %s33
      %s40 = sor.u32 %s38, %s39
      %p41 = scmp.eq.s32.totalorder %s40, 0
      %s43 = sadd.s32 %s42, 1
      %s44 = scalar_select %p41, %s42, %s43
      %p47 = pneg %p41
      %p48 = scmp.eq.s32.totalorder %s18, 1
      %p49 = por %p47, %p48
      %p50 = scmp.ne.s32.totalorder %s42, %s45
      %p51 = scmp.eq.s32.totalorder %s18, 0
      %p52 = por %p50, %p51
      %p53 = scmp.ne.s32.totalorder %s42, %s45
      %p54 = scmp.eq.s32.totalorder %s23, 1
      %p55 = por %p53, %p54
      %p56 = scmp.ne.s32.totalorder %s45, %s46
      %p57 = scmp.eq.s32.totalorder %s23, 0
      %p58 = por %p56, %p57
      %p59 = scmp.ne.s32.totalorder %s45, %s46
      %p60 = scmp.eq.s32.totalorder %s24, 1
      %p61 = por %p59, %p60
      %p63 = scmp.ne.s32.totalorder %s46, %s62
      %p64 = scmp.eq.s32.totalorder %s24, 0
      %p65 = por %p63, %p64
      %s66 = ssub.s32 %s25, %s37
      %p67 = scmp.eq.s32.totalorder %s66, 0
      %s69 = sadd.s32 %s68, 1
      %s70 = scalar_select %p67, %s68, %s69
      %p73 = pneg %p67
      %p74 = scmp.eq.s32.totalorder %s18, 1
      %p75 = por %p73, %p74
      %p76 = scmp.ne.s32.totalorder %s68, %s71
      %p77 = scmp.eq.s32.totalorder %s18, 0
      %p78 = por %p76, %p77
      %p79 = scmp.ne.s32.totalorder %s68, %s71
      %p80 = scmp.eq.s32.totalorder %s23, 1
      %p81 = por %p79, %p80
      %p82 = scmp.ne.s32.totalorder %s71, %s72
      %p83 = scmp.eq.s32.totalorder %s23, 0
      %p84 = por %p82, %p83
      %p85 = scmp.ne.s32.totalorder %s71, %s72
      %p86 = scmp.eq.s32.totalorder %s24, 1
      %p87 = por %p85, %p86
      %p89 = scmp.ne.s32.totalorder %s72, %s88
      %p90 = scmp.eq.s32.totalorder %s24, 0
      %p91 = por %p89, %p90
      %s92 = ssub.s32 %s25, %s37
      %p93 = scmp.eq.s32.totalorder %s92, 0
      %s95 = sadd.s32 %s94, 1
      %s96 = scalar_select %p93, %s94, %s95
      %p99 = pneg %p93
      %p100 = scmp.eq.s32.totalorder %s18, 1
      %p101 = por %p99, %p100
      %p102 = scmp.ne.s32.totalorder %s94, %s97
      %p103 = scmp.eq.s32.totalorder %s18, 0
      %p104 = por %p102, %p103
      %p105 = scmp.ne.s32.totalorder %s94, %s97
      %p106 = scmp.eq.s32.totalorder %s23, 1
      %p107 = por %p105, %p106
      %p108 = scmp.ne.s32.totalorder %s97, %s98
      %p109 = scmp.eq.s32.totalorder %s23, 0
      %p110 = por %p108, %p109
      %p111 = scmp.ne.s32.totalorder %s97, %s98
      %p112 = scmp.eq.s32.totalorder %s24, 1
      %p113 = por %p111, %p112
      %p115 = scmp.ne.s32.totalorder %s98, %s114
      %p116 = scmp.eq.s32.totalorder %s24, 0
      %p117 = por %p115, %p116
      %s118 = ssub.s32 %s25, %s37
      %s119 = ssub.s32 %s26, %s33
      %s120 = sor.u32 %s118, %s119
      %p121 = scmp.eq.s32.totalorder %s120, 0
      %s123 = sadd.s32 %s122, 1
      %s124 = scalar_select %p121, %s122, %s123
      %p127 = pneg %p121
      %p128 = scmp.eq.s32.totalorder %s18, 1
      %p129 = por %p127, %p128
      %p130 = scmp.ne.s32.totalorder %s122, %s125
      %p131 = scmp.eq.s32.totalorder %s18, 0
      %p132 = por %p130, %p131
      %p133 = scmp.ne.s32.totalorder %s122, %s125
      %p134 = scmp.eq.s32.totalorder %s23, 1
      %p135 = por %p133, %p134
      %p136 = scmp.ne.s32.totalorder %s125, %s126
      %p137 = scmp.eq.s32.totalorder %s23, 0
      %p138 = por %p136, %p137
      %p139 = scmp.ne.s32.totalorder %s125, %s126
      %p140 = scmp.eq.s32.totalorder %s24, 1
      %p141 = por %p139, %p140
      %p143 = scmp.ne.s32.totalorder %s126, %s142
      %p144 = scmp.eq.s32.totalorder %s24, 0
      %p145 = por %p143, %p144
      %p146 = scmp.le.s32.totalorder 1, %s18
      %p147 = scmp.lt.s32.totalorder %s18, 3
      %p148 = pnand %p146, %p147
      %p149 = pneg %p148
      // Predicated region
      $region9: #{_lambda_.19} parent=5 // pred_check
        _
      $region10: #{_lambda_.19} parent=5 // pred_check_branch
        %151 = sbr.rel (%p148) target = $region12
      $region11: #{_lambda_.19} parent=5 // pred_region
        %s152 = ssub.s32 %s18, 1
      $region12: #{_lambda_.19} parent=5 // pred_fallthru
        _
      %p153 = scmp.lt.s32.totalorder %s18, 2
      // Predicated region
      $region13: #{_lambda_.19} parent=5 // pred_check
        %p154 = pneg %p153
      $region14: #{_lambda_.19} parent=5 // pred_check_branch
        %156 = sbr.rel (%p154) target = $region16
      $region15: #{_lambda_.19} parent=5 // pred_region
        // Predicated region
        $region17: #{_lambda_.19} parent=15 // pred_check
          %p157 = pneg %p52
        $region18: #{_lambda_.19} parent=15 // pred_check_branch
          %159 = sbr.rel (%p157) target = $region20
        $region19: #{_lambda_.19} parent=15 // pred_region
          %s160 = sand.u32 %s42, 1
          %s161 = scalar_lea.sflag [#allocation3], %s160
          %s162 = sand.u32 %s42, 1
          %s163 = smul.addr %s162, 4
          %s164 = scalar_lea.vmem [#allocation2], %s163
          %s166 = ssub.s32 64, 64
          %167 = vsyncadd %s161, %s166
          %s168 = sadd.s32 %s26, %s25
          %s169 = smul.addr %s168, 64
          %s170 = scalar_lea.hbm %s0, %s169
          %s172 = sshll.u32 %s164, 4
          %s173 = int_to_ptr.vmem [resolvable:$true] %s172
          %175 = dma.hbm_to_vmem [thread:$0]  %s170, 64, %s173, %s161
        $region20: #{_lambda_.19} parent=15 // pred_fallthru
          _
        // Predicated region
        $region21: #{_lambda_.19} parent=15 // pred_check
          %p176 = pneg %p78
        $region22: #{_lambda_.19} parent=15 // pred_check_branch
          %178 = sbr.rel (%p176) target = $region24
        $region23: #{_lambda_.19} parent=15 // pred_region
          %s179 = sand.u32 %s18, 1
          %s180 = scalar_lea.sflag [#allocation6], %s179
          %s181 = sand.u32 %s68, 1
          %s182 = smul.addr %s181, 32
          %s183 = scalar_lea.vmem [#allocation5], %s182
          %s185 = ssub.s32 512, 512
          %186 = vsyncadd %s180, %s185
          %s187 = smul.addr %s25, 8
          %s188 = smul.addr %s187, 64
          %s189 = scalar_lea.hbm %s1, %s188
          %s190 = sshll.u32 %s183, 4
          %s191 = int_to_ptr.vmem [resolvable:$true] %s190
          %196 = dma.hbm_to_vmem [thread:$0]  %s189, 512, %s191, %s180, 64, 64, 4
        $region24: #{_lambda_.19} parent=15 // pred_fallthru
          _
        // Predicated region
        $region25: #{_lambda_.19} parent=15 // pred_check
          %p197 = pneg %p104
        $region26: #{_lambda_.19} parent=15 // pred_check_branch
          %199 = sbr.rel (%p197) target = $region28
        $region27: #{_lambda_.19} parent=15 // pred_region
          %s200 = sand.u32 %s18, 1
          %s201 = scalar_lea.sflag [#allocation6], %s200
          %s202 = sand.u32 %s94, 1
          %s203 = scalar_lea.vmem [#allocation7], %s202
          %s205 = ssub.s32 16, 16
          %206 = vsyncadd %s201, %s205
          %s207 = smul.addr %s25, 16
          %s208 = scalar_lea.hbm %s2, %s207
          %s210 = sshll.u32 %s203, 4
          %s211 = int_to_ptr.vmem [resolvable:$true] %s210
          %213 = dma.hbm_to_vmem [thread:$0]  %s208, 16, %s211, %s201
        $region28: #{_lambda_.19} parent=15 // pred_fallthru
          _
      $region16: #{_lambda_.19} parent=5 // pred_fallthru
        _
      %p214 = scmp.le.s32.totalorder 1, %s18
      %p215 = scmp.lt.s32.totalorder %s18, 3
      %p216 = pnand %p214, %p215
      %p217 = pneg %p216
      // Predicated region
      $region29: #{_lambda_.19} parent=5 // pred_check
        _
      $region30: #{_lambda_.19} parent=5 // pred_check_branch
        %219 = sbr.rel (%p216) target = $region32
      $region31: #{_lambda_.19} parent=5 // pred_region
        %s220 = ssub.s32 %s18, 1
        %s221 = sand.u32 %s45, 1
        %s222 = scalar_lea.sflag [#allocation3], %s221
        %s223 = sand.u32 %s45, 1
        %s224 = smul.addr %s223, 4
        %s225 = scalar_lea.vmem [#allocation2], %s224
        // Predicated region
        $region33: #{_lambda_.19} parent=31 // pred_check
          %p226 = pneg %p58
        $region34: #{_lambda_.19} parent=31 // pred_check_branch
          %228 = sbr.rel (%p226) target = $region36
        $region35: #{_lambda_.19} parent=31 // pred_region
          %229 = dma.done %s222, 64
        $region36: #{_lambda_.19} parent=31 // pred_fallthru
          _
        %s230 = sand.u32 %s23, 1
        %s231 = scalar_lea.sflag [#allocation6], %s230
        %s232 = sand.u32 %s71, 1
        %s233 = smul.addr %s232, 32
        %s234 = scalar_lea.vmem [#allocation5], %s233
        // Predicated region
        $region37: #{_lambda_.19} parent=31 // pred_check
          %p235 = pneg %p84
        $region38: #{_lambda_.19} parent=31 // pred_check_branch
          %237 = sbr.rel (%p235) target = $region40
        $region39: #{_lambda_.19} parent=31 // pred_region
          %238 = dma.done %s231, 512
        $region40: #{_lambda_.19} parent=31 // pred_fallthru
          _
        %s239 = sand.u32 %s23, 1
        %s240 = scalar_lea.sflag [#allocation6], %s239
        %s241 = sand.u32 %s97, 1
        %s242 = scalar_lea.vmem [#allocation7], %s241
        // Predicated region
        $region41: #{_lambda_.19} parent=31 // pred_check
          %p243 = pneg %p110
        $region42: #{_lambda_.19} parent=31 // pred_check_branch
          %245 = sbr.rel (%p243) target = $region44
        $region43: #{_lambda_.19} parent=31 // pred_region
          %246 = dma.done %s240, 16
        $region44: #{_lambda_.19} parent=31 // pred_fallthru
          _
        %s247 = sand.u32 %s45, 1
        %s248 = scalar_lea.sflag [#allocation3], %s247
        %s249 = sand.u32 %s45, 1
        %s250 = smul.addr %s249, 4
        %s251 = scalar_lea.vmem [#allocation2], %s250
        %p252 = pneg %p58
        %p253 = pneg %p55
        %s254 = sand.u32 %s23, 1
        %s255 = scalar_lea.sflag [#allocation6], %s254
        %s256 = sand.u32 %s71, 1
        %s257 = smul.addr %s256, 32
        %s258 = scalar_lea.vmem [#allocation5], %s257
        %p259 = pneg %p84
        %p260 = pneg %p81
        %s261 = sand.u32 %s23, 1
        %s262 = scalar_lea.sflag [#allocation6], %s261
        %s263 = sand.u32 %s97, 1
        %s264 = scalar_lea.vmem [#allocation7], %s263
        %p265 = pneg %p110
        %p266 = pneg %p107
        %p267 = pneg %p138
        %p268 = pneg %p135
        %s269 = sand.u32 %s125, 1
        %s270 = scalar_lea.sflag [#allocation4], %s269
        %s271 = sand.u32 %s125, 1
        %s272 = smul.addr %s271, 8
        %s273 = scalar_lea.vmem [#allocation8], %s272
        %v275 = vld [vmem:[%s225] sm:$0xf]
        %v276 = vld [vmem:[%s234] sm:$0xf]
        %v277 = vld [vmem:[%s234 + $0x4] sm:$0xf]
        %v278 = vld [vmem:[%s234 + $0x8] sm:$0xf]
        %v279 = vld [vmem:[%s234 + $0xc] sm:$0xf]
        %v280 = vld [vmem:[%s234 + $0x10] sm:$0xf]
        %v281 = vld [vmem:[%s234 + $0x14] sm:$0xf]
        %v282 = vld [vmem:[%s234 + $0x18] sm:$0xf]
        %v283 = vld [vmem:[%s234 + $0x1c] sm:$0xf]
        %v284 = vld [vmem:[%s242] sm:$0x1]
        %v286 = vlaneseq
        %v287 = vshrl.u32 %v286, 7
        %v288 = vsub.s32 0, %v287
        %v289 = vrot.slane %v284, %v288
        %v299 = vunpack.c.l.b16 %v276
        %v300 = vunpack.c.l.b16 %v277
        %v301 = vunpack.c.l.b16 %v278
        %v302 = vunpack.c.l.b16 %v279
        %v303 = vunpack.c.l.b16 %v280
        %v304 = vunpack.c.l.b16 %v281
        %v305 = vunpack.c.l.b16 %v282
        %v306 = vunpack.c.l.b16 %v283
        %v307 = vpack.c.b16 %v300, %v299
        %v308 = vpack.c.b16 %v302, %v301
        %v309 = vpack.c.b16 %v304, %v303
        %v310 = vpack.c.b16 %v306, %v305
        %vm311 = vcmask 261120
        %v313 = vsel %vm311, %v275, 0
        %v316 = vsel %vm311, %v307, 0
        %v319 = vsel %vm311, %v308, 0
        %v322 = vsel %vm311, %v309, 0
        %v325 = vsel %vm311, %v310, 0
        %327 = vmatprep.subr.bf16.mxu0 0
        %328 = vmatpush1.bf16.xpose.msra.mxu0 %v316
        %329 = vmatprep.subr.bf16.mxu0 0
        %330 = vmatpush1.bf16.xpose.msra.mxu0 %v319
        %331 = vmatprep.subr.bf16.mxu0 0
        %332 = vmatpush1.bf16.xpose.msra.mxu0 %v322
        %333 = vmatprep.subr.bf16.mxu0 0
        %334 = vmatpush1.bf16.xpose.msra.mxu0 %v325
        %335 = vmatprep.subr.bf16.mxu0 0
        %336 = vmatpush1.bf16.xpose.msra.mxu0 0
        %337 = vmatprep.subr.bf16.mxu0 0
        %338 = vmatpush1.bf16.xpose.msra.mxu0 0
        %339 = vmatprep.subr.bf16.mxu0 0
        %340 = vmatpush1.bf16.xpose.msra.mxu0 0
        %341 = vmatprep.subr.bf16.mxu0 0
        %342 = vmatpush1.bf16.xpose.msra.mxu0 0
        %343 = vmatprep.subr.bf16.mxu0 0
        %344 = vmatpush1.bf16.xpose.msra.mxu0 0
        %345 = vmatprep.subr.bf16.mxu0 0
        %346 = vmatpush1.bf16.xpose.msra.mxu0 0
        %347 = vmatprep.subr.bf16.mxu0 0
        %348 = vmatpush1.bf16.xpose.msra.mxu0 0
        %349 = vmatprep.subr.bf16.mxu0 0
        %350 = vmatpush1.bf16.xpose.msra.mxu0 0
        %351 = vmatprep.subr.bf16.mxu0 0
        %352 = vmatpush1.bf16.xpose.msra.mxu0 0
        %353 = vmatprep.subr.bf16.mxu0 0
        %354 = vmatpush1.bf16.xpose.msra.mxu0 0
        %355 = vmatprep.subr.bf16.mxu0 0
        %356 = vmatpush1.bf16.xpose.msra.mxu0 0
        %357 = vmatprep.subr.bf16.mxu0 0
        %358 = vmatpush1.bf16.xpose.msra.mxu0 0
        %359 = vmatprep.mubr.bf16.mxu0 0
        %360 = vmatmul.mubr.bf16.gmra.mrb[0].mxu0 %v313
        %v361 = vpop.f32.mrb[0].mxu0
        %v362 = vadd.f32 %v289, %v361
        %v363 = vpop.f32.mrb[0].mxu0
        %v364 = vpop.f32.mrb[0].mxu0
        %v365 = vpop.f32.mrb[0].mxu0
        %366 = vdwg.mxu0
        %vm367 = vcmask 523264
        %368 = vst.msk [vmem:[%s273] sm:$0xff] %vm367, %v362
        %s369 = sand.u32 %s125, 1
        %s370 = scalar_lea.sflag [#allocation4], %s369
        %s371 = sand.u32 %s125, 1
        %s372 = smul.addr %s371, 8
        %s373 = scalar_lea.vmem [#allocation8], %s372
        // Predicated region
        $region45: #{_lambda_.19} parent=31 // pred_check
          %p374 = pneg %p135
        $region46: #{_lambda_.19} parent=31 // pred_check_branch
          %376 = sbr.rel (%p374) target = $region48
        $region47: #{_lambda_.19} parent=31 // pred_region
          %s378 = ssub.s32 128, 128
          %379 = vsyncadd %s370, %s378
          %s380 = sadd.s32 %s28, %s27
          %s381 = smul.addr %s380, 128
          %s382 = scalar_lea.hbm %s3, %s381
          %s384 = sshll.u32 %s373, 4
          %s385 = int_to_ptr.vmem [resolvable:$true] %s384
          %387 = dma.vmem_to_hbm [thread:$0]  %s385, 128, %s382, %s370
        $region48: #{_lambda_.19} parent=31 // pred_fallthru
          _
      $region32: #{_lambda_.19} parent=5 // pred_fallthru
        _
      %p388 = scmp.le.s32.totalorder 2, %s18
      // Predicated region
      $region49: #{_lambda_.19} parent=5 // pred_check
        %p389 = pneg %p388
      $region50: #{_lambda_.19} parent=5 // pred_check_branch
        %391 = sbr.rel (%p389) target = $region52
      $region51: #{_lambda_.19} parent=5 // pred_region
        %s392 = ssub.s32 %s18, 2
        // Predicated region
        $region53: #{_lambda_.19} parent=51 // pred_check
          %p393 = pneg %p141
        $region54: #{_lambda_.19} parent=51 // pred_check_branch
          %395 = sbr.rel (%p393) target = $region56
        $region55: #{_lambda_.19} parent=51 // pred_region
          %s396 = sand.u32 %s126, 1
          %s397 = scalar_lea.sflag [#allocation4], %s396
          %s398 = sand.u32 %s126, 1
          %s399 = smul.addr %s398, 8
          %s400 = scalar_lea.vmem [#allocation8], %s399
          %401 = dma.done %s397, 128
        $region56: #{_lambda_.19} parent=51 // pred_fallthru
          _
      $region52: #{_lambda_.19} parent=5 // pred_fallthru
        _
    $region6: #{_lambda_.19} parent=1 // loop_footer
      %s22 = sadd.s32 1, %s18
    $region7: #{_lambda_.19} parent=1 // loop_footer_branch
      %17 = sbr.rel target = $region3
    $region8: #{_lambda_.19} parent=1 // loop_exit
      _
    %402 = vsyncpa [#allocation3], 1
    %s403 = scalar_lea.sflag [#allocation3], 1
    %404 = vsyncpa %s403, 1
    %405 = vsyncpa [#allocation6], 1
    %s406 = scalar_lea.sflag [#allocation6], 1
    %407 = vsyncpa %s406, 1
    %408 = vsyncpa [#allocation4], 1
    %s409 = scalar_lea.sflag [#allocation4], 1
    %410 = vsyncpa %s409, 1

</llo_original>
